<compile_context>
chip_gen: v7x
topology: tpu7x:2x2x1
jax: 0.10.0
libtpu: 0.0.40
codegen_flags: <defaults>
</compile_context>

<pallas_src>
import numpy as np
import jax
import jax.numpy as jnp
from jax import lax
from jax.experimental import pallas as pl
from jax.experimental.pallas import tpu as pltpu

INPUT_SIZE = 1
HIDDEN = 32
NUM_LAYERS = 3
OUTPUT_SIZE = 3
FC_PAD = 128          # fc head padded to one full 128-lane block


# --------------------------------------------------------------------------
# Fused Pallas kernel: 3 BiLSTM layers + FC head, single invocation
# --------------------------------------------------------------------------
def _make_fused_kernel(T, B, H, num_layers, fc_pad):
    """Gate column layout (width 8H): [i_f|i_b | f_f|f_b | o_f|o_b | g_f|g_b],
    each sub-block H wide.  Hidden/cell state is (B, 2H) = [fwd | bwd]."""
    H2, H6, H8 = 2 * H, 6 * H, 8 * H
    NL = num_layers

    def kernel(x_ref, w_ref, b_ref, out_ref, *y_bufs):
        # Static lane masks: fwd columns are the first H lanes of each 2H block.
        gate_lane = lax.broadcasted_iota(jnp.int32, (B, H8), 1)
        fwd_gate_mask = (gate_lane % H2) < H            # (B, 8H)
        half_lane = lax.broadcasted_iota(jnp.int32, (B, H2), 1)
        fwd_half_mask = half_lane < H                   # (B, 2H)

        last = None
        for l in range(NL):
            # Static, 128-aligned slices of the packed slabs (hoisted loads).
            w_ih = w_ref[:, l * H8:(l + 1) * H8]               # (2H, 8H)
            w_hh = w_ref[:, (NL + l) * H8:(NL + l + 1) * H8]   # (2H, 8H)
            b = b_ref[:, l * H8:(l + 1) * H8]                  # (1, 8H)

            y = x_ref[...] if l == 0 else y_bufs[l - 1][...]   # (T*B, 2H)

            # Input projection for all timesteps, hoisted off the recurrence.
            z = jnp.dot(y, w_ih, preferred_element_type=jnp.float32) + b  # (T*B, 8H)

            # fwd/bwd input routing hoisted off the serial chain:
            # fwd gates at step t consume x[t], bwd gates consume x[T-1-t].
            gx = [jnp.where(fwd_gate_mask,
                            z[t * B:(t + 1) * B, :],
                            z[(T - 1 - t) * B:(T - t) * B, :])
                  for t in range(T)]

            h = jnp.zeros((B, H2), jnp.float32)        # [h_fwd | h_bwd]
            c = jnp.zeros((B, H2), jnp.float32)
            hs = []
            for t in range(T):                         # static unroll, serial chain
                gates = gx[t] + jnp.dot(h, w_hh,
                                        preferred_element_type=jnp.float32)
                sg = jax.nn.sigmoid(gates[:, :H6])     # i | f | o  (sigmoid only)
                gg = jnp.tanh(gates[:, H6:])           # g          (tanh only)
                i_g = sg[:, 0 * H2:1 * H2]
                f_g = sg[:, 1 * H2:2 * H2]
                o_g = sg[:, 2 * H2:3 * H2]
                c = f_g * c + i_g * gg
                h = o_g * jnp.tanh(c)
                hs.append(h)

            if l + 1 < NL:
                # Post-loop assembly of the layer output (off the per-step chain):
                # time u takes fwd half from hs[u], bwd half from hs[T-1-u].
                for u in range(T):
                    y_bufs[l][pl.ds(u * B, B), :] = jnp.where(
                        fwd_half_mask, hs[u], hs[T - 1 - u])
            else:
                # Only time T-1 of the last layer feeds the FC head.
                last = jnp.where(fwd_half_mask, hs[T - 1], hs[0])   # (B, 2H)

        # TODO(synk): nn.Dropout is identity in inference mode; no-op here.
        fc_w = w_ref[:, 2 * NL * H8:2 * NL * H8 + fc_pad]    # (2H, fc_pad)
        fc_b = b_ref[:, NL * H8:NL * H8 + fc_pad]            # (1, fc_pad)
        out_ref[...] = (jnp.dot(last, fc_w, preferred_element_type=jnp.float32)
                        + fc_b)

    return kernel


# --------------------------------------------------------------------------
# Weight packing (done once, outside the kernel)
# --------------------------------------------------------------------------
def prepare_fused_params(params, hidden=HIDDEN, num_layers=NUM_LAYERS,
                         input_size=INPUT_SIZE, output_size=OUTPUT_SIZE,
                         fc_pad=FC_PAD):
    """Two slabs:
         w_slab: (2H, NL*8H [w_ih] + NL*8H [w_hh, block-diag] + fc_pad [fc_w])
         b_slab: (1,  NL*8H [b_ih+b_hh]                        + fc_pad [fc_b])
       Gate order per 8H block: i, f, o, g (sigmoid gates contiguous)."""
    H = hidden
    H2 = 2 * H
    gate_src = (0, 1, 3, 2)          # PyTorch order i,f,g,o  ->  i,f,o,g

    w_ih_blocks, w_hh_blocks, b_blocks = [], [], []
    zeros_hh = jnp.zeros((H, H), jnp.float32)
    for layer in range(num_layers):
        p = params["lstm"][layer]
        d_in = input_size if layer == 0 else H2
        wf, wb = p["w_ih_f"], p["w_ih_b"]            # (d_in, 4H)
        hf, hb = p["w_hh_f"], p["w_hh_b"]            # (H, 4H)
        bf, bb = p["b_f"], p["b_b"]                  # (1, 4H)

        ih_cols, hh_cols, b_cols = [], [], []
        for s in gate_src:
            ih_cols += [wf[:, s * H:(s + 1) * H], wb[:, s * H:(s + 1) * H]]
            top = jnp.concatenate([hf[:, s * H:(s + 1) * H], zeros_hh], axis=1)
            bot = jnp.concatenate([zeros_hh, hb[:, s * H:(s + 1) * H]], axis=1)
            hh_cols.append(jnp.concatenate([top, bot], axis=0))     # (2H, 2H)
            b_cols += [bf[:, s * H:(s + 1) * H], bb[:, s * H:(s + 1) * H]]

        w_ih = jnp.concatenate(ih_cols, axis=1)                     # (d_in, 8H)
        if d_in < H2:                                               # layer 0 row pad
            w_ih = jnp.pad(w_ih, ((0, H2 - d_in), (0, 0)))
        w_ih_blocks.append(w_ih)
        w_hh_blocks.append(jnp.concatenate(hh_cols, axis=1))        # (2H, 8H)
        b_blocks.append(jnp.concatenate(b_cols, axis=1))            # (1, 8H)

    fc_w = jnp.pad(params["fc_w"], ((0, 0), (0, fc_pad - output_size)))
    fc_b = jnp.pad(params["fc_b"], ((0, 0), (0, fc_pad - output_size)))

    return {"w_slab": jnp.concatenate(w_ih_blocks + w_hh_blocks + [fc_w], axis=1),
            "b_slab": jnp.concatenate(b_blocks + [fc_b], axis=1)}


# --------------------------------------------------------------------------
# Wrapper
# --------------------------------------------------------------------------
def bilstm_forward(x_btd, fused, hidden=HIDDEN, num_layers=NUM_LAYERS,
                   output_size=OUTPUT_SIZE, fc_pad=FC_PAD):
    """x_btd: (B, T, input_size), batch-first like nn.LSTM(batch_first=True)."""
    B, T, D = x_btd.shape
    H = hidden
    H2 = 2 * H
    x = jnp.transpose(x_btd, (1, 0, 2)).astype(jnp.float32)        # (T, B, D)
    x = jnp.pad(x, ((0, 0), (0, 0), (0, H2 - D)))                  # zero-pad lanes
    x2d = x.reshape(T * B, H2)                                     # time-major rows

    vmem = pl.BlockSpec(memory_space=pltpu.MemorySpace.VMEM)
    out = pl.pallas_call(
        _make_fused_kernel(T, B, H, num_layers, fc_pad),
        out_shape=jax.ShapeDtypeStruct((B, fc_pad), jnp.float32),
        in_specs=[vmem, vmem, vmem],
        out_specs=vmem,
        scratch_shapes=[pltpu.VMEM((T * B, H2), jnp.float32)
                        for _ in range(num_layers - 1)],
    )(x2d, fused["w_slab"], fused["b_slab"])
    return out[:, :output_size]


# --------------------------------------------------------------------------
# Deterministic parameter init (PyTorch-style uniform(-1/sqrt(H), 1/sqrt(H)))
# --------------------------------------------------------------------------
def init_params(key, input_size=INPUT_SIZE, hidden=HIDDEN,
                num_layers=NUM_LAYERS, output_size=OUTPUT_SIZE):
    k = 1.0 / np.sqrt(hidden)
    params = {"lstm": []}
    for layer in range(num_layers):
        d_in = input_size if layer == 0 else 2 * hidden
        layer_p = {}
        for d in ("f", "b"):
            key, k1, k2, k3, k4 = jax.random.split(key, 5)
            layer_p[f"w_ih_{d}"] = jax.random.uniform(
                k1, (d_in, 4 * hidden), jnp.float32, -k, k)
            layer_p[f"w_hh_{d}"] = jax.random.uniform(
                k2, (hidden, 4 * hidden), jnp.float32, -k, k)
            b_ih = jax.random.uniform(k3, (4 * hidden,), jnp.float32, -k, k)
            b_hh = jax.random.uniform(k4, (4 * hidden,), jnp.float32, -k, k)
            layer_p[f"b_{d}"] = (b_ih + b_hh).reshape(1, 4 * hidden)
        params["lstm"].append(layer_p)
    kf = 1.0 / np.sqrt(2 * hidden)
    key, k1, k2 = jax.random.split(key, 3)
    params["fc_w"] = jax.random.uniform(
        k1, (2 * hidden, output_size), jnp.float32, -kf, kf)
    params["fc_b"] = jax.random.uniform(
        k2, (1, output_size), jnp.float32, -kf, kf)
    return params


# --------------------------------------------------------------------------
# Pure-JAX reference (for correctness check)
# --------------------------------------------------------------------------
def _ref_lstm_dir(x_tbd, w_ih, w_hh, b, hidden):
    B = x_tbd.shape[1]

    def step(carry, x_t):
        h, c = carry
        gates = x_t @ w_ih + h @ w_hh + b
        i = jax.nn.sigmoid(gates[:, :hidden])
        f = jax.nn.sigmoid(gates[:, hidden:2 * hidden])
        g = jnp.tanh(gates[:, 2 * hidden:3 * hidden])
        o = jax.nn.sigmoid(gates[:, 3 * hidden:])
        c = f * c + i * g
        h = o * jnp.tanh(c)
        return (h, c), h

    init = (jnp.zeros((B, hidden), jnp.float32),
            jnp.zeros((B, hidden), jnp.float32))
    _, hs = lax.scan(step, init, x_tbd)
    return hs


def ref_forward(x_btd, params, hidden=HIDDEN, num_layers=NUM_LAYERS):
    x = jnp.transpose(x_btd, (1, 0, 2)).astype(jnp.float32)
    for layer in range(num_layers):
        p = params["lstm"][layer]
        out_f = _ref_lstm_dir(x, p["w_ih_f"], p["w_hh_f"], p["b_f"], hidden)
        out_b = _ref_lstm_dir(x[::-1], p["w_ih_b"], p["w_hh_b"], p["b_b"],
                              hidden)[::-1]
        x = jnp.concatenate([out_f, out_b], axis=-1)
    return x[-1] @ params["fc_w"] + params["fc_b"]


# --------------------------------------------------------------------------
if __name__ == "__main__":
    key = jax.random.PRNGKey(0)
    key, pkey, xkey = jax.random.split(key, 3)

    params = init_params(pkey)
    fused = prepare_fused_params(params)

    B, T = 2, 8
    x = jax.random.normal(xkey, (B, T, INPUT_SIZE), dtype=jnp.float32)

    out = jax.jit(bilstm_forward)(x, fused)
    out = jax.block_until_ready(out)

    ref = jax.block_until_ready(ref_forward(x, params))

    assert out.shape == (B, OUTPUT_SIZE), out.shape
    np.testing.assert_allclose(np.asarray(out), np.asarray(ref),
                               rtol=1e-4, atol=1e-4)
    print("KERNEL_OK")
</pallas_src>

<mosaic_0001>
module attributes {stable_mosaic.version = 11 : i64} {
  func.func @kernel(%arg0: memref<16x64xf32, #tpu.memory_space<vmem>>, %arg1: memref<64x1664xf32, #tpu.memory_space<vmem>>, %arg2: memref<1x896xf32, #tpu.memory_space<vmem>>, %arg3: memref<2x128xf32, #tpu.memory_space<vmem>>, %arg4: memref<16x64xf32, #tpu.memory_space<vmem>>, %arg5: memref<16x64xf32, #tpu.memory_space<vmem>>) attributes {dimension_semantics = [], scalar_prefetch = 0 : i64, scratch_operands = 2 : i64, tpu.core_type = #tpu.core_type<tc>} {
    %0 = tpu.iota {dimensions = array<i32: 1>} : vector<2x256xi32>
    %c64_i32 = arith.constant 64 : i32
    %c0_i32 = arith.constant 0 : i32
    %1 = arith.cmpi eq, %c64_i32, %c0_i32 : i32
    %c1_i32 = arith.constant 1 : i32
    %2 = arith.select %1, %c1_i32, %c64_i32 : i32
    %3 = vector.broadcast %2 : i32 to vector<2x256xi32>
    %4 = arith.remsi %0, %3 : vector<2x256xi32>
    %c0_i32_0 = arith.constant 0 : i32
    %5 = vector.broadcast %c0_i32_0 : i32 to vector<2x256xi32>
    %6 = arith.cmpi ne, %4, %5 : vector<2x256xi32>
    %c0_i32_1 = arith.constant 0 : i32
    %7 = vector.broadcast %c0_i32_1 : i32 to vector<2x256xi32>
    %8 = arith.cmpi slt, %4, %7 : vector<2x256xi32>
    %c0_i32_2 = arith.constant 0 : i32
    %9 = arith.cmpi slt, %2, %c0_i32_2 : i32
    %10 = vector.broadcast %9 : i1 to vector<2x256xi1>
    %11 = vector.broadcast %10 : vector<2x256xi1> to vector<2x256xi1>
    %12 = arith.xori %8, %11 : vector<2x256xi1>
    %13 = arith.andi %12, %6 : vector<2x256xi1>
    %14 = vector.broadcast %2 : i32 to vector<2x256xi32>
    %15 = arith.addi %4, %14 : vector<2x256xi32>
    %16 = arith.select %13, %15, %4 : vector<2x256xi1>, vector<2x256xi32>
    %c32_i32 = arith.constant 32 : i32
    %17 = vector.broadcast %c32_i32 : i32 to vector<2x256xi32>
    %18 = arith.cmpi slt, %16, %17 : vector<2x256xi32>
    %19 = tpu.iota {dimensions = array<i32: 1>} : vector<2x64xi32>
    %c32_i32_3 = arith.constant 32 : i32
    %20 = vector.broadcast %c32_i32_3 : i32 to vector<2x64xi32>
    %21 = arith.cmpi slt, %19, %20 : vector<2x64xi32>
    %c0 = arith.constant 0 : index
    %c0_4 = arith.constant 0 : index
    %22 = vector.load %arg1[%c0, %c0_4] : memref<64x1664xf32, #tpu.memory_space<vmem>>, vector<64x256xf32>
    %c0_5 = arith.constant 0 : index
    %c768 = arith.constant 768 : index
    %23 = vector.load %arg1[%c0_5, %c768] : memref<64x1664xf32, #tpu.memory_space<vmem>>, vector<64x256xf32>
    %c0_6 = arith.constant 0 : index
    %c0_7 = arith.constant 0 : index
    %24 = vector.load %arg2[%c0_6, %c0_7] : memref<1x896xf32, #tpu.memory_space<vmem>>, vector<1x256xf32>
    %c0_8 = arith.constant 0 : index
    %c0_9 = arith.constant 0 : index
    %25 = vector.load %arg0[%c0_8, %c0_9] : memref<16x64xf32, #tpu.memory_space<vmem>>, vector<16x64xf32>
    %cst = arith.constant dense<0.000000e+00> : vector<16x256xf32>
    %26 = tpu.matmul %25, %22, %cst {dimension_numbers = #tpu.dot_dimension_numbers<[1], [0], [0], [1], [0, 0, 1, 1], [], []>} : vector<16x64xf32>, vector<64x256xf32>, vector<16x256xf32> -> vector<16x256xf32>
    %27 = vector.broadcast %24 : vector<1x256xf32> to vector<16x256xf32>
    %28 = arith.addf %26, %27 : vector<16x256xf32>
    %29 = vector.extract_strided_slice %28 {offsets = [0, 0], sizes = [2, 256], strides = [1, 1]} : vector<16x256xf32> to vector<2x256xf32>
    %30 = vector.extract_strided_slice %28 {offsets = [14, 0], sizes = [2, 256], strides = [1, 1]} : vector<16x256xf32> to vector<2x256xf32>
    %31 = arith.select %18, %29, %30 : vector<2x256xi1>, vector<2x256xf32>
    %32 = vector.extract_strided_slice %28 {offsets = [2, 0], sizes = [2, 256], strides = [1, 1]} : vector<16x256xf32> to vector<2x256xf32>
    %33 = vector.extract_strided_slice %28 {offsets = [12, 0], sizes = [2, 256], strides = [1, 1]} : vector<16x256xf32> to vector<2x256xf32>
    %34 = arith.select %18, %32, %33 : vector<2x256xi1>, vector<2x256xf32>
    %35 = vector.extract_strided_slice %28 {offsets = [4, 0], sizes = [2, 256], strides = [1, 1]} : vector<16x256xf32> to vector<2x256xf32>
    %36 = vector.extract_strided_slice %28 {offsets = [10, 0], sizes = [2, 256], strides = [1, 1]} : vector<16x256xf32> to vector<2x256xf32>
    %37 = arith.select %18, %35, %36 : vector<2x256xi1>, vector<2x256xf32>
    %38 = vector.extract_strided_slice %28 {offsets = [6, 0], sizes = [2, 256], strides = [1, 1]} : vector<16x256xf32> to vector<2x256xf32>
    %39 = vector.extract_strided_slice %28 {offsets = [8, 0], sizes = [2, 256], strides = [1, 1]} : vector<16x256xf32> to vector<2x256xf32>
    %40 = arith.select %18, %38, %39 : vector<2x256xi1>, vector<2x256xf32>
    %41 = vector.extract_strided_slice %28 {offsets = [8, 0], sizes = [2, 256], strides = [1, 1]} : vector<16x256xf32> to vector<2x256xf32>
    %42 = vector.extract_strided_slice %28 {offsets = [6, 0], sizes = [2, 256], strides = [1, 1]} : vector<16x256xf32> to vector<2x256xf32>
    %43 = arith.select %18, %41, %42 : vector<2x256xi1>, vector<2x256xf32>
    %44 = vector.extract_strided_slice %28 {offsets = [10, 0], sizes = [2, 256], strides = [1, 1]} : vector<16x256xf32> to vector<2x256xf32>
    %45 = vector.extract_strided_slice %28 {offsets = [4, 0], sizes = [2, 256], strides = [1, 1]} : vector<16x256xf32> to vector<2x256xf32>
    %46 = arith.select %18, %44, %45 : vector<2x256xi1>, vector<2x256xf32>
    %47 = vector.extract_strided_slice %28 {offsets = [12, 0], sizes = [2, 256], strides = [1, 1]} : vector<16x256xf32> to vector<2x256xf32>
    %48 = vector.extract_strided_slice %28 {offsets = [2, 0], sizes = [2, 256], strides = [1, 1]} : vector<16x256xf32> to vector<2x256xf32>
    %49 = arith.select %18, %47, %48 : vector<2x256xi1>, vector<2x256xf32>
    %50 = vector.extract_strided_slice %28 {offsets = [14, 0], sizes = [2, 256], strides = [1, 1]} : vector<16x256xf32> to vector<2x256xf32>
    %51 = vector.extract_strided_slice %28 {offsets = [0, 0], sizes = [2, 256], strides = [1, 1]} : vector<16x256xf32> to vector<2x256xf32>
    %52 = arith.select %18, %50, %51 : vector<2x256xi1>, vector<2x256xf32>
    %cst_10 = arith.constant 0.000000e+00 : f32
    %53 = vector.broadcast %cst_10 : f32 to vector<2x64xf32>
    %cst_11 = arith.constant 0.000000e+00 : f32
    %54 = vector.broadcast %cst_11 : f32 to vector<2x64xf32>
    %cst_12 = arith.constant dense<0.000000e+00> : vector<2x256xf32>
    %55 = tpu.matmul %53, %23, %cst_12 {dimension_numbers = #tpu.dot_dimension_numbers<[1], [0], [0], [1], [0, 0, 1, 1], [], []>} : vector<2x64xf32>, vector<64x256xf32>, vector<2x256xf32> -> vector<2x256xf32>
    %56 = arith.addf %31, %55 : vector<2x256xf32>
    %57 = vector.extract_strided_slice %56 {offsets = [0, 0], sizes = [2, 192], strides = [1, 1]} : vector<2x256xf32> to vector<2x192xf32>
    %58 = arith.negf %57 : vector<2x192xf32>
    %59 = math.exp %58 : vector<2x192xf32>
    %cst_13 = arith.constant 1.000000e+00 : f32
    %60 = vector.broadcast %cst_13 : f32 to vector<2x192xf32>
    %61 = arith.addf %60, %59 : vector<2x192xf32>
    %62 = arith.divf %60, %61 : vector<2x192xf32>
    %63 = vector.extract_strided_slice %56 {offsets = [0, 192], sizes = [2, 64], strides = [1, 1]} : vector<2x256xf32> to vector<2x64xf32>
    %64 = math.tanh %63 : vector<2x64xf32>
    %65 = vector.extract_strided_slice %62 {offsets = [0, 0], sizes = [2, 64], strides = [1, 1]} : vector<2x192xf32> to vector<2x64xf32>
    %66 = vector.extract_strided_slice %62 {offsets = [0, 64], sizes = [2, 64], strides = [1, 1]} : vector<2x192xf32> to vector<2x64xf32>
    %67 = vector.extract_strided_slice %62 {offsets = [0, 128], sizes = [2, 64], strides = [1, 1]} : vector<2x192xf32> to vector<2x64xf32>
    %68 = arith.mulf %66, %54 : vector<2x64xf32>
    %69 = arith.mulf %65, %64 : vector<2x64xf32>
    %70 = arith.addf %68, %69 : vector<2x64xf32>
    %71 = math.tanh %70 : vector<2x64xf32>
    %72 = arith.mulf %67, %71 : vector<2x64xf32>
    %cst_14 = arith.constant dense<0.000000e+00> : vector<2x256xf32>
    %73 = tpu.matmul %72, %23, %cst_14 {dimension_numbers = #tpu.dot_dimension_numbers<[1], [0], [0], [1], [0, 0, 1, 1], [], []>} : vector<2x64xf32>, vector<64x256xf32>, vector<2x256xf32> -> vector<2x256xf32>
    %74 = arith.addf %34, %73 : vector<2x256xf32>
    %75 = vector.extract_strided_slice %74 {offsets = [0, 0], sizes = [2, 192], strides = [1, 1]} : vector<2x256xf32> to vector<2x192xf32>
    %76 = arith.negf %75 : vector<2x192xf32>
    %77 = math.exp %76 : vector<2x192xf32>
    %cst_15 = arith.constant 1.000000e+00 : f32
    %78 = vector.broadcast %cst_15 : f32 to vector<2x192xf32>
    %79 = arith.addf %78, %77 : vector<2x192xf32>
    %80 = arith.divf %78, %79 : vector<2x192xf32>
    %81 = vector.extract_strided_slice %74 {offsets = [0, 192], sizes = [2, 64], strides = [1, 1]} : vector<2x256xf32> to vector<2x64xf32>
    %82 = math.tanh %81 : vector<2x64xf32>
    %83 = vector.extract_strided_slice %80 {offsets = [0, 0], sizes = [2, 64], strides = [1, 1]} : vector<2x192xf32> to vector<2x64xf32>
    %84 = vector.extract_strided_slice %80 {offsets = [0, 64], sizes = [2, 64], strides = [1, 1]} : vector<2x192xf32> to vector<2x64xf32>
    %85 = vector.extract_strided_slice %80 {offsets = [0, 128], sizes = [2, 64], strides = [1, 1]} : vector<2x192xf32> to vector<2x64xf32>
    %86 = arith.mulf %84, %70 : vector<2x64xf32>
    %87 = arith.mulf %83, %82 : vector<2x64xf32>
    %88 = arith.addf %86, %87 : vector<2x64xf32>
    %89 = math.tanh %88 : vector<2x64xf32>
    %90 = arith.mulf %85, %89 : vector<2x64xf32>
    %cst_16 = arith.constant dense<0.000000e+00> : vector<2x256xf32>
    %91 = tpu.matmul %90, %23, %cst_16 {dimension_numbers = #tpu.dot_dimension_numbers<[1], [0], [0], [1], [0, 0, 1, 1], [], []>} : vector<2x64xf32>, vector<64x256xf32>, vector<2x256xf32> -> vector<2x256xf32>
    %92 = arith.addf %37, %91 : vector<2x256xf32>
    %93 = vector.extract_strided_slice %92 {offsets = [0, 0], sizes = [2, 192], strides = [1, 1]} : vector<2x256xf32> to vector<2x192xf32>
    %94 = arith.negf %93 : vector<2x192xf32>
    %95 = math.exp %94 : vector<2x192xf32>
    %cst_17 = arith.constant 1.000000e+00 : f32
    %96 = vector.broadcast %cst_17 : f32 to vector<2x192xf32>
    %97 = arith.addf %96, %95 : vector<2x192xf32>
    %98 = arith.divf %96, %97 : vector<2x192xf32>
    %99 = vector.extract_strided_slice %92 {offsets = [0, 192], sizes = [2, 64], strides = [1, 1]} : vector<2x256xf32> to vector<2x64xf32>
    %100 = math.tanh %99 : vector<2x64xf32>
    %101 = vector.extract_strided_slice %98 {offsets = [0, 0], sizes = [2, 64], strides = [1, 1]} : vector<2x192xf32> to vector<2x64xf32>
    %102 = vector.extract_strided_slice %98 {offsets = [0, 64], sizes = [2, 64], strides = [1, 1]} : vector<2x192xf32> to vector<2x64xf32>
    %103 = vector.extract_strided_slice %98 {offsets = [0, 128], sizes = [2, 64], strides = [1, 1]} : vector<2x192xf32> to vector<2x64xf32>
    %104 = arith.mulf %102, %88 : vector<2x64xf32>
    %105 = arith.mulf %101, %100 : vector<2x64xf32>
    %106 = arith.addf %104, %105 : vector<2x64xf32>
    %107 = math.tanh %106 : vector<2x64xf32>
    %108 = arith.mulf %103, %107 : vector<2x64xf32>
    %cst_18 = arith.constant dense<0.000000e+00> : vector<2x256xf32>
    %109 = tpu.matmul %108, %23, %cst_18 {dimension_numbers = #tpu.dot_dimension_numbers<[1], [0], [0], [1], [0, 0, 1, 1], [], []>} : vector<2x64xf32>, vector<64x256xf32>, vector<2x256xf32> -> vector<2x256xf32>
    %110 = arith.addf %40, %109 : vector<2x256xf32>
    %111 = vector.extract_strided_slice %110 {offsets = [0, 0], sizes = [2, 192], strides = [1, 1]} : vector<2x256xf32> to vector<2x192xf32>
    %112 = arith.negf %111 : vector<2x192xf32>
    %113 = math.exp %112 : vector<2x192xf32>
    %cst_19 = arith.constant 1.000000e+00 : f32
    %114 = vector.broadcast %cst_19 : f32 to vector<2x192xf32>
    %115 = arith.addf %114, %113 : vector<2x192xf32>
    %116 = arith.divf %114, %115 : vector<2x192xf32>
    %117 = vector.extract_strided_slice %110 {offsets = [0, 192], sizes = [2, 64], strides = [1, 1]} : vector<2x256xf32> to vector<2x64xf32>
    %118 = math.tanh %117 : vector<2x64xf32>
    %119 = vector.extract_strided_slice %116 {offsets = [0, 0], sizes = [2, 64], strides = [1, 1]} : vector<2x192xf32> to vector<2x64xf32>
    %120 = vector.extract_strided_slice %116 {offsets = [0, 64], sizes = [2, 64], strides = [1, 1]} : vector<2x192xf32> to vector<2x64xf32>
    %121 = vector.extract_strided_slice %116 {offsets = [0, 128], sizes = [2, 64], strides = [1, 1]} : vector<2x192xf32> to vector<2x64xf32>
    %122 = arith.mulf %120, %106 : vector<2x64xf32>
    %123 = arith.mulf %119, %118 : vector<2x64xf32>
    %124 = arith.addf %122, %123 : vector<2x64xf32>
    %125 = math.tanh %124 : vector<2x64xf32>
    %126 = arith.mulf %121, %125 : vector<2x64xf32>
    %cst_20 = arith.constant dense<0.000000e+00> : vector<2x256xf32>
    %127 = tpu.matmul %126, %23, %cst_20 {dimension_numbers = #tpu.dot_dimension_numbers<[1], [0], [0], [1], [0, 0, 1, 1], [], []>} : vector<2x64xf32>, vector<64x256xf32>, vector<2x256xf32> -> vector<2x256xf32>
    %128 = arith.addf %43, %127 : vector<2x256xf32>
    %129 = vector.extract_strided_slice %128 {offsets = [0, 0], sizes = [2, 192], strides = [1, 1]} : vector<2x256xf32> to vector<2x192xf32>
    %130 = arith.negf %129 : vector<2x192xf32>
    %131 = math.exp %130 : vector<2x192xf32>
    %cst_21 = arith.constant 1.000000e+00 : f32
    %132 = vector.broadcast %cst_21 : f32 to vector<2x192xf32>
    %133 = arith.addf %132, %131 : vector<2x192xf32>
    %134 = arith.divf %132, %133 : vector<2x192xf32>
    %135 = vector.extract_strided_slice %128 {offsets = [0, 192], sizes = [2, 64], strides = [1, 1]} : vector<2x256xf32> to vector<2x64xf32>
    %136 = math.tanh %135 : vector<2x64xf32>
    %137 = vector.extract_strided_slice %134 {offsets = [0, 0], sizes = [2, 64], strides = [1, 1]} : vector<2x192xf32> to vector<2x64xf32>
    %138 = vector.extract_strided_slice %134 {offsets = [0, 64], sizes = [2, 64], strides = [1, 1]} : vector<2x192xf32> to vector<2x64xf32>
    %139 = vector.extract_strided_slice %134 {offsets = [0, 128], sizes = [2, 64], strides = [1, 1]} : vector<2x192xf32> to vector<2x64xf32>
    %140 = arith.mulf %138, %124 : vector<2x64xf32>
    %141 = arith.mulf %137, %136 : vector<2x64xf32>
    %142 = arith.addf %140, %141 : vector<2x64xf32>
    %143 = math.tanh %142 : vector<2x64xf32>
    %144 = arith.mulf %139, %143 : vector<2x64xf32>
    %cst_22 = arith.constant dense<0.000000e+00> : vector<2x256xf32>
    %145 = tpu.matmul %144, %23, %cst_22 {dimension_numbers = #tpu.dot_dimension_numbers<[1], [0], [0], [1], [0, 0, 1, 1], [], []>} : vector<2x64xf32>, vector<64x256xf32>, vector<2x256xf32> -> vector<2x256xf32>
    %146 = arith.addf %46, %145 : vector<2x256xf32>
    %147 = vector.extract_strided_slice %146 {offsets = [0, 0], sizes = [2, 192], strides = [1, 1]} : vector<2x256xf32> to vector<2x192xf32>
    %148 = arith.negf %147 : vector<2x192xf32>
    %149 = math.exp %148 : vector<2x192xf32>
    %cst_23 = arith.constant 1.000000e+00 : f32
    %150 = vector.broadcast %cst_23 : f32 to vector<2x192xf32>
    %151 = arith.addf %150, %149 : vector<2x192xf32>
    %152 = arith.divf %150, %151 : vector<2x192xf32>
    %153 = vector.extract_strided_slice %146 {offsets = [0, 192], sizes = [2, 64], strides = [1, 1]} : vector<2x256xf32> to vector<2x64xf32>
    %154 = math.tanh %153 : vector<2x64xf32>
    %155 = vector.extract_strided_slice %152 {offsets = [0, 0], sizes = [2, 64], strides = [1, 1]} : vector<2x192xf32> to vector<2x64xf32>
    %156 = vector.extract_strided_slice %152 {offsets = [0, 64], sizes = [2, 64], strides = [1, 1]} : vector<2x192xf32> to vector<2x64xf32>
    %157 = vector.extract_strided_slice %152 {offsets = [0, 128], sizes = [2, 64], strides = [1, 1]} : vector<2x192xf32> to vector<2x64xf32>
    %158 = arith.mulf %156, %142 : vector<2x64xf32>
    %159 = arith.mulf %155, %154 : vector<2x64xf32>
    %160 = arith.addf %158, %159 : vector<2x64xf32>
    %161 = math.tanh %160 : vector<2x64xf32>
    %162 = arith.mulf %157, %161 : vector<2x64xf32>
    %cst_24 = arith.constant dense<0.000000e+00> : vector<2x256xf32>
    %163 = tpu.matmul %162, %23, %cst_24 {dimension_numbers = #tpu.dot_dimension_numbers<[1], [0], [0], [1], [0, 0, 1, 1], [], []>} : vector<2x64xf32>, vector<64x256xf32>, vector<2x256xf32> -> vector<2x256xf32>
    %164 = arith.addf %49, %163 : vector<2x256xf32>
    %165 = vector.extract_strided_slice %164 {offsets = [0, 0], sizes = [2, 192], strides = [1, 1]} : vector<2x256xf32> to vector<2x192xf32>
    %166 = arith.negf %165 : vector<2x192xf32>
    %167 = math.exp %166 : vector<2x192xf32>
    %cst_25 = arith.constant 1.000000e+00 : f32
    %168 = vector.broadcast %cst_25 : f32 to vector<2x192xf32>
    %169 = arith.addf %168, %167 : vector<2x192xf32>
    %170 = arith.divf %168, %169 : vector<2x192xf32>
    %171 = vector.extract_strided_slice %164 {offsets = [0, 192], sizes = [2, 64], strides = [1, 1]} : vector<2x256xf32> to vector<2x64xf32>
    %172 = math.tanh %171 : vector<2x64xf32>
    %173 = vector.extract_strided_slice %170 {offsets = [0, 0], sizes = [2, 64], strides = [1, 1]} : vector<2x192xf32> to vector<2x64xf32>
    %174 = vector.extract_strided_slice %170 {offsets = [0, 64], sizes = [2, 64], strides = [1, 1]} : vector<2x192xf32> to vector<2x64xf32>
    %175 = vector.extract_strided_slice %170 {offsets = [0, 128], sizes = [2, 64], strides = [1, 1]} : vector<2x192xf32> to vector<2x64xf32>
    %176 = arith.mulf %174, %160 : vector<2x64xf32>
    %177 = arith.mulf %173, %172 : vector<2x64xf32>
    %178 = arith.addf %176, %177 : vector<2x64xf32>
    %179 = math.tanh %178 : vector<2x64xf32>
    %180 = arith.mulf %175, %179 : vector<2x64xf32>
    %cst_26 = arith.constant dense<0.000000e+00> : vector<2x256xf32>
    %181 = tpu.matmul %180, %23, %cst_26 {dimension_numbers = #tpu.dot_dimension_numbers<[1], [0], [0], [1], [0, 0, 1, 1], [], []>} : vector<2x64xf32>, vector<64x256xf32>, vector<2x256xf32> -> vector<2x256xf32>
    %182 = arith.addf %52, %181 : vector<2x256xf32>
    %183 = vector.extract_strided_slice %182 {offsets = [0, 0], sizes = [2, 192], strides = [1, 1]} : vector<2x256xf32> to vector<2x192xf32>
    %184 = arith.negf %183 : vector<2x192xf32>
    %185 = math.exp %184 : vector<2x192xf32>
    %cst_27 = arith.constant 1.000000e+00 : f32
    %186 = vector.broadcast %cst_27 : f32 to vector<2x192xf32>
    %187 = arith.addf %186, %185 : vector<2x192xf32>
    %188 = arith.divf %186, %187 : vector<2x192xf32>
    %189 = vector.extract_strided_slice %182 {offsets = [0, 192], sizes = [2, 64], strides = [1, 1]} : vector<2x256xf32> to vector<2x64xf32>
    %190 = math.tanh %189 : vector<2x64xf32>
    %191 = vector.extract_strided_slice %188 {offsets = [0, 0], sizes = [2, 64], strides = [1, 1]} : vector<2x192xf32> to vector<2x64xf32>
    %192 = vector.extract_strided_slice %188 {offsets = [0, 64], sizes = [2, 64], strides = [1, 1]} : vector<2x192xf32> to vector<2x64xf32>
    %193 = vector.extract_strided_slice %188 {offsets = [0, 128], sizes = [2, 64], strides = [1, 1]} : vector<2x192xf32> to vector<2x64xf32>
    %194 = arith.mulf %192, %178 : vector<2x64xf32>
    %195 = arith.mulf %191, %190 : vector<2x64xf32>
    %196 = arith.addf %194, %195 : vector<2x64xf32>
    %197 = math.tanh %196 : vector<2x64xf32>
    %198 = arith.mulf %193, %197 : vector<2x64xf32>
    %199 = arith.select %21, %72, %198 : vector<2x64xi1>, vector<2x64xf32>
    %c0_28 = arith.constant 0 : index
    %c0_29 = arith.constant 0 : index
    %200 = vector.load %arg4[%c0_28, %c0_29] : memref<16x64xf32, #tpu.memory_space<vmem>>, vector<2x64xf32>
    tpu.vector_store %arg4[%c0_28, %c0_29], %199 {strides = array<i32>} : memref<16x64xf32, #tpu.memory_space<vmem>>, vector<2x64xf32>,
    %201 = arith.select %21, %90, %180 : vector<2x64xi1>, vector<2x64xf32>
    %c2 = arith.constant 2 : index
    %c0_30 = arith.constant 0 : index
    %202 = vector.load %arg4[%c2, %c0_30] : memref<16x64xf32, #tpu.memory_space<vmem>>, vector<2x64xf32>
    tpu.vector_store %arg4[%c2, %c0_30], %201 {strides = array<i32>} : memref<16x64xf32, #tpu.memory_space<vmem>>, vector<2x64xf32>,
    %203 = arith.select %21, %108, %162 : vector<2x64xi1>, vector<2x64xf32>
    %c4 = arith.constant 4 : index
    %c0_31 = arith.constant 0 : index
    %204 = vector.load %arg4[%c4, %c0_31] : memref<16x64xf32, #tpu.memory_space<vmem>>, vector<2x64xf32>
    tpu.vector_store %arg4[%c4, %c0_31], %203 {strides = array<i32>} : memref<16x64xf32, #tpu.memory_space<vmem>>, vector<2x64xf32>,
    %205 = arith.select %21, %126, %144 : vector<2x64xi1>, vector<2x64xf32>
    %c6 = arith.constant 6 : index
    %c0_32 = arith.constant 0 : index
    %206 = vector.load %arg4[%c6, %c0_32] : memref<16x64xf32, #tpu.memory_space<vmem>>, vector<2x64xf32>
    tpu.vector_store %arg4[%c6, %c0_32], %205 {strides = array<i32>} : memref<16x64xf32, #tpu.memory_space<vmem>>, vector<2x64xf32>,
    %207 = arith.select %21, %144, %126 : vector<2x64xi1>, vector<2x64xf32>
    %c8 = arith.constant 8 : index
    %c0_33 = arith.constant 0 : index
    %208 = vector.load %arg4[%c8, %c0_33] : memref<16x64xf32, #tpu.memory_space<vmem>>, vector<2x64xf32>
    tpu.vector_store %arg4[%c8, %c0_33], %207 {strides = array<i32>} : memref<16x64xf32, #tpu.memory_space<vmem>>, vector<2x64xf32>,
    %209 = arith.select %21, %162, %108 : vector<2x64xi1>, vector<2x64xf32>
    %c10 = arith.constant 10 : index
    %c0_34 = arith.constant 0 : index
    %210 = vector.load %arg4[%c10, %c0_34] : memref<16x64xf32, #tpu.memory_space<vmem>>, vector<2x64xf32>
    tpu.vector_store %arg4[%c10, %c0_34], %209 {strides = array<i32>} : memref<16x64xf32, #tpu.memory_space<vmem>>, vector<2x64xf32>,
    %211 = arith.select %21, %180, %90 : vector<2x64xi1>, vector<2x64xf32>
    %c12 = arith.constant 12 : index
    %c0_35 = arith.constant 0 : index
    %212 = vector.load %arg4[%c12, %c0_35] : memref<16x64xf32, #tpu.memory_space<vmem>>, vector<2x64xf32>
    tpu.vector_store %arg4[%c12, %c0_35], %211 {strides = array<i32>} : memref<16x64xf32, #tpu.memory_space<vmem>>, vector<2x64xf32>,
    %213 = arith.select %21, %198, %72 : vector<2x64xi1>, vector<2x64xf32>
    %c14 = arith.constant 14 : index
    %c0_36 = arith.constant 0 : index
    %214 = vector.load %arg4[%c14, %c0_36] : memref<16x64xf32, #tpu.memory_space<vmem>>, vector<2x64xf32>
    tpu.vector_store %arg4[%c14, %c0_36], %213 {strides = array<i32>} : memref<16x64xf32, #tpu.memory_space<vmem>>, vector<2x64xf32>,
    %c0_37 = arith.constant 0 : index
    %c256 = arith.constant 256 : index
    %215 = vector.load %arg1[%c0_37, %c256] : memref<64x1664xf32, #tpu.memory_space<vmem>>, vector<64x256xf32>
    %c0_38 = arith.constant 0 : index
    %c1024 = arith.constant 1024 : index
    %216 = vector.load %arg1[%c0_38, %c1024] : memref<64x1664xf32, #tpu.memory_space<vmem>>, vector<64x256xf32>
    %c0_39 = arith.constant 0 : index
    %c256_40 = arith.constant 256 : index
    %217 = vector.load %arg2[%c0_39, %c256_40] : memref<1x896xf32, #tpu.memory_space<vmem>>, vector<1x256xf32>
    %c0_41 = arith.constant 0 : index
    %c0_42 = arith.constant 0 : index
    %218 = vector.load %arg4[%c0_41, %c0_42] : memref<16x64xf32, #tpu.memory_space<vmem>>, vector<16x64xf32>
    %cst_43 = arith.constant dense<0.000000e+00> : vector<16x256xf32>
    %219 = tpu.matmul %218, %215, %cst_43 {dimension_numbers = #tpu.dot_dimension_numbers<[1], [0], [0], [1], [0, 0, 1, 1], [], []>} : vector<16x64xf32>, vector<64x256xf32>, vector<16x256xf32> -> vector<16x256xf32>
    %220 = vector.broadcast %217 : vector<1x256xf32> to vector<16x256xf32>
    %221 = arith.addf %219, %220 : vector<16x256xf32>
    %222 = vector.extract_strided_slice %221 {offsets = [0, 0], sizes = [2, 256], strides = [1, 1]} : vector<16x256xf32> to vector<2x256xf32>
    %223 = vector.extract_strided_slice %221 {offsets = [14, 0], sizes = [2, 256], strides = [1, 1]} : vector<16x256xf32> to vector<2x256xf32>
    %224 = arith.select %18, %222, %223 : vector<2x256xi1>, vector<2x256xf32>
    %225 = vector.extract_strided_slice %221 {offsets = [2, 0], sizes = [2, 256], strides = [1, 1]} : vector<16x256xf32> to vector<2x256xf32>
    %226 = vector.extract_strided_slice %221 {offsets = [12, 0], sizes = [2, 256], strides = [1, 1]} : vector<16x256xf32> to vector<2x256xf32>
    %227 = arith.select %18, %225, %226 : vector<2x256xi1>, vector<2x256xf32>
    %228 = vector.extract_strided_slice %221 {offsets = [4, 0], sizes = [2, 256], strides = [1, 1]} : vector<16x256xf32> to vector<2x256xf32>
    %229 = vector.extract_strided_slice %221 {offsets = [10, 0], sizes = [2, 256], strides = [1, 1]} : vector<16x256xf32> to vector<2x256xf32>
    %230 = arith.select %18, %228, %229 : vector<2x256xi1>, vector<2x256xf32>
    %231 = vector.extract_strided_slice %221 {offsets = [6, 0], sizes = [2, 256], strides = [1, 1]} : vector<16x256xf32> to vector<2x256xf32>
    %232 = vector.extract_strided_slice %221 {offsets = [8, 0], sizes = [2, 256], strides = [1, 1]} : vector<16x256xf32> to vector<2x256xf32>
    %233 = arith.select %18, %231, %232 : vector<2x256xi1>, vector<2x256xf32>
    %234 = vector.extract_strided_slice %221 {offsets = [8, 0], sizes = [2, 256], strides = [1, 1]} : vector<16x256xf32> to vector<2x256xf32>
    %235 = vector.extract_strided_slice %221 {offsets = [6, 0], sizes = [2, 256], strides = [1, 1]} : vector<16x256xf32> to vector<2x256xf32>
    %236 = arith.select %18, %234, %235 : vector<2x256xi1>, vector<2x256xf32>
    %237 = vector.extract_strided_slice %221 {offsets = [10, 0], sizes = [2, 256], strides = [1, 1]} : vector<16x256xf32> to vector<2x256xf32>
    %238 = vector.extract_strided_slice %221 {offsets = [4, 0], sizes = [2, 256], strides = [1, 1]} : vector<16x256xf32> to vector<2x256xf32>
    %239 = arith.select %18, %237, %238 : vector<2x256xi1>, vector<2x256xf32>
    %240 = vector.extract_strided_slice %221 {offsets = [12, 0], sizes = [2, 256], strides = [1, 1]} : vector<16x256xf32> to vector<2x256xf32>
    %241 = vector.extract_strided_slice %221 {offsets = [2, 0], sizes = [2, 256], strides = [1, 1]} : vector<16x256xf32> to vector<2x256xf32>
    %242 = arith.select %18, %240, %241 : vector<2x256xi1>, vector<2x256xf32>
    %243 = vector.extract_strided_slice %221 {offsets = [14, 0], sizes = [2, 256], strides = [1, 1]} : vector<16x256xf32> to vector<2x256xf32>
    %244 = vector.extract_strided_slice %221 {offsets = [0, 0], sizes = [2, 256], strides = [1, 1]} : vector<16x256xf32> to vector<2x256xf32>
    %245 = arith.select %18, %243, %244 : vector<2x256xi1>, vector<2x256xf32>
    %cst_44 = arith.constant 0.000000e+00 : f32
    %246 = vector.broadcast %cst_44 : f32 to vector<2x64xf32>
    %cst_45 = arith.constant 0.000000e+00 : f32
    %247 = vector.broadcast %cst_45 : f32 to vector<2x64xf32>
    %cst_46 = arith.constant dense<0.000000e+00> : vector<2x256xf32>
    %248 = tpu.matmul %246, %216, %cst_46 {dimension_numbers = #tpu.dot_dimension_numbers<[1], [0], [0], [1], [0, 0, 1, 1], [], []>} : vector<2x64xf32>, vector<64x256xf32>, vector<2x256xf32> -> vector<2x256xf32>
    %249 = arith.addf %224, %248 : vector<2x256xf32>
    %250 = vector.extract_strided_slice %249 {offsets = [0, 0], sizes = [2, 192], strides = [1, 1]} : vector<2x256xf32> to vector<2x192xf32>
    %251 = arith.negf %250 : vector<2x192xf32>
    %252 = math.exp %251 : vector<2x192xf32>
    %cst_47 = arith.constant 1.000000e+00 : f32
    %253 = vector.broadcast %cst_47 : f32 to vector<2x192xf32>
    %254 = arith.addf %253, %252 : vector<2x192xf32>
    %255 = arith.divf %253, %254 : vector<2x192xf32>
    %256 = vector.extract_strided_slice %249 {offsets = [0, 192], sizes = [2, 64], strides = [1, 1]} : vector<2x256xf32> to vector<2x64xf32>
    %257 = math.tanh %256 : vector<2x64xf32>
    %258 = vector.extract_strided_slice %255 {offsets = [0, 0], sizes = [2, 64], strides = [1, 1]} : vector<2x192xf32> to vector<2x64xf32>
    %259 = vector.extract_strided_slice %255 {offsets = [0, 64], sizes = [2, 64], strides = [1, 1]} : vector<2x192xf32> to vector<2x64xf32>
    %260 = vector.extract_strided_slice %255 {offsets = [0, 128], sizes = [2, 64], strides = [1, 1]} : vector<2x192xf32> to vector<2x64xf32>
    %261 = arith.mulf %259, %247 : vector<2x64xf32>
    %262 = arith.mulf %258, %257 : vector<2x64xf32>
    %263 = arith.addf %261, %262 : vector<2x64xf32>
    %264 = math.tanh %263 : vector<2x64xf32>
    %265 = arith.mulf %260, %264 : vector<2x64xf32>
    %cst_48 = arith.constant dense<0.000000e+00> : vector<2x256xf32>
    %266 = tpu.matmul %265, %216, %cst_48 {dimension_numbers = #tpu.dot_dimension_numbers<[1], [0], [0], [1], [0, 0, 1, 1], [], []>} : vector<2x64xf32>, vector<64x256xf32>, vector<2x256xf32> -> vector<2x256xf32>
    %267 = arith.addf %227, %266 : vector<2x256xf32>
    %268 = vector.extract_strided_slice %267 {offsets = [0, 0], sizes = [2, 192], strides = [1, 1]} : vector<2x256xf32> to vector<2x192xf32>
    %269 = arith.negf %268 : vector<2x192xf32>
    %270 = math.exp %269 : vector<2x192xf32>
    %cst_49 = arith.constant 1.000000e+00 : f32
    %271 = vector.broadcast %cst_49 : f32 to vector<2x192xf32>
    %272 = arith.addf %271, %270 : vector<2x192xf32>
    %273 = arith.divf %271, %272 : vector<2x192xf32>
    %274 = vector.extract_strided_slice %267 {offsets = [0, 192], sizes = [2, 64], strides = [1, 1]} : vector<2x256xf32> to vector<2x64xf32>
    %275 = math.tanh %274 : vector<2x64xf32>
    %276 = vector.extract_strided_slice %273 {offsets = [0, 0], sizes = [2, 64], strides = [1, 1]} : vector<2x192xf32> to vector<2x64xf32>
    %277 = vector.extract_strided_slice %273 {offsets = [0, 64], sizes = [2, 64], strides = [1, 1]} : vector<2x192xf32> to vector<2x64xf32>
    %278 = vector.extract_strided_slice %273 {offsets = [0, 128], sizes = [2, 64], strides = [1, 1]} : vector<2x192xf32> to vector<2x64xf32>
    %279 = arith.mulf %277, %263 : vector<2x64xf32>
    %280 = arith.mulf %276, %275 : vector<2x64xf32>
    %281 = arith.addf %279, %280 : vector<2x64xf32>
    %282 = math.tanh %281 : vector<2x64xf32>
    %283 = arith.mulf %278, %282 : vector<2x64xf32>
    %cst_50 = arith.constant dense<0.000000e+00> : vector<2x256xf32>
    %284 = tpu.matmul %283, %216, %cst_50 {dimension_numbers = #tpu.dot_dimension_numbers<[1], [0], [0], [1], [0, 0, 1, 1], [], []>} : vector<2x64xf32>, vector<64x256xf32>, vector<2x256xf32> -> vector<2x256xf32>
    %285 = arith.addf %230, %284 : vector<2x256xf32>
    %286 = vector.extract_strided_slice %285 {offsets = [0, 0], sizes = [2, 192], strides = [1, 1]} : vector<2x256xf32> to vector<2x192xf32>
    %287 = arith.negf %286 : vector<2x192xf32>
    %288 = math.exp %287 : vector<2x192xf32>
    %cst_51 = arith.constant 1.000000e+00 : f32
    %289 = vector.broadcast %cst_51 : f32 to vector<2x192xf32>
    %290 = arith.addf %289, %288 : vector<2x192xf32>
    %291 = arith.divf %289, %290 : vector<2x192xf32>
    %292 = vector.extract_strided_slice %285 {offsets = [0, 192], sizes = [2, 64], strides = [1, 1]} : vector<2x256xf32> to vector<2x64xf32>
    %293 = math.tanh %292 : vector<2x64xf32>
    %294 = vector.extract_strided_slice %291 {offsets = [0, 0], sizes = [2, 64], strides = [1, 1]} : vector<2x192xf32> to vector<2x64xf32>
    %295 = vector.extract_strided_slice %291 {offsets = [0, 64], sizes = [2, 64], strides = [1, 1]} : vector<2x192xf32> to vector<2x64xf32>
    %296 = vector.extract_strided_slice %291 {offsets = [0, 128], sizes = [2, 64], strides = [1, 1]} : vector<2x192xf32> to vector<2x64xf32>
    %297 = arith.mulf %295, %281 : vector<2x64xf32>
    %298 = arith.mulf %294, %293 : vector<2x64xf32>
    %299 = arith.addf %297, %298 : vector<2x64xf32>
    %300 = math.tanh %299 : vector<2x64xf32>
    %301 = arith.mulf %296, %300 : vector<2x64xf32>
    %cst_52 = arith.constant dense<0.000000e+00> : vector<2x256xf32>
    %302 = tpu.matmul %301, %216, %cst_52 {dimension_numbers = #tpu.dot_dimension_numbers<[1], [0], [0], [1], [0, 0, 1, 1], [], []>} : vector<2x64xf32>, vector<64x256xf32>, vector<2x256xf32> -> vector<2x256xf32>
    %303 = arith.addf %233, %302 : vector<2x256xf32>
    %304 = vector.extract_strided_slice %303 {offsets = [0, 0], sizes = [2, 192], strides = [1, 1]} : vector<2x256xf32> to vector<2x192xf32>
    %305 = arith.negf %304 : vector<2x192xf32>
    %306 = math.exp %305 : vector<2x192xf32>
    %cst_53 = arith.constant 1.000000e+00 : f32
    %307 = vector.broadcast %cst_53 : f32 to vector<2x192xf32>
    %308 = arith.addf %307, %306 : vector<2x192xf32>
    %309 = arith.divf %307, %308 : vector<2x192xf32>
    %310 = vector.extract_strided_slice %303 {offsets = [0, 192], sizes = [2, 64], strides = [1, 1]} : vector<2x256xf32> to vector<2x64xf32>
    %311 = math.tanh %310 : vector<2x64xf32>
    %312 = vector.extract_strided_slice %309 {offsets = [0, 0], sizes = [2, 64], strides = [1, 1]} : vector<2x192xf32> to vector<2x64xf32>
    %313 = vector.extract_strided_slice %309 {offsets = [0, 64], sizes = [2, 64], strides = [1, 1]} : vector<2x192xf32> to vector<2x64xf32>
    %314 = vector.extract_strided_slice %309 {offsets = [0, 128], sizes = [2, 64], strides = [1, 1]} : vector<2x192xf32> to vector<2x64xf32>
    %315 = arith.mulf %313, %299 : vector<2x64xf32>
    %316 = arith.mulf %312, %311 : vector<2x64xf32>
    %317 = arith.addf %315, %316 : vector<2x64xf32>
    %318 = math.tanh %317 : vector<2x64xf32>
    %319 = arith.mulf %314, %318 : vector<2x64xf32>
    %cst_54 = arith.constant dense<0.000000e+00> : vector<2x256xf32>
    %320 = tpu.matmul %319, %216, %cst_54 {dimension_numbers = #tpu.dot_dimension_numbers<[1], [0], [0], [1], [0, 0, 1, 1], [], []>} : vector<2x64xf32>, vector<64x256xf32>, vector<2x256xf32> -> vector<2x256xf32>
    %321 = arith.addf %236, %320 : vector<2x256xf32>
    %322 = vector.extract_strided_slice %321 {offsets = [0, 0], sizes = [2, 192], strides = [1, 1]} : vector<2x256xf32> to vector<2x192xf32>
    %323 = arith.negf %322 : vector<2x192xf32>
    %324 = math.exp %323 : vector<2x192xf32>
    %cst_55 = arith.constant 1.000000e+00 : f32
    %325 = vector.broadcast %cst_55 : f32 to vector<2x192xf32>
    %326 = arith.addf %325, %324 : vector<2x192xf32>
    %327 = arith.divf %325, %326 : vector<2x192xf32>
    %328 = vector.extract_strided_slice %321 {offsets = [0, 192], sizes = [2, 64], strides = [1, 1]} : vector<2x256xf32> to vector<2x64xf32>
    %329 = math.tanh %328 : vector<2x64xf32>
    %330 = vector.extract_strided_slice %327 {offsets = [0, 0], sizes = [2, 64], strides = [1, 1]} : vector<2x192xf32> to vector<2x64xf32>
    %331 = vector.extract_strided_slice %327 {offsets = [0, 64], sizes = [2, 64], strides = [1, 1]} : vector<2x192xf32> to vector<2x64xf32>
    %332 = vector.extract_strided_slice %327 {offsets = [0, 128], sizes = [2, 64], strides = [1, 1]} : vector<2x192xf32> to vector<2x64xf32>
    %333 = arith.mulf %331, %317 : vector<2x64xf32>
    %334 = arith.mulf %330, %329 : vector<2x64xf32>
    %335 = arith.addf %333, %334 : vector<2x64xf32>
    %336 = math.tanh %335 : vector<2x64xf32>
    %337 = arith.mulf %332, %336 : vector<2x64xf32>
    %cst_56 = arith.constant dense<0.000000e+00> : vector<2x256xf32>
    %338 = tpu.matmul %337, %216, %cst_56 {dimension_numbers = #tpu.dot_dimension_numbers<[1], [0], [0], [1], [0, 0, 1, 1], [], []>} : vector<2x64xf32>, vector<64x256xf32>, vector<2x256xf32> -> vector<2x256xf32>
    %339 = arith.addf %239, %338 : vector<2x256xf32>
    %340 = vector.extract_strided_slice %339 {offsets = [0, 0], sizes = [2, 192], strides = [1, 1]} : vector<2x256xf32> to vector<2x192xf32>
    %341 = arith.negf %340 : vector<2x192xf32>
    %342 = math.exp %341 : vector<2x192xf32>
    %cst_57 = arith.constant 1.000000e+00 : f32
    %343 = vector.broadcast %cst_57 : f32 to vector<2x192xf32>
    %344 = arith.addf %343, %342 : vector<2x192xf32>
    %345 = arith.divf %343, %344 : vector<2x192xf32>
    %346 = vector.extract_strided_slice %339 {offsets = [0, 192], sizes = [2, 64], strides = [1, 1]} : vector<2x256xf32> to vector<2x64xf32>
    %347 = math.tanh %346 : vector<2x64xf32>
    %348 = vector.extract_strided_slice %345 {offsets = [0, 0], sizes = [2, 64], strides = [1, 1]} : vector<2x192xf32> to vector<2x64xf32>
    %349 = vector.extract_strided_slice %345 {offsets = [0, 64], sizes = [2, 64], strides = [1, 1]} : vector<2x192xf32> to vector<2x64xf32>
    %350 = vector.extract_strided_slice %345 {offsets = [0, 128], sizes = [2, 64], strides = [1, 1]} : vector<2x192xf32> to vector<2x64xf32>
    %351 = arith.mulf %349, %335 : vector<2x64xf32>
    %352 = arith.mulf %348, %347 : vector<2x64xf32>
    %353 = arith.addf %351, %352 : vector<2x64xf32>
    %354 = math.tanh %353 : vector<2x64xf32>
    %355 = arith.mulf %350, %354 : vector<2x64xf32>
    %cst_58 = arith.constant dense<0.000000e+00> : vector<2x256xf32>
    %356 = tpu.matmul %355, %216, %cst_58 {dimension_numbers = #tpu.dot_dimension_numbers<[1], [0], [0], [1], [0, 0, 1, 1], [], []>} : vector<2x64xf32>, vector<64x256xf32>, vector<2x256xf32> -> vector<2x256xf32>
    %357 = arith.addf %242, %356 : vector<2x256xf32>
    %358 = vector.extract_strided_slice %357 {offsets = [0, 0], sizes = [2, 192], strides = [1, 1]} : vector<2x256xf32> to vector<2x192xf32>
    %359 = arith.negf %358 : vector<2x192xf32>
    %360 = math.exp %359 : vector<2x192xf32>
    %cst_59 = arith.constant 1.000000e+00 : f32
    %361 = vector.broadcast %cst_59 : f32 to vector<2x192xf32>
    %362 = arith.addf %361, %360 : vector<2x192xf32>
    %363 = arith.divf %361, %362 : vector<2x192xf32>
    %364 = vector.extract_strided_slice %357 {offsets = [0, 192], sizes = [2, 64], strides = [1, 1]} : vector<2x256xf32> to vector<2x64xf32>
    %365 = math.tanh %364 : vector<2x64xf32>
    %366 = vector.extract_strided_slice %363 {offsets = [0, 0], sizes = [2, 64], strides = [1, 1]} : vector<2x192xf32> to vector<2x64xf32>
    %367 = vector.extract_strided_slice %363 {offsets = [0, 64], sizes = [2, 64], strides = [1, 1]} : vector<2x192xf32> to vector<2x64xf32>
    %368 = vector.extract_strided_slice %363 {offsets = [0, 128], sizes = [2, 64], strides = [1, 1]} : vector<2x192xf32> to vector<2x64xf32>
    %369 = arith.mulf %367, %353 : vector<2x64xf32>
    %370 = arith.mulf %366, %365 : vector<2x64xf32>
    %371 = arith.addf %369, %370 : vector<2x64xf32>
    %372 = math.tanh %371 : vector<2x64xf32>
    %373 = arith.mulf %368, %372 : vector<2x64xf32>
    %cst_60 = arith.constant dense<0.000000e+00> : vector<2x256xf32>
    %374 = tpu.matmul %373, %216, %cst_60 {dimension_numbers = #tpu.dot_dimension_numbers<[1], [0], [0], [1], [0, 0, 1, 1], [], []>} : vector<2x64xf32>, vector<64x256xf32>, vector<2x256xf32> -> vector<2x256xf32>
    %375 = arith.addf %245, %374 : vector<2x256xf32>
    %376 = vector.extract_strided_slice %375 {offsets = [0, 0], sizes = [2, 192], strides = [1, 1]} : vector<2x256xf32> to vector<2x192xf32>
    %377 = arith.negf %376 : vector<2x192xf32>
    %378 = math.exp %377 : vector<2x192xf32>
    %cst_61 = arith.constant 1.000000e+00 : f32
    %379 = vector.broadcast %cst_61 : f32 to vector<2x192xf32>
    %380 = arith.addf %379, %378 : vector<2x192xf32>
    %381 = arith.divf %379, %380 : vector<2x192xf32>
    %382 = vector.extract_strided_slice %375 {offsets = [0, 192], sizes = [2, 64], strides = [1, 1]} : vector<2x256xf32> to vector<2x64xf32>
    %383 = math.tanh %382 : vector<2x64xf32>
    %384 = vector.extract_strided_slice %381 {offsets = [0, 0], sizes = [2, 64], strides = [1, 1]} : vector<2x192xf32> to vector<2x64xf32>
    %385 = vector.extract_strided_slice %381 {offsets = [0, 64], sizes = [2, 64], strides = [1, 1]} : vector<2x192xf32> to vector<2x64xf32>
    %386 = vector.extract_strided_slice %381 {offsets = [0, 128], sizes = [2, 64], strides = [1, 1]} : vector<2x192xf32> to vector<2x64xf32>
    %387 = arith.mulf %385, %371 : vector<2x64xf32>
    %388 = arith.mulf %384, %383 : vector<2x64xf32>
    %389 = arith.addf %387, %388 : vector<2x64xf32>
    %390 = math.tanh %389 : vector<2x64xf32>
    %391 = arith.mulf %386, %390 : vector<2x64xf32>
    %392 = arith.select %21, %265, %391 : vector<2x64xi1>, vector<2x64xf32>
    %c0_62 = arith.constant 0 : index
    %c0_63 = arith.constant 0 : index
    %393 = vector.load %arg5[%c0_62, %c0_63] : memref<16x64xf32, #tpu.memory_space<vmem>>, vector<2x64xf32>
    tpu.vector_store %arg5[%c0_62, %c0_63], %392 {strides = array<i32>} : memref<16x64xf32, #tpu.memory_space<vmem>>, vector<2x64xf32>,
    %394 = arith.select %21, %283, %373 : vector<2x64xi1>, vector<2x64xf32>
    %c2_64 = arith.constant 2 : index
    %c0_65 = arith.constant 0 : index
    %395 = vector.load %arg5[%c2_64, %c0_65] : memref<16x64xf32, #tpu.memory_space<vmem>>, vector<2x64xf32>
    tpu.vector_store %arg5[%c2_64, %c0_65], %394 {strides = array<i32>} : memref<16x64xf32, #tpu.memory_space<vmem>>, vector<2x64xf32>,
    %396 = arith.select %21, %301, %355 : vector<2x64xi1>, vector<2x64xf32>
    %c4_66 = arith.constant 4 : index
    %c0_67 = arith.constant 0 : index
    %397 = vector.load %arg5[%c4_66, %c0_67] : memref<16x64xf32, #tpu.memory_space<vmem>>, vector<2x64xf32>
    tpu.vector_store %arg5[%c4_66, %c0_67], %396 {strides = array<i32>} : memref<16x64xf32, #tpu.memory_space<vmem>>, vector<2x64xf32>,
    %398 = arith.select %21, %319, %337 : vector<2x64xi1>, vector<2x64xf32>
    %c6_68 = arith.constant 6 : index
    %c0_69 = arith.constant 0 : index
    %399 = vector.load %arg5[%c6_68, %c0_69] : memref<16x64xf32, #tpu.memory_space<vmem>>, vector<2x64xf32>
    tpu.vector_store %arg5[%c6_68, %c0_69], %398 {strides = array<i32>} : memref<16x64xf32, #tpu.memory_space<vmem>>, vector<2x64xf32>,
    %400 = arith.select %21, %337, %319 : vector<2x64xi1>, vector<2x64xf32>
    %c8_70 = arith.constant 8 : index
    %c0_71 = arith.constant 0 : index
    %401 = vector.load %arg5[%c8_70, %c0_71] : memref<16x64xf32, #tpu.memory_space<vmem>>, vector<2x64xf32>
    tpu.vector_store %arg5[%c8_70, %c0_71], %400 {strides = array<i32>} : memref<16x64xf32, #tpu.memory_space<vmem>>, vector<2x64xf32>,
    %402 = arith.select %21, %355, %301 : vector<2x64xi1>, vector<2x64xf32>
    %c10_72 = arith.constant 10 : index
    %c0_73 = arith.constant 0 : index
    %403 = vector.load %arg5[%c10_72, %c0_73] : memref<16x64xf32, #tpu.memory_space<vmem>>, vector<2x64xf32>
    tpu.vector_store %arg5[%c10_72, %c0_73], %402 {strides = array<i32>} : memref<16x64xf32, #tpu.memory_space<vmem>>, vector<2x64xf32>,
    %404 = arith.select %21, %373, %283 : vector<2x64xi1>, vector<2x64xf32>
    %c12_74 = arith.constant 12 : index
    %c0_75 = arith.constant 0 : index
    %405 = vector.load %arg5[%c12_74, %c0_75] : memref<16x64xf32, #tpu.memory_space<vmem>>, vector<2x64xf32>
    tpu.vector_store %arg5[%c12_74, %c0_75], %404 {strides = array<i32>} : memref<16x64xf32, #tpu.memory_space<vmem>>, vector<2x64xf32>,
    %406 = arith.select %21, %391, %265 : vector<2x64xi1>, vector<2x64xf32>
    %c14_76 = arith.constant 14 : index
    %c0_77 = arith.constant 0 : index
    %407 = vector.load %arg5[%c14_76, %c0_77] : memref<16x64xf32, #tpu.memory_space<vmem>>, vector<2x64xf32>
    tpu.vector_store %arg5[%c14_76, %c0_77], %406 {strides = array<i32>} : memref<16x64xf32, #tpu.memory_space<vmem>>, vector<2x64xf32>,
    %c0_78 = arith.constant 0 : index
    %c512 = arith.constant 512 : index
    %408 = vector.load %arg1[%c0_78, %c512] : memref<64x1664xf32, #tpu.memory_space<vmem>>, vector<64x256xf32>
    %c0_79 = arith.constant 0 : index
    %c1280 = arith.constant 1280 : index
    %409 = vector.load %arg1[%c0_79, %c1280] : memref<64x1664xf32, #tpu.memory_space<vmem>>, vector<64x256xf32>
    %c0_80 = arith.constant 0 : index
    %c512_81 = arith.constant 512 : index
    %410 = vector.load %arg2[%c0_80, %c512_81] : memref<1x896xf32, #tpu.memory_space<vmem>>, vector<1x256xf32>
    %c0_82 = arith.constant 0 : index
    %c0_83 = arith.constant 0 : index
    %411 = vector.load %arg5[%c0_82, %c0_83] : memref<16x64xf32, #tpu.memory_space<vmem>>, vector<16x64xf32>
    %cst_84 = arith.constant dense<0.000000e+00> : vector<16x256xf32>
    %412 = tpu.matmul %411, %408, %cst_84 {dimension_numbers = #tpu.dot_dimension_numbers<[1], [0], [0], [1], [0, 0, 1, 1], [], []>} : vector<16x64xf32>, vector<64x256xf32>, vector<16x256xf32> -> vector<16x256xf32>
    %413 = vector.broadcast %410 : vector<1x256xf32> to vector<16x256xf32>
    %414 = arith.addf %412, %413 : vector<16x256xf32>
    %415 = vector.extract_strided_slice %414 {offsets = [0, 0], sizes = [2, 256], strides = [1, 1]} : vector<16x256xf32> to vector<2x256xf32>
    %416 = vector.extract_strided_slice %414 {offsets = [14, 0], sizes = [2, 256], strides = [1, 1]} : vector<16x256xf32> to vector<2x256xf32>
    %417 = arith.select %18, %415, %416 : vector<2x256xi1>, vector<2x256xf32>
    %418 = vector.extract_strided_slice %414 {offsets = [2, 0], sizes = [2, 256], strides = [1, 1]} : vector<16x256xf32> to vector<2x256xf32>
    %419 = vector.extract_strided_slice %414 {offsets = [12, 0], sizes = [2, 256], strides = [1, 1]} : vector<16x256xf32> to vector<2x256xf32>
    %420 = arith.select %18, %418, %419 : vector<2x256xi1>, vector<2x256xf32>
    %421 = vector.extract_strided_slice %414 {offsets = [4, 0], sizes = [2, 256], strides = [1, 1]} : vector<16x256xf32> to vector<2x256xf32>
    %422 = vector.extract_strided_slice %414 {offsets = [10, 0], sizes = [2, 256], strides = [1, 1]} : vector<16x256xf32> to vector<2x256xf32>
    %423 = arith.select %18, %421, %422 : vector<2x256xi1>, vector<2x256xf32>
    %424 = vector.extract_strided_slice %414 {offsets = [6, 0], sizes = [2, 256], strides = [1, 1]} : vector<16x256xf32> to vector<2x256xf32>
    %425 = vector.extract_strided_slice %414 {offsets = [8, 0], sizes = [2, 256], strides = [1, 1]} : vector<16x256xf32> to vector<2x256xf32>
    %426 = arith.select %18, %424, %425 : vector<2x256xi1>, vector<2x256xf32>
    %427 = vector.extract_strided_slice %414 {offsets = [8, 0], sizes = [2, 256], strides = [1, 1]} : vector<16x256xf32> to vector<2x256xf32>
    %428 = vector.extract_strided_slice %414 {offsets = [6, 0], sizes = [2, 256], strides = [1, 1]} : vector<16x256xf32> to vector<2x256xf32>
    %429 = arith.select %18, %427, %428 : vector<2x256xi1>, vector<2x256xf32>
    %430 = vector.extract_strided_slice %414 {offsets = [10, 0], sizes = [2, 256], strides = [1, 1]} : vector<16x256xf32> to vector<2x256xf32>
    %431 = vector.extract_strided_slice %414 {offsets = [4, 0], sizes = [2, 256], strides = [1, 1]} : vector<16x256xf32> to vector<2x256xf32>
    %432 = arith.select %18, %430, %431 : vector<2x256xi1>, vector<2x256xf32>
    %433 = vector.extract_strided_slice %414 {offsets = [12, 0], sizes = [2, 256], strides = [1, 1]} : vector<16x256xf32> to vector<2x256xf32>
    %434 = vector.extract_strided_slice %414 {offsets = [2, 0], sizes = [2, 256], strides = [1, 1]} : vector<16x256xf32> to vector<2x256xf32>
    %435 = arith.select %18, %433, %434 : vector<2x256xi1>, vector<2x256xf32>
    %436 = vector.extract_strided_slice %414 {offsets = [14, 0], sizes = [2, 256], strides = [1, 1]} : vector<16x256xf32> to vector<2x256xf32>
    %437 = vector.extract_strided_slice %414 {offsets = [0, 0], sizes = [2, 256], strides = [1, 1]} : vector<16x256xf32> to vector<2x256xf32>
    %438 = arith.select %18, %436, %437 : vector<2x256xi1>, vector<2x256xf32>
    %cst_85 = arith.constant 0.000000e+00 : f32
    %439 = vector.broadcast %cst_85 : f32 to vector<2x64xf32>
    %cst_86 = arith.constant 0.000000e+00 : f32
    %440 = vector.broadcast %cst_86 : f32 to vector<2x64xf32>
    %cst_87 = arith.constant dense<0.000000e+00> : vector<2x256xf32>
    %441 = tpu.matmul %439, %409, %cst_87 {dimension_numbers = #tpu.dot_dimension_numbers<[1], [0], [0], [1], [0, 0, 1, 1], [], []>} : vector<2x64xf32>, vector<64x256xf32>, vector<2x256xf32> -> vector<2x256xf32>
    %442 = arith.addf %417, %441 : vector<2x256xf32>
    %443 = vector.extract_strided_slice %442 {offsets = [0, 0], sizes = [2, 192], strides = [1, 1]} : vector<2x256xf32> to vector<2x192xf32>
    %444 = arith.negf %443 : vector<2x192xf32>
    %445 = math.exp %444 : vector<2x192xf32>
    %cst_88 = arith.constant 1.000000e+00 : f32
    %446 = vector.broadcast %cst_88 : f32 to vector<2x192xf32>
    %447 = arith.addf %446, %445 : vector<2x192xf32>
    %448 = arith.divf %446, %447 : vector<2x192xf32>
    %449 = vector.extract_strided_slice %442 {offsets = [0, 192], sizes = [2, 64], strides = [1, 1]} : vector<2x256xf32> to vector<2x64xf32>
    %450 = math.tanh %449 : vector<2x64xf32>
    %451 = vector.extract_strided_slice %448 {offsets = [0, 0], sizes = [2, 64], strides = [1, 1]} : vector<2x192xf32> to vector<2x64xf32>
    %452 = vector.extract_strided_slice %448 {offsets = [0, 64], sizes = [2, 64], strides = [1, 1]} : vector<2x192xf32> to vector<2x64xf32>
    %453 = vector.extract_strided_slice %448 {offsets = [0, 128], sizes = [2, 64], strides = [1, 1]} : vector<2x192xf32> to vector<2x64xf32>
    %454 = arith.mulf %452, %440 : vector<2x64xf32>
    %455 = arith.mulf %451, %450 : vector<2x64xf32>
    %456 = arith.addf %454, %455 : vector<2x64xf32>
    %457 = math.tanh %456 : vector<2x64xf32>
    %458 = arith.mulf %453, %457 : vector<2x64xf32>
    %cst_89 = arith.constant dense<0.000000e+00> : vector<2x256xf32>
    %459 = tpu.matmul %458, %409, %cst_89 {dimension_numbers = #tpu.dot_dimension_numbers<[1], [0], [0], [1], [0, 0, 1, 1], [], []>} : vector<2x64xf32>, vector<64x256xf32>, vector<2x256xf32> -> vector<2x256xf32>
    %460 = arith.addf %420, %459 : vector<2x256xf32>
    %461 = vector.extract_strided_slice %460 {offsets = [0, 0], sizes = [2, 192], strides = [1, 1]} : vector<2x256xf32> to vector<2x192xf32>
    %462 = arith.negf %461 : vector<2x192xf32>
    %463 = math.exp %462 : vector<2x192xf32>
    %cst_90 = arith.constant 1.000000e+00 : f32
    %464 = vector.broadcast %cst_90 : f32 to vector<2x192xf32>
    %465 = arith.addf %464, %463 : vector<2x192xf32>
    %466 = arith.divf %464, %465 : vector<2x192xf32>
    %467 = vector.extract_strided_slice %460 {offsets = [0, 192], sizes = [2, 64], strides = [1, 1]} : vector<2x256xf32> to vector<2x64xf32>
    %468 = math.tanh %467 : vector<2x64xf32>
    %469 = vector.extract_strided_slice %466 {offsets = [0, 0], sizes = [2, 64], strides = [1, 1]} : vector<2x192xf32> to vector<2x64xf32>
    %470 = vector.extract_strided_slice %466 {offsets = [0, 64], sizes = [2, 64], strides = [1, 1]} : vector<2x192xf32> to vector<2x64xf32>
    %471 = vector.extract_strided_slice %466 {offsets = [0, 128], sizes = [2, 64], strides = [1, 1]} : vector<2x192xf32> to vector<2x64xf32>
    %472 = arith.mulf %470, %456 : vector<2x64xf32>
    %473 = arith.mulf %469, %468 : vector<2x64xf32>
    %474 = arith.addf %472, %473 : vector<2x64xf32>
    %475 = math.tanh %474 : vector<2x64xf32>
    %476 = arith.mulf %471, %475 : vector<2x64xf32>
    %cst_91 = arith.constant dense<0.000000e+00> : vector<2x256xf32>
    %477 = tpu.matmul %476, %409, %cst_91 {dimension_numbers = #tpu.dot_dimension_numbers<[1], [0], [0], [1], [0, 0, 1, 1], [], []>} : vector<2x64xf32>, vector<64x256xf32>, vector<2x256xf32> -> vector<2x256xf32>
    %478 = arith.addf %423, %477 : vector<2x256xf32>
    %479 = vector.extract_strided_slice %478 {offsets = [0, 0], sizes = [2, 192], strides = [1, 1]} : vector<2x256xf32> to vector<2x192xf32>
    %480 = arith.negf %479 : vector<2x192xf32>
    %481 = math.exp %480 : vector<2x192xf32>
    %cst_92 = arith.constant 1.000000e+00 : f32
    %482 = vector.broadcast %cst_92 : f32 to vector<2x192xf32>
    %483 = arith.addf %482, %481 : vector<2x192xf32>
    %484 = arith.divf %482, %483 : vector<2x192xf32>
    %485 = vector.extract_strided_slice %478 {offsets = [0, 192], sizes = [2, 64], strides = [1, 1]} : vector<2x256xf32> to vector<2x64xf32>
    %486 = math.tanh %485 : vector<2x64xf32>
    %487 = vector.extract_strided_slice %484 {offsets = [0, 0], sizes = [2, 64], strides = [1, 1]} : vector<2x192xf32> to vector<2x64xf32>
    %488 = vector.extract_strided_slice %484 {offsets = [0, 64], sizes = [2, 64], strides = [1, 1]} : vector<2x192xf32> to vector<2x64xf32>
    %489 = vector.extract_strided_slice %484 {offsets = [0, 128], sizes = [2, 64], strides = [1, 1]} : vector<2x192xf32> to vector<2x64xf32>
    %490 = arith.mulf %488, %474 : vector<2x64xf32>
    %491 = arith.mulf %487, %486 : vector<2x64xf32>
    %492 = arith.addf %490, %491 : vector<2x64xf32>
    %493 = math.tanh %492 : vector<2x64xf32>
    %494 = arith.mulf %489, %493 : vector<2x64xf32>
    %cst_93 = arith.constant dense<0.000000e+00> : vector<2x256xf32>
    %495 = tpu.matmul %494, %409, %cst_93 {dimension_numbers = #tpu.dot_dimension_numbers<[1], [0], [0], [1], [0, 0, 1, 1], [], []>} : vector<2x64xf32>, vector<64x256xf32>, vector<2x256xf32> -> vector<2x256xf32>
    %496 = arith.addf %426, %495 : vector<2x256xf32>
    %497 = vector.extract_strided_slice %496 {offsets = [0, 0], sizes = [2, 192], strides = [1, 1]} : vector<2x256xf32> to vector<2x192xf32>
    %498 = arith.negf %497 : vector<2x192xf32>
    %499 = math.exp %498 : vector<2x192xf32>
    %cst_94 = arith.constant 1.000000e+00 : f32
    %500 = vector.broadcast %cst_94 : f32 to vector<2x192xf32>
    %501 = arith.addf %500, %499 : vector<2x192xf32>
    %502 = arith.divf %500, %501 : vector<2x192xf32>
    %503 = vector.extract_strided_slice %496 {offsets = [0, 192], sizes = [2, 64], strides = [1, 1]} : vector<2x256xf32> to vector<2x64xf32>
    %504 = math.tanh %503 : vector<2x64xf32>
    %505 = vector.extract_strided_slice %502 {offsets = [0, 0], sizes = [2, 64], strides = [1, 1]} : vector<2x192xf32> to vector<2x64xf32>
    %506 = vector.extract_strided_slice %502 {offsets = [0, 64], sizes = [2, 64], strides = [1, 1]} : vector<2x192xf32> to vector<2x64xf32>
    %507 = vector.extract_strided_slice %502 {offsets = [0, 128], sizes = [2, 64], strides = [1, 1]} : vector<2x192xf32> to vector<2x64xf32>
    %508 = arith.mulf %506, %492 : vector<2x64xf32>
    %509 = arith.mulf %505, %504 : vector<2x64xf32>
    %510 = arith.addf %508, %509 : vector<2x64xf32>
    %511 = math.tanh %510 : vector<2x64xf32>
    %512 = arith.mulf %507, %511 : vector<2x64xf32>
    %cst_95 = arith.constant dense<0.000000e+00> : vector<2x256xf32>
    %513 = tpu.matmul %512, %409, %cst_95 {dimension_numbers = #tpu.dot_dimension_numbers<[1], [0], [0], [1], [0, 0, 1, 1], [], []>} : vector<2x64xf32>, vector<64x256xf32>, vector<2x256xf32> -> vector<2x256xf32>
    %514 = arith.addf %429, %513 : vector<2x256xf32>
    %515 = vector.extract_strided_slice %514 {offsets = [0, 0], sizes = [2, 192], strides = [1, 1]} : vector<2x256xf32> to vector<2x192xf32>
    %516 = arith.negf %515 : vector<2x192xf32>
    %517 = math.exp %516 : vector<2x192xf32>
    %cst_96 = arith.constant 1.000000e+00 : f32
    %518 = vector.broadcast %cst_96 : f32 to vector<2x192xf32>
    %519 = arith.addf %518, %517 : vector<2x192xf32>
    %520 = arith.divf %518, %519 : vector<2x192xf32>
    %521 = vector.extract_strided_slice %514 {offsets = [0, 192], sizes = [2, 64], strides = [1, 1]} : vector<2x256xf32> to vector<2x64xf32>
    %522 = math.tanh %521 : vector<2x64xf32>
    %523 = vector.extract_strided_slice %520 {offsets = [0, 0], sizes = [2, 64], strides = [1, 1]} : vector<2x192xf32> to vector<2x64xf32>
    %524 = vector.extract_strided_slice %520 {offsets = [0, 64], sizes = [2, 64], strides = [1, 1]} : vector<2x192xf32> to vector<2x64xf32>
    %525 = vector.extract_strided_slice %520 {offsets = [0, 128], sizes = [2, 64], strides = [1, 1]} : vector<2x192xf32> to vector<2x64xf32>
    %526 = arith.mulf %524, %510 : vector<2x64xf32>
    %527 = arith.mulf %523, %522 : vector<2x64xf32>
    %528 = arith.addf %526, %527 : vector<2x64xf32>
    %529 = math.tanh %528 : vector<2x64xf32>
    %530 = arith.mulf %525, %529 : vector<2x64xf32>
    %cst_97 = arith.constant dense<0.000000e+00> : vector<2x256xf32>
    %531 = tpu.matmul %530, %409, %cst_97 {dimension_numbers = #tpu.dot_dimension_numbers<[1], [0], [0], [1], [0, 0, 1, 1], [], []>} : vector<2x64xf32>, vector<64x256xf32>, vector<2x256xf32> -> vector<2x256xf32>
    %532 = arith.addf %432, %531 : vector<2x256xf32>
    %533 = vector.extract_strided_slice %532 {offsets = [0, 0], sizes = [2, 192], strides = [1, 1]} : vector<2x256xf32> to vector<2x192xf32>
    %534 = arith.negf %533 : vector<2x192xf32>
    %535 = math.exp %534 : vector<2x192xf32>
    %cst_98 = arith.constant 1.000000e+00 : f32
    %536 = vector.broadcast %cst_98 : f32 to vector<2x192xf32>
    %537 = arith.addf %536, %535 : vector<2x192xf32>
    %538 = arith.divf %536, %537 : vector<2x192xf32>
    %539 = vector.extract_strided_slice %532 {offsets = [0, 192], sizes = [2, 64], strides = [1, 1]} : vector<2x256xf32> to vector<2x64xf32>
    %540 = math.tanh %539 : vector<2x64xf32>
    %541 = vector.extract_strided_slice %538 {offsets = [0, 0], sizes = [2, 64], strides = [1, 1]} : vector<2x192xf32> to vector<2x64xf32>
    %542 = vector.extract_strided_slice %538 {offsets = [0, 64], sizes = [2, 64], strides = [1, 1]} : vector<2x192xf32> to vector<2x64xf32>
    %543 = vector.extract_strided_slice %538 {offsets = [0, 128], sizes = [2, 64], strides = [1, 1]} : vector<2x192xf32> to vector<2x64xf32>
    %544 = arith.mulf %542, %528 : vector<2x64xf32>
    %545 = arith.mulf %541, %540 : vector<2x64xf32>
    %546 = arith.addf %544, %545 : vector<2x64xf32>
    %547 = math.tanh %546 : vector<2x64xf32>
    %548 = arith.mulf %543, %547 : vector<2x64xf32>
    %cst_99 = arith.constant dense<0.000000e+00> : vector<2x256xf32>
    %549 = tpu.matmul %548, %409, %cst_99 {dimension_numbers = #tpu.dot_dimension_numbers<[1], [0], [0], [1], [0, 0, 1, 1], [], []>} : vector<2x64xf32>, vector<64x256xf32>, vector<2x256xf32> -> vector<2x256xf32>
    %550 = arith.addf %435, %549 : vector<2x256xf32>
    %551 = vector.extract_strided_slice %550 {offsets = [0, 0], sizes = [2, 192], strides = [1, 1]} : vector<2x256xf32> to vector<2x192xf32>
    %552 = arith.negf %551 : vector<2x192xf32>
    %553 = math.exp %552 : vector<2x192xf32>
    %cst_100 = arith.constant 1.000000e+00 : f32
    %554 = vector.broadcast %cst_100 : f32 to vector<2x192xf32>
    %555 = arith.addf %554, %553 : vector<2x192xf32>
    %556 = arith.divf %554, %555 : vector<2x192xf32>
    %557 = vector.extract_strided_slice %550 {offsets = [0, 192], sizes = [2, 64], strides = [1, 1]} : vector<2x256xf32> to vector<2x64xf32>
    %558 = math.tanh %557 : vector<2x64xf32>
    %559 = vector.extract_strided_slice %556 {offsets = [0, 0], sizes = [2, 64], strides = [1, 1]} : vector<2x192xf32> to vector<2x64xf32>
    %560 = vector.extract_strided_slice %556 {offsets = [0, 64], sizes = [2, 64], strides = [1, 1]} : vector<2x192xf32> to vector<2x64xf32>
    %561 = vector.extract_strided_slice %556 {offsets = [0, 128], sizes = [2, 64], strides = [1, 1]} : vector<2x192xf32> to vector<2x64xf32>
    %562 = arith.mulf %560, %546 : vector<2x64xf32>
    %563 = arith.mulf %559, %558 : vector<2x64xf32>
    %564 = arith.addf %562, %563 : vector<2x64xf32>
    %565 = math.tanh %564 : vector<2x64xf32>
    %566 = arith.mulf %561, %565 : vector<2x64xf32>
    %cst_101 = arith.constant dense<0.000000e+00> : vector<2x256xf32>
    %567 = tpu.matmul %566, %409, %cst_101 {dimension_numbers = #tpu.dot_dimension_numbers<[1], [0], [0], [1], [0, 0, 1, 1], [], []>} : vector<2x64xf32>, vector<64x256xf32>, vector<2x256xf32> -> vector<2x256xf32>
    %568 = arith.addf %438, %567 : vector<2x256xf32>
    %569 = vector.extract_strided_slice %568 {offsets = [0, 0], sizes = [2, 192], strides = [1, 1]} : vector<2x256xf32> to vector<2x192xf32>
    %570 = arith.negf %569 : vector<2x192xf32>
    %571 = math.exp %570 : vector<2x192xf32>
    %cst_102 = arith.constant 1.000000e+00 : f32
    %572 = vector.broadcast %cst_102 : f32 to vector<2x192xf32>
    %573 = arith.addf %572, %571 : vector<2x192xf32>
    %574 = arith.divf %572, %573 : vector<2x192xf32>
    %575 = vector.extract_strided_slice %568 {offsets = [0, 192], sizes = [2, 64], strides = [1, 1]} : vector<2x256xf32> to vector<2x64xf32>
    %576 = math.tanh %575 : vector<2x64xf32>
    %577 = vector.extract_strided_slice %574 {offsets = [0, 0], sizes = [2, 64], strides = [1, 1]} : vector<2x192xf32> to vector<2x64xf32>
    %578 = vector.extract_strided_slice %574 {offsets = [0, 64], sizes = [2, 64], strides = [1, 1]} : vector<2x192xf32> to vector<2x64xf32>
    %579 = vector.extract_strided_slice %574 {offsets = [0, 128], sizes = [2, 64], strides = [1, 1]} : vector<2x192xf32> to vector<2x64xf32>
    %580 = arith.mulf %578, %564 : vector<2x64xf32>
    %581 = arith.mulf %577, %576 : vector<2x64xf32>
    %582 = arith.addf %580, %581 : vector<2x64xf32>
    %583 = math.tanh %582 : vector<2x64xf32>
    %584 = arith.mulf %579, %583 : vector<2x64xf32>
    %585 = arith.select %21, %584, %458 : vector<2x64xi1>, vector<2x64xf32>
    %c0_103 = arith.constant 0 : index
    %c1536 = arith.constant 1536 : index
    %586 = vector.load %arg1[%c0_103, %c1536] : memref<64x1664xf32, #tpu.memory_space<vmem>>, vector<64x128xf32>
    %c0_104 = arith.constant 0 : index
    %c768_105 = arith.constant 768 : index
    %587 = vector.load %arg2[%c0_104, %c768_105] : memref<1x896xf32, #tpu.memory_space<vmem>>, vector<1x128xf32>
    %cst_106 = arith.constant dense<0.000000e+00> : vector<2x128xf32>
    %588 = tpu.matmul %585, %586, %cst_106 {dimension_numbers = #tpu.dot_dimension_numbers<[1], [0], [0], [1], [0, 0, 1, 1], [], []>} : vector<2x64xf32>, vector<64x128xf32>, vector<2x128xf32> -> vector<2x128xf32>
    %589 = vector.broadcast %587 : vector<1x128xf32> to vector<2x128xf32>
    %590 = arith.addf %588, %589 : vector<2x128xf32>
    %c0_107 = arith.constant 0 : index
    %c0_108 = arith.constant 0 : index
    %591 = vector.load %arg3[%c0_107, %c0_108] : memref<2x128xf32, #tpu.memory_space<vmem>>, vector<2x128xf32>
    tpu.vector_store %arg3[%c0_107, %c0_108], %590 {strides = array<i32>} : memref<2x128xf32, #tpu.memory_space<vmem>>, vector<2x128xf32>,
    return
  }
}

</mosaic_0001>

<llo_original>
// kernel: bilstm_forward.1
$region0: #{bilstm_forward.1}
  #allocation0 [shape = 'u32[]', space=smem, size = 0x4, offset = 0x4, fixed_abs, tag = 'smem constant byte address 0x4 - core index']
  #allocation1 [shape = 'u32[144,128]{1,0:T(1,128)}', space=vmem, size = 0x12000, scoped, tag = 'internal scratch']
  #allocation2 [shape = 'f32[16,64]{1,0:T(8,128)}', space=vmem, size = 0x2000, scoped, tag = 'scratch operand']
  #allocation3 [shape = 'f32[16,64]{1,0:T(8,128)}', space=vmem, size = 0x2000, scoped, tag = 'scratch operand']
  %s0 = inlined_call_operand.vmem [shape: f32[16,64], index: 0, kind: input, shape index: {}]
  %s1 = inlined_call_operand.hbm [shape: f32[64,1664], index: 1, kind: input, shape index: {}]
  %s2 = inlined_call_operand.vmem [shape: f32[1,896], index: 2, kind: input, shape index: {}]
  %s3 = inlined_call_operand.hbm [shape: f32[2,128], index: 3, kind: output, shape index: {}]
  %s4 = sld [smem:[#allocation0]]
  $region26: #{bilstm_forward.1} parent=0
    _
  %s6 = ssub.s32 1, %s4
  %s7 = scalar_select 0, %s6, %s4
  $region1: #{bilstm_forward.1} parent=0
    #allocation4 [shape = 'u8[425984]{0}', space=vmem, size = 0x68000, scoped, tag = 'input window, operand 1, single buffered']
    #allocation5 [shape = 's32[1]{0}', space=sflag, size = 0x4, scoped, tag = 'scoped memory for bilstm_forward.1']
    #allocation6 [shape = 's32[1]{0}', space=sflag, size = 0x4, scoped, tag = 'scoped memory for bilstm_forward.1']
    #allocation7 [shape = 'u8[1024]{0}', space=vmem, size = 0x400, scoped, tag = 'output window, operand 0, single buffered']
    %8 = vsyncpa [#allocation5], 0
    %9 = vsyncpa [#allocation6], 0
    // Predicated region
    $region2: #{bilstm_forward.1} parent=1 // pred_check
      _
    $region3: #{bilstm_forward.1} parent=1 // pred_check_branch
      %11 = sbr.rel (0) target = $region5
    $region4: #{bilstm_forward.1} parent=1 // pred_region
      _
    $region5: #{bilstm_forward.1} parent=1 // pred_fallthru
      _
    // Predicated region
    $region6: #{bilstm_forward.1} parent=1 // pred_check
      _
    $region7: #{bilstm_forward.1} parent=1 // pred_check_branch
      %13 = sbr.rel (0) target = $region9
    $region8: #{bilstm_forward.1} parent=1 // pred_region
      %s15 = ssub.s32 13312, 13312
      %16 = vsyncadd [#allocation5], %s15
      %s17 = sshll.u32 [#allocation4], 4
      %s18 = int_to_ptr.vmem [resolvable:$true] %s17
      %23 = dma.hbm_to_vmem [thread:$0]  %s1, 13312, %s18, [#allocation5], 1664, 1664, 104
    $region9: #{bilstm_forward.1} parent=1 // pred_fallthru
      _
    // Predicated region
    $region10: #{bilstm_forward.1} parent=1 // pred_check
      _
    $region11: #{bilstm_forward.1} parent=1 // pred_check_branch
      %25 = sbr.rel (0) target = $region13
    $region12: #{bilstm_forward.1} parent=1 // pred_region
      _
    $region13: #{bilstm_forward.1} parent=1 // pred_fallthru
      _
    // Predicated region
    $region14: #{bilstm_forward.1} parent=1 // pred_check
      _
    $region15: #{bilstm_forward.1} parent=1 // pred_check_branch
      %27 = sbr.rel (0) target = $region17
    $region16: #{bilstm_forward.1} parent=1 // pred_region
      %28 = dma.done [#allocation5], 13312
    $region17: #{bilstm_forward.1} parent=1 // pred_fallthru
      _
    %v29 = vlaneseq
    %v30 = vand.u32 %v29, 127
    %v31 = vadd.s32 %v30, 128
    %vm32 = vcmp.lt.s32.totalorder %v30, 0
    %v33 = vsub.s32 0, %v30
    %v34 = vsel %vm32, %v33, %v30
    %v35 = vshrl.u32 %v34, 6
    %v36 = vand.u32 %v34, 63
    %v37 = vsub.s32 0, %v36
    %v38 = vsel %vm32, %v37, %v36
    %vm39 = vcmp.lt.s32.totalorder %v31, 0
    %v40 = vsub.s32 0, %v31
    %v41 = vsel %vm39, %v40, %v31
    %v42 = vshrl.u32 %v41, 6
    %v43 = vand.u32 %v41, 63
    %v44 = vsub.s32 0, %v43
    %v45 = vsel %vm39, %v44, %v43
    %vm46 = vcmp.ne.s32.totalorder %v38, 0
    %vm47 = vcmp.ne.s32.totalorder %v45, 0
    %vm48 = vcmp.lt.s32.totalorder %v38, 0
    %vm49 = vcmp.lt.s32.totalorder %v45, 0
    %vm50 = vmand %vm48, %vm46
    %vm51 = vmand %vm49, %vm47
    %v52 = vadd.s32 %v38, 64
    %v53 = vadd.s32 %v45, 64
    %v54 = vsel %vm50, %v52, %v38
    %v55 = vsel %vm51, %v53, %v45
    %vm56 = vcmp.lt.s32.totalorder %v54, 32
    %vm57 = vcmp.lt.s32.totalorder %v55, 32
    %vm58 = vcmp.lt.s32.totalorder %v30, 32
    %v59 = vld [vmem:[#allocation4] sm:$0xff]
    %v60 = vld [vmem:[#allocation4 + $0x8] sm:$0xff]
    %v61 = vld [vmem:[#allocation4 + $0x68] sm:$0xff]
    %v62 = vld [vmem:[#allocation4 + $0x70] sm:$0xff]
    %v63 = vld [vmem:[#allocation4 + $0xd0] sm:$0xff]
    %v64 = vld [vmem:[#allocation4 + $0xd8] sm:$0xff]
    %v65 = vld [vmem:[#allocation4 + $0x138] sm:$0xff]
    %v66 = vld [vmem:[#allocation4 + $0x140] sm:$0xff]
    %v67 = vld [vmem:[#allocation4 + $0x1a0] sm:$0xff]
    %v68 = vld [vmem:[#allocation4 + $0x1a8] sm:$0xff]
    %v69 = vld [vmem:[#allocation4 + $0x208] sm:$0xff]
    %v70 = vld [vmem:[#allocation4 + $0x210] sm:$0xff]
    %v71 = vld [vmem:[#allocation4 + $0x270] sm:$0xff]
    %v72 = vld [vmem:[#allocation4 + $0x278] sm:$0xff]
    %v73 = vld [vmem:[#allocation4 + $0x2d8] sm:$0xff]
    %v74 = vld [vmem:[#allocation4 + $0x2e0] sm:$0xff]
    %v75 = vld [vmem:[#allocation4 + $0x30] sm:$0xff]
    %v76 = vld [vmem:[#allocation4 + $0x38] sm:$0xff]
    %v77 = vld [vmem:[#allocation4 + $0x98] sm:$0xff]
    %v78 = vld [vmem:[#allocation4 + $0xa0] sm:$0xff]
    %v79 = vld [vmem:[#allocation4 + $0x100] sm:$0xff]
    %v80 = vld [vmem:[#allocation4 + $0x108] sm:$0xff]
    %v81 = vld [vmem:[#allocation4 + $0x168] sm:$0xff]
    %v82 = vld [vmem:[#allocation4 + $0x170] sm:$0xff]
    %v83 = vld [vmem:[#allocation4 + $0x1d0] sm:$0xff]
    %v84 = vld [vmem:[#allocation4 + $0x1d8] sm:$0xff]
    %v85 = vld [vmem:[#allocation4 + $0x238] sm:$0xff]
    %v86 = vld [vmem:[#allocation4 + $0x240] sm:$0xff]
    %v87 = vld [vmem:[#allocation4 + $0x2a0] sm:$0xff]
    %v88 = vld [vmem:[#allocation4 + $0x2a8] sm:$0xff]
    %v89 = vld [vmem:[#allocation4 + $0x308] sm:$0xff]
    %v90 = vld [vmem:[#allocation4 + $0x310] sm:$0xff]
    %v91 = vld [vmem:[%s2] sm:$0x3]
    %v92 = vld [vmem:[%s0] sm:$0xff]
    %v93 = vld [vmem:[%s0 + $0x8] sm:$0xff]
    %v95 = vlaneseq
    %v96 = vshrl.u32 %v95, 7
    %v97 = vsub.s32 0, %v96
    %v98 = vrot.slane %v91, %v97
    %v99 = vlaneseq
    %v100 = vshrl.u32 %v99, 7
    %v101 = vsub.s32 1, %v100
    %v102 = vrot.slane %v91, %v101
    %vm105 = vcmask 523264
    %v107 = vsel %vm105, %v92, 0
    %v110 = vsel %vm105, %v93, 0
    %112 = vmatprep.subr.mxu0 %v60
    %113 = vmatpush1.msra.mxu0 %v59
    %114 = vmatprep.subr.mxu0 %v62
    %115 = vmatpush1.msra.mxu0 %v61
    %116 = vmatprep.subr.mxu0 %v64
    %117 = vmatpush1.msra.mxu0 %v63
    %118 = vmatprep.subr.mxu0 %v66
    %119 = vmatpush1.msra.mxu0 %v65
    %120 = vmatprep.subr.mxu0 %v68
    %121 = vmatpush1.msra.mxu0 %v67
    %122 = vmatprep.subr.mxu0 %v70
    %123 = vmatpush1.msra.mxu0 %v69
    %124 = vmatprep.subr.mxu0 %v72
    %125 = vmatpush1.msra.mxu0 %v71
    %126 = vmatprep.subr.mxu0 %v74
    %127 = vmatpush1.msra.mxu0 %v73
    %128 = vmatprep.subr.mxu0 0.0
    %129 = vmatpush1.msra.mxu0 0.0
    %130 = vmatprep.subr.mxu0 0.0
    %131 = vmatpush1.msra.mxu0 0.0
    %132 = vmatprep.subr.mxu0 0.0
    %133 = vmatpush1.msra.mxu0 0.0
    %134 = vmatprep.subr.mxu0 0.0
    %135 = vmatpush1.msra.mxu0 0.0
    %136 = vmatprep.subr.mxu0 0.0
    %137 = vmatpush1.msra.mxu0 0.0
    %138 = vmatprep.subr.mxu0 0.0
    %139 = vmatpush1.msra.mxu0 0.0
    %140 = vmatprep.subr.mxu0 0.0
    %141 = vmatpush1.msra.mxu0 0.0
    %142 = vmatprep.subr.mxu0 0.0
    %143 = vmatpush1.msra.mxu0 0.0
    %144 = vmatprep.subr.mxu0 0.0
    %145 = vmatpush1.msra.mxu0 0.0
    %146 = vmatprep.subr.mxu0 0.0
    %147 = vmatpush1.msra.mxu0 0.0
    %148 = vmatprep.subr.mxu0 0.0
    %149 = vmatpush1.msra.mxu0 0.0
    %150 = vmatprep.subr.mxu0 0.0
    %151 = vmatpush1.msra.mxu0 0.0
    %152 = vmatprep.subr.mxu0 0.0
    %153 = vmatpush1.msra.mxu0 0.0
    %154 = vmatprep.subr.mxu0 0.0
    %155 = vmatpush1.msra.mxu0 0.0
    %156 = vmatprep.subr.mxu0 0.0
    %157 = vmatpush1.msra.mxu0 0.0
    %158 = vmatprep.subr.mxu0 0.0
    %159 = vmatpush1.msra.mxu0 0.0
    %160 = vmatprep.subr.mxu0 0.0
    %161 = vmatpush1.msra.mxu0 0.0
    %162 = vmatprep.subr.mxu0 0.0
    %163 = vmatpush1.msra.mxu0 0.0
    %164 = vmatprep.subr.mxu0 0.0
    %165 = vmatpush1.msra.mxu0 0.0
    %166 = vmatprep.subr.mxu0 0.0
    %167 = vmatpush1.msra.mxu0 0.0
    %168 = vmatprep.subr.mxu0 0.0
    %169 = vmatpush1.msra.mxu0 0.0
    %170 = vmatprep.subr.mxu0 0.0
    %171 = vmatpush1.msra.mxu0 0.0
    %172 = vmatprep.subr.mxu0 0.0
    %173 = vmatpush1.msra.mxu0 0.0
    %174 = vmatprep.subr.mxu0 0.0
    %175 = vmatpush1.msra.mxu0 0.0
    %176 = vmatprep.mubr.f32.mxu0 0.0
    %177 = vmatmul.mubr.f32.gmra.mrb[0].mxu0 %v107
    %v178 = vpop.f32.mrb[0].mxu0
    %v179 = vadd.f32 %v98, %v178
    %v180 = vpop.f32.mrb[0].mxu0
    %v181 = vadd.f32 %v102, %v180
    %182 = vmatprep.mubr.f32.mxu0 0.0
    %183 = vmatmul.mubr.f32.gmra.mrb[0].mxu0 %v110
    %v184 = vpop.f32.mrb[0].mxu0
    %v185 = vadd.f32 %v98, %v184
    %v186 = vpop.f32.mrb[0].mxu0
    %v187 = vadd.f32 %v102, %v186
    %188 = vdwg.mxu0
    %v191 = vrot.slane %v185, 6
    %v192 = vrot.slane %v187, 6
    %v195 = vsel %vm56, %v179, %v191
    %v196 = vsel %vm57, %v181, %v192
    %v197 = vrot.slane %v185, 2
    %v198 = vrot.slane %v187, 2
    %v201 = vsel %vm56, %v179, %v197
    %v202 = vsel %vm57, %v181, %v198
    %v205 = vrot.slane %v179, 6
    %v206 = vrot.slane %v181, 6
    %v209 = vsel %vm56, %v185, %v205
    %v210 = vsel %vm57, %v187, %v206
    %v211 = vrot.slane %v179, 2
    %v212 = vrot.slane %v181, 2
    %v215 = vsel %vm56, %v185, %v211
    %v216 = vsel %vm57, %v187, %v212
    %v218 = vsel %vm105, 0.0, 0
    %220 = vmatprep.subr.mxu0 %v76
    %221 = vmatpush1.msra.mxu0 %v75
    %222 = vmatprep.subr.mxu0 %v78
    %223 = vmatpush1.msra.mxu0 %v77
    %224 = vmatprep.subr.mxu0 %v80
    %225 = vmatpush1.msra.mxu0 %v79
    %226 = vmatprep.subr.mxu0 %v82
    %227 = vmatpush1.msra.mxu0 %v81
    %228 = vmatprep.subr.mxu0 %v84
    %229 = vmatpush1.msra.mxu0 %v83
    %230 = vmatprep.subr.mxu0 %v86
    %231 = vmatpush1.msra.mxu0 %v85
    %232 = vmatprep.subr.mxu0 %v88
    %233 = vmatpush1.msra.mxu0 %v87
    %234 = vmatprep.subr.mxu0 %v90
    %235 = vmatpush1.msra.mxu0 %v89
    %236 = vmatprep.subr.mxu0 0.0
    %237 = vmatpush1.msra.mxu0 0.0
    %238 = vmatprep.subr.mxu0 0.0
    %239 = vmatpush1.msra.mxu0 0.0
    %240 = vmatprep.subr.mxu0 0.0
    %241 = vmatpush1.msra.mxu0 0.0
    %242 = vmatprep.subr.mxu0 0.0
    %243 = vmatpush1.msra.mxu0 0.0
    %244 = vmatprep.subr.mxu0 0.0
    %245 = vmatpush1.msra.mxu0 0.0
    %246 = vmatprep.subr.mxu0 0.0
    %247 = vmatpush1.msra.mxu0 0.0
    %248 = vmatprep.subr.mxu0 0.0
    %249 = vmatpush1.msra.mxu0 0.0
    %250 = vmatprep.subr.mxu0 0.0
    %251 = vmatpush1.msra.mxu0 0.0
    %252 = vmatprep.subr.mxu0 0.0
    %253 = vmatpush1.msra.mxu0 0.0
    %254 = vmatprep.subr.mxu0 0.0
    %255 = vmatpush1.msra.mxu0 0.0
    %256 = vmatprep.subr.mxu0 0.0
    %257 = vmatpush1.msra.mxu0 0.0
    %258 = vmatprep.subr.mxu0 0.0
    %259 = vmatpush1.msra.mxu0 0.0
    %260 = vmatprep.subr.mxu0 0.0
    %261 = vmatpush1.msra.mxu0 0.0
    %262 = vmatprep.subr.mxu0 0.0
    %263 = vmatpush1.msra.mxu0 0.0
    %264 = vmatprep.subr.mxu0 0.0
    %265 = vmatpush1.msra.mxu0 0.0
    %266 = vmatprep.subr.mxu0 0.0
    %267 = vmatpush1.msra.mxu0 0.0
    %268 = vmatprep.subr.mxu0 0.0
    %269 = vmatpush1.msra.mxu0 0.0
    %270 = vmatprep.subr.mxu0 0.0
    %271 = vmatpush1.msra.mxu0 0.0
    %272 = vmatprep.subr.mxu0 0.0
    %273 = vmatpush1.msra.mxu0 0.0
    %274 = vmatprep.subr.mxu0 0.0
    %275 = vmatpush1.msra.mxu0 0.0
    %276 = vmatprep.subr.mxu0 0.0
    %277 = vmatpush1.msra.mxu0 0.0
    %278 = vmatprep.subr.mxu0 0.0
    %279 = vmatpush1.msra.mxu0 0.0
    %280 = vmatprep.subr.mxu0 0.0
    %281 = vmatpush1.msra.mxu0 0.0
    %282 = vmatprep.subr.mxu0 0.0
    %283 = vmatpush1.msra.mxu0 0.0
    %284 = vmatprep.mubr.f32.mxu0 0.0
    %285 = vmatmul.mubr.f32.gmra.mrb[0].mxu0 %v218
    %v286 = vpop.f32.mrb[0].mxu0
    %v287 = vadd.f32 0.0, %v286
    %v288 = vpop.f32.mrb[0].mxu0
    %v289 = vadd.f32 0.0, %v288
    %290 = vdwg.mxu0
    %v291 = vadd.f32 %v195, %v287
    %v292 = vadd.f32 %v196, %v289
    %v293 = vxor.u32 %v291, 2147483648
    %v294 = vxor.u32 %v292, 2147483648
    %v295 = vmul.f32 %v293, 1.442695
    %v296 = vpow.pop %v295
    %v297 = vmul.f32 %v294, 1.442695
    %v298 = vpow.pop %v297
    %v299 = vadd.f32 %v296, 1.0
    %v300 = vadd.f32 %v298, 1.0
    %v301 = vrcp.pop %v299
    %v302 = vmul.f32 1.0, %v301
    %v303 = vrcp.pop %v300
    %v304 = vmul.f32 1.0, %v303
    %v305 = vtanh.pop %v292
    %v306 = vmul.f32 %v302, 0.0
    %308 = vrot.lane.b32.xlu0 %v305, 64
    %v309 = vpop.permute.xlu0 %308
    %v311 = vmul.f32 %v302, %v309
    %313 = vrot.lane.b32.xlu0 %v311, 64
    %v314 = vpop.permute.xlu0 %313
    %v316 = vadd.f32 %v306, %v314
    %v317 = vtanh.pop %v316
    %319 = vrot.lane.b32.xlu0 %v317, 64
    %v320 = vpop.permute.xlu0 %319
    %v322 = vmul.f32 %v304, %v320
    %v324 = vsel %vm105, %v322, 0
    %326 = vmatprep.subr.mxu0 %v76
    %327 = vmatpush1.msra.mxu0 %v75
    %328 = vmatprep.subr.mxu0 %v78
    %329 = vmatpush1.msra.mxu0 %v77
    %330 = vmatprep.subr.mxu0 %v80
    %331 = vmatpush1.msra.mxu0 %v79
    %332 = vmatprep.subr.mxu0 %v82
    %333 = vmatpush1.msra.mxu0 %v81
    %334 = vmatprep.subr.mxu0 %v84
    %335 = vmatpush1.msra.mxu0 %v83
    %336 = vmatprep.subr.mxu0 %v86
    %337 = vmatpush1.msra.mxu0 %v85
    %338 = vmatprep.subr.mxu0 %v88
    %339 = vmatpush1.msra.mxu0 %v87
    %340 = vmatprep.subr.mxu0 %v90
    %341 = vmatpush1.msra.mxu0 %v89
    %342 = vmatprep.subr.mxu0 0.0
    %343 = vmatpush1.msra.mxu0 0.0
    %344 = vmatprep.subr.mxu0 0.0
    %345 = vmatpush1.msra.mxu0 0.0
    %346 = vmatprep.subr.mxu0 0.0
    %347 = vmatpush1.msra.mxu0 0.0
    %348 = vmatprep.subr.mxu0 0.0
    %349 = vmatpush1.msra.mxu0 0.0
    %350 = vmatprep.subr.mxu0 0.0
    %351 = vmatpush1.msra.mxu0 0.0
    %352 = vmatprep.subr.mxu0 0.0
    %353 = vmatpush1.msra.mxu0 0.0
    %354 = vmatprep.subr.mxu0 0.0
    %355 = vmatpush1.msra.mxu0 0.0
    %356 = vmatprep.subr.mxu0 0.0
    %357 = vmatpush1.msra.mxu0 0.0
    %358 = vmatprep.subr.mxu0 0.0
    %359 = vmatpush1.msra.mxu0 0.0
    %360 = vmatprep.subr.mxu0 0.0
    %361 = vmatpush1.msra.mxu0 0.0
    %362 = vmatprep.subr.mxu0 0.0
    %363 = vmatpush1.msra.mxu0 0.0
    %364 = vmatprep.subr.mxu0 0.0
    %365 = vmatpush1.msra.mxu0 0.0
    %366 = vmatprep.subr.mxu0 0.0
    %367 = vmatpush1.msra.mxu0 0.0
    %368 = vmatprep.subr.mxu0 0.0
    %369 = vmatpush1.msra.mxu0 0.0
    %370 = vmatprep.subr.mxu0 0.0
    %371 = vmatpush1.msra.mxu0 0.0
    %372 = vmatprep.subr.mxu0 0.0
    %373 = vmatpush1.msra.mxu0 0.0
    %374 = vmatprep.subr.mxu0 0.0
    %375 = vmatpush1.msra.mxu0 0.0
    %376 = vmatprep.subr.mxu0 0.0
    %377 = vmatpush1.msra.mxu0 0.0
    %378 = vmatprep.subr.mxu0 0.0
    %379 = vmatpush1.msra.mxu0 0.0
    %380 = vmatprep.subr.mxu0 0.0
    %381 = vmatpush1.msra.mxu0 0.0
    %382 = vmatprep.subr.mxu0 0.0
    %383 = vmatpush1.msra.mxu0 0.0
    %384 = vmatprep.subr.mxu0 0.0
    %385 = vmatpush1.msra.mxu0 0.0
    %386 = vmatprep.subr.mxu0 0.0
    %387 = vmatpush1.msra.mxu0 0.0
    %388 = vmatprep.subr.mxu0 0.0
    %389 = vmatpush1.msra.mxu0 0.0
    %390 = vmatprep.mubr.f32.mxu0 0.0
    %391 = vmatmul.mubr.f32.gmra.mrb[0].mxu0 %v324
    %v392 = vpop.f32.mrb[0].mxu0
    %v393 = vadd.f32 0.0, %v392
    %v394 = vpop.f32.mrb[0].mxu0
    %v395 = vadd.f32 0.0, %v394
    %396 = vdwg.mxu0
    %v399 = vrot.slane %v393, 6
    %v400 = vrot.slane %v395, 6
    %v403 = vadd.f32 %v201, %v399
    %v404 = vadd.f32 %v202, %v400
    %v405 = vxor.u32 %v403, 2147483648
    %v406 = vxor.u32 %v404, 2147483648
    %v407 = vmul.f32 %v405, 1.442695
    %v408 = vpow.pop %v407
    %v409 = vmul.f32 %v406, 1.442695
    %v410 = vpow.pop %v409
    %v411 = vadd.f32 %v408, 1.0
    %v412 = vadd.f32 %v410, 1.0
    %v413 = vrcp.pop %v411
    %v414 = vmul.f32 1.0, %v413
    %v415 = vrcp.pop %v412
    %v416 = vmul.f32 1.0, %v415
    %v417 = vtanh.pop %v404
    %v419 = vrot.slane %v316, 6
    %v421 = vmul.f32 %v414, %v419
    %423 = vrot.lane.b32.xlu0 %v417, 64
    %v424 = vpop.permute.xlu0 %423
    %v426 = vmul.f32 %v414, %v424
    %428 = vrot.lane.b32.xlu0 %v426, 64
    %v429 = vpop.permute.xlu0 %428
    %v431 = vadd.f32 %v421, %v429
    %v432 = vtanh.pop %v431
    %434 = vrot.lane.b32.xlu0 %v432, 64
    %v435 = vpop.permute.xlu0 %434
    %v437 = vmul.f32 %v416, %v435
    %v439 = vrot.slane %v437, 2
    %v440 = vsel %vm105, %v439, 0
    %442 = vmatprep.subr.mxu0 %v76
    %443 = vmatpush1.msra.mxu0 %v75
    %444 = vmatprep.subr.mxu0 %v78
    %445 = vmatpush1.msra.mxu0 %v77
    %446 = vmatprep.subr.mxu0 %v80
    %447 = vmatpush1.msra.mxu0 %v79
    %448 = vmatprep.subr.mxu0 %v82
    %449 = vmatpush1.msra.mxu0 %v81
    %450 = vmatprep.subr.mxu0 %v84
    %451 = vmatpush1.msra.mxu0 %v83
    %452 = vmatprep.subr.mxu0 %v86
    %453 = vmatpush1.msra.mxu0 %v85
    %454 = vmatprep.subr.mxu0 %v88
    %455 = vmatpush1.msra.mxu0 %v87
    %456 = vmatprep.subr.mxu0 %v90
    %457 = vmatpush1.msra.mxu0 %v89
    %458 = vmatprep.subr.mxu0 0.0
    %459 = vmatpush1.msra.mxu0 0.0
    %460 = vmatprep.subr.mxu0 0.0
    %461 = vmatpush1.msra.mxu0 0.0
    %462 = vmatprep.subr.mxu0 0.0
    %463 = vmatpush1.msra.mxu0 0.0
    %464 = vmatprep.subr.mxu0 0.0
    %465 = vmatpush1.msra.mxu0 0.0
    %466 = vmatprep.subr.mxu0 0.0
    %467 = vmatpush1.msra.mxu0 0.0
    %468 = vmatprep.subr.mxu0 0.0
    %469 = vmatpush1.msra.mxu0 0.0
    %470 = vmatprep.subr.mxu0 0.0
    %471 = vmatpush1.msra.mxu0 0.0
    %472 = vmatprep.subr.mxu0 0.0
    %473 = vmatpush1.msra.mxu0 0.0
    %474 = vmatprep.subr.mxu0 0.0
    %475 = vmatpush1.msra.mxu0 0.0
    %476 = vmatprep.subr.mxu0 0.0
    %477 = vmatpush1.msra.mxu0 0.0
    %478 = vmatprep.subr.mxu0 0.0
    %479 = vmatpush1.msra.mxu0 0.0
    %480 = vmatprep.subr.mxu0 0.0
    %481 = vmatpush1.msra.mxu0 0.0
    %482 = vmatprep.subr.mxu0 0.0
    %483 = vmatpush1.msra.mxu0 0.0
    %484 = vmatprep.subr.mxu0 0.0
    %485 = vmatpush1.msra.mxu0 0.0
    %486 = vmatprep.subr.mxu0 0.0
    %487 = vmatpush1.msra.mxu0 0.0
    %488 = vmatprep.subr.mxu0 0.0
    %489 = vmatpush1.msra.mxu0 0.0
    %490 = vmatprep.subr.mxu0 0.0
    %491 = vmatpush1.msra.mxu0 0.0
    %492 = vmatprep.subr.mxu0 0.0
    %493 = vmatpush1.msra.mxu0 0.0
    %494 = vmatprep.subr.mxu0 0.0
    %495 = vmatpush1.msra.mxu0 0.0
    %496 = vmatprep.subr.mxu0 0.0
    %497 = vmatpush1.msra.mxu0 0.0
    %498 = vmatprep.subr.mxu0 0.0
    %499 = vmatpush1.msra.mxu0 0.0
    %500 = vmatprep.subr.mxu0 0.0
    %501 = vmatpush1.msra.mxu0 0.0
    %502 = vmatprep.subr.mxu0 0.0
    %503 = vmatpush1.msra.mxu0 0.0
    %504 = vmatprep.subr.mxu0 0.0
    %505 = vmatpush1.msra.mxu0 0.0
    %506 = vmatprep.mubr.f32.mxu0 0.0
    %507 = vmatmul.mubr.f32.gmra.mrb[0].mxu0 %v440
    %v508 = vpop.f32.mrb[0].mxu0
    %v509 = vadd.f32 0.0, %v508
    %v510 = vpop.f32.mrb[0].mxu0
    %v511 = vadd.f32 0.0, %v510
    %512 = vdwg.mxu0
    %v515 = vrot.slane %v509, 4
    %v516 = vrot.slane %v511, 4
    %v519 = vadd.f32 %v195, %v515
    %v520 = vadd.f32 %v196, %v516
    %v521 = vxor.u32 %v519, 2147483648
    %v522 = vxor.u32 %v520, 2147483648
    %v523 = vmul.f32 %v521, 1.442695
    %v524 = vpow.pop %v523
    %v525 = vmul.f32 %v522, 1.442695
    %v526 = vpow.pop %v525
    %v527 = vadd.f32 %v524, 1.0
    %v528 = vadd.f32 %v526, 1.0
    %v529 = vrcp.pop %v527
    %v530 = vmul.f32 1.0, %v529
    %v531 = vrcp.pop %v528
    %v532 = vmul.f32 1.0, %v531
    %v533 = vtanh.pop %v520
    %v535 = vrot.slane %v431, 6
    %v537 = vmul.f32 %v530, %v535
    %539 = vrot.lane.b32.xlu0 %v533, 64
    %v540 = vpop.permute.xlu0 %539
    %v542 = vmul.f32 %v530, %v540
    %544 = vrot.lane.b32.xlu0 %v542, 64
    %v545 = vpop.permute.xlu0 %544
    %v547 = vadd.f32 %v537, %v545
    %v548 = vtanh.pop %v547
    %550 = vrot.lane.b32.xlu0 %v548, 64
    %v551 = vpop.permute.xlu0 %550
    %v553 = vmul.f32 %v532, %v551
    %v555 = vrot.slane %v553, 4
    %v556 = vsel %vm105, %v555, 0
    %558 = vmatprep.subr.mxu0 %v76
    %559 = vmatpush1.msra.mxu0 %v75
    %560 = vmatprep.subr.mxu0 %v78
    %561 = vmatpush1.msra.mxu0 %v77
    %562 = vmatprep.subr.mxu0 %v80
    %563 = vmatpush1.msra.mxu0 %v79
    %564 = vmatprep.subr.mxu0 %v82
    %565 = vmatpush1.msra.mxu0 %v81
    %566 = vmatprep.subr.mxu0 %v84
    %567 = vmatpush1.msra.mxu0 %v83
    %568 = vmatprep.subr.mxu0 %v86
    %569 = vmatpush1.msra.mxu0 %v85
    %570 = vmatprep.subr.mxu0 %v88
    %571 = vmatpush1.msra.mxu0 %v87
    %572 = vmatprep.subr.mxu0 %v90
    %573 = vmatpush1.msra.mxu0 %v89
    %574 = vmatprep.subr.mxu0 0.0
    %575 = vmatpush1.msra.mxu0 0.0
    %576 = vmatprep.subr.mxu0 0.0
    %577 = vmatpush1.msra.mxu0 0.0
    %578 = vmatprep.subr.mxu0 0.0
    %579 = vmatpush1.msra.mxu0 0.0
    %580 = vmatprep.subr.mxu0 0.0
    %581 = vmatpush1.msra.mxu0 0.0
    %582 = vmatprep.subr.mxu0 0.0
    %583 = vmatpush1.msra.mxu0 0.0
    %584 = vmatprep.subr.mxu0 0.0
    %585 = vmatpush1.msra.mxu0 0.0
    %586 = vmatprep.subr.mxu0 0.0
    %587 = vmatpush1.msra.mxu0 0.0
    %588 = vmatprep.subr.mxu0 0.0
    %589 = vmatpush1.msra.mxu0 0.0
    %590 = vmatprep.subr.mxu0 0.0
    %591 = vmatpush1.msra.mxu0 0.0
    %592 = vmatprep.subr.mxu0 0.0
    %593 = vmatpush1.msra.mxu0 0.0
    %594 = vmatprep.subr.mxu0 0.0
    %595 = vmatpush1.msra.mxu0 0.0
    %596 = vmatprep.subr.mxu0 0.0
    %597 = vmatpush1.msra.mxu0 0.0
    %598 = vmatprep.subr.mxu0 0.0
    %599 = vmatpush1.msra.mxu0 0.0
    %600 = vmatprep.subr.mxu0 0.0
    %601 = vmatpush1.msra.mxu0 0.0
    %602 = vmatprep.subr.mxu0 0.0
    %603 = vmatpush1.msra.mxu0 0.0
    %604 = vmatprep.subr.mxu0 0.0
    %605 = vmatpush1.msra.mxu0 0.0
    %606 = vmatprep.subr.mxu0 0.0
    %607 = vmatpush1.msra.mxu0 0.0
    %608 = vmatprep.subr.mxu0 0.0
    %609 = vmatpush1.msra.mxu0 0.0
    %610 = vmatprep.subr.mxu0 0.0
    %611 = vmatpush1.msra.mxu0 0.0
    %612 = vmatprep.subr.mxu0 0.0
    %613 = vmatpush1.msra.mxu0 0.0
    %614 = vmatprep.subr.mxu0 0.0
    %615 = vmatpush1.msra.mxu0 0.0
    %616 = vmatprep.subr.mxu0 0.0
    %617 = vmatpush1.msra.mxu0 0.0
    %618 = vmatprep.subr.mxu0 0.0
    %619 = vmatpush1.msra.mxu0 0.0
    %620 = vmatprep.subr.mxu0 0.0
    %621 = vmatpush1.msra.mxu0 0.0
    %622 = vmatprep.mubr.f32.mxu0 0.0
    %623 = vmatmul.mubr.f32.gmra.mrb[0].mxu0 %v556
    %v624 = vpop.f32.mrb[0].mxu0
    %v625 = vadd.f32 0.0, %v624
    %v626 = vpop.f32.mrb[0].mxu0
    %v627 = vadd.f32 0.0, %v626
    %628 = vdwg.mxu0
    %v631 = vrot.slane %v625, 2
    %v632 = vrot.slane %v627, 2
    %v635 = vadd.f32 %v201, %v631
    %v636 = vadd.f32 %v202, %v632
    %v637 = vxor.u32 %v635, 2147483648
    %v638 = vxor.u32 %v636, 2147483648
    %v639 = vmul.f32 %v637, 1.442695
    %v640 = vpow.pop %v639
    %v641 = vmul.f32 %v638, 1.442695
    %v642 = vpow.pop %v641
    %v643 = vadd.f32 %v640, 1.0
    %v644 = vadd.f32 %v642, 1.0
    %v645 = vrcp.pop %v643
    %v646 = vmul.f32 1.0, %v645
    %v647 = vrcp.pop %v644
    %v648 = vmul.f32 1.0, %v647
    %v649 = vtanh.pop %v636
    %v651 = vrot.slane %v547, 6
    %v653 = vmul.f32 %v646, %v651
    %655 = vrot.lane.b32.xlu0 %v649, 64
    %v656 = vpop.permute.xlu0 %655
    %v658 = vmul.f32 %v646, %v656
    %660 = vrot.lane.b32.xlu0 %v658, 64
    %v661 = vpop.permute.xlu0 %660
    %v663 = vadd.f32 %v653, %v661
    %v664 = vtanh.pop %v663
    %666 = vrot.lane.b32.xlu0 %v664, 64
    %v667 = vpop.permute.xlu0 %666
    %v669 = vmul.f32 %v648, %v667
    %v671 = vrot.slane %v669, 6
    %v672 = vsel %vm105, %v671, 0
    %674 = vmatprep.subr.mxu0 %v76
    %675 = vmatpush1.msra.mxu0 %v75
    %676 = vmatprep.subr.mxu0 %v78
    %677 = vmatpush1.msra.mxu0 %v77
    %678 = vmatprep.subr.mxu0 %v80
    %679 = vmatpush1.msra.mxu0 %v79
    %680 = vmatprep.subr.mxu0 %v82
    %681 = vmatpush1.msra.mxu0 %v81
    %682 = vmatprep.subr.mxu0 %v84
    %683 = vmatpush1.msra.mxu0 %v83
    %684 = vmatprep.subr.mxu0 %v86
    %685 = vmatpush1.msra.mxu0 %v85
    %686 = vmatprep.subr.mxu0 %v88
    %687 = vmatpush1.msra.mxu0 %v87
    %688 = vmatprep.subr.mxu0 %v90
    %689 = vmatpush1.msra.mxu0 %v89
    %690 = vmatprep.subr.mxu0 0.0
    %691 = vmatpush1.msra.mxu0 0.0
    %692 = vmatprep.subr.mxu0 0.0
    %693 = vmatpush1.msra.mxu0 0.0
    %694 = vmatprep.subr.mxu0 0.0
    %695 = vmatpush1.msra.mxu0 0.0
    %696 = vmatprep.subr.mxu0 0.0
    %697 = vmatpush1.msra.mxu0 0.0
    %698 = vmatprep.subr.mxu0 0.0
    %699 = vmatpush1.msra.mxu0 0.0
    %700 = vmatprep.subr.mxu0 0.0
    %701 = vmatpush1.msra.mxu0 0.0
    %702 = vmatprep.subr.mxu0 0.0
    %703 = vmatpush1.msra.mxu0 0.0
    %704 = vmatprep.subr.mxu0 0.0
    %705 = vmatpush1.msra.mxu0 0.0
    %706 = vmatprep.subr.mxu0 0.0
    %707 = vmatpush1.msra.mxu0 0.0
    %708 = vmatprep.subr.mxu0 0.0
    %709 = vmatpush1.msra.mxu0 0.0
    %710 = vmatprep.subr.mxu0 0.0
    %711 = vmatpush1.msra.mxu0 0.0
    %712 = vmatprep.subr.mxu0 0.0
    %713 = vmatpush1.msra.mxu0 0.0
    %714 = vmatprep.subr.mxu0 0.0
    %715 = vmatpush1.msra.mxu0 0.0
    %716 = vmatprep.subr.mxu0 0.0
    %717 = vmatpush1.msra.mxu0 0.0
    %718 = vmatprep.subr.mxu0 0.0
    %719 = vmatpush1.msra.mxu0 0.0
    %720 = vmatprep.subr.mxu0 0.0
    %721 = vmatpush1.msra.mxu0 0.0
    %722 = vmatprep.subr.mxu0 0.0
    %723 = vmatpush1.msra.mxu0 0.0
    %724 = vmatprep.subr.mxu0 0.0
    %725 = vmatpush1.msra.mxu0 0.0
    %726 = vmatprep.subr.mxu0 0.0
    %727 = vmatpush1.msra.mxu0 0.0
    %728 = vmatprep.subr.mxu0 0.0
    %729 = vmatpush1.msra.mxu0 0.0
    %730 = vmatprep.subr.mxu0 0.0
    %731 = vmatpush1.msra.mxu0 0.0
    %732 = vmatprep.subr.mxu0 0.0
    %733 = vmatpush1.msra.mxu0 0.0
    %734 = vmatprep.subr.mxu0 0.0
    %735 = vmatpush1.msra.mxu0 0.0
    %736 = vmatprep.subr.mxu0 0.0
    %737 = vmatpush1.msra.mxu0 0.0
    %738 = vmatprep.mubr.f32.mxu0 0.0
    %739 = vmatmul.mubr.f32.gmra.mrb[0].mxu0 %v672
    %v740 = vpop.f32.mrb[0].mxu0
    %v741 = vadd.f32 0.0, %v740
    %v742 = vpop.f32.mrb[0].mxu0
    %v743 = vadd.f32 0.0, %v742
    %744 = vdwg.mxu0
    %v745 = vadd.f32 %v209, %v741
    %v746 = vadd.f32 %v210, %v743
    %v747 = vxor.u32 %v745, 2147483648
    %v748 = vxor.u32 %v746, 2147483648
    %v749 = vmul.f32 %v747, 1.442695
    %v750 = vpow.pop %v749
    %v751 = vmul.f32 %v748, 1.442695
    %v752 = vpow.pop %v751
    %v753 = vadd.f32 %v750, 1.0
    %v754 = vadd.f32 %v752, 1.0
    %v755 = vrcp.pop %v753
    %v756 = vmul.f32 1.0, %v755
    %v757 = vrcp.pop %v754
    %v758 = vmul.f32 1.0, %v757
    %v759 = vtanh.pop %v746
    %v761 = vrot.slane %v663, 6
    %v763 = vmul.f32 %v756, %v761
    %765 = vrot.lane.b32.xlu0 %v759, 64
    %v766 = vpop.permute.xlu0 %765
    %v768 = vmul.f32 %v756, %v766
    %770 = vrot.lane.b32.xlu0 %v768, 64
    %v771 = vpop.permute.xlu0 %770
    %v773 = vadd.f32 %v763, %v771
    %v774 = vtanh.pop %v773
    %776 = vrot.lane.b32.xlu0 %v774, 64
    %v777 = vpop.permute.xlu0 %776
    %v779 = vmul.f32 %v758, %v777
    %v781 = vsel %vm105, %v779, 0
    %783 = vmatprep.subr.mxu0 %v76
    %784 = vmatpush1.msra.mxu0 %v75
    %785 = vmatprep.subr.mxu0 %v78
    %786 = vmatpush1.msra.mxu0 %v77
    %787 = vmatprep.subr.mxu0 %v80
    %788 = vmatpush1.msra.mxu0 %v79
    %789 = vmatprep.subr.mxu0 %v82
    %790 = vmatpush1.msra.mxu0 %v81
    %791 = vmatprep.subr.mxu0 %v84
    %792 = vmatpush1.msra.mxu0 %v83
    %793 = vmatprep.subr.mxu0 %v86
    %794 = vmatpush1.msra.mxu0 %v85
    %795 = vmatprep.subr.mxu0 %v88
    %796 = vmatpush1.msra.mxu0 %v87
    %797 = vmatprep.subr.mxu0 %v90
    %798 = vmatpush1.msra.mxu0 %v89
    %799 = vmatprep.subr.mxu0 0.0
    %800 = vmatpush1.msra.mxu0 0.0
    %801 = vmatprep.subr.mxu0 0.0
    %802 = vmatpush1.msra.mxu0 0.0
    %803 = vmatprep.subr.mxu0 0.0
    %804 = vmatpush1.msra.mxu0 0.0
    %805 = vmatprep.subr.mxu0 0.0
    %806 = vmatpush1.msra.mxu0 0.0
    %807 = vmatprep.subr.mxu0 0.0
    %808 = vmatpush1.msra.mxu0 0.0
    %809 = vmatprep.subr.mxu0 0.0
    %810 = vmatpush1.msra.mxu0 0.0
    %811 = vmatprep.subr.mxu0 0.0
    %812 = vmatpush1.msra.mxu0 0.0
    %813 = vmatprep.subr.mxu0 0.0
    %814 = vmatpush1.msra.mxu0 0.0
    %815 = vmatprep.subr.mxu0 0.0
    %816 = vmatpush1.msra.mxu0 0.0
    %817 = vmatprep.subr.mxu0 0.0
    %818 = vmatpush1.msra.mxu0 0.0
    %819 = vmatprep.subr.mxu0 0.0
    %820 = vmatpush1.msra.mxu0 0.0
    %821 = vmatprep.subr.mxu0 0.0
    %822 = vmatpush1.msra.mxu0 0.0
    %823 = vmatprep.subr.mxu0 0.0
    %824 = vmatpush1.msra.mxu0 0.0
    %825 = vmatprep.subr.mxu0 0.0
    %826 = vmatpush1.msra.mxu0 0.0
    %827 = vmatprep.subr.mxu0 0.0
    %828 = vmatpush1.msra.mxu0 0.0
    %829 = vmatprep.subr.mxu0 0.0
    %830 = vmatpush1.msra.mxu0 0.0
    %831 = vmatprep.subr.mxu0 0.0
    %832 = vmatpush1.msra.mxu0 0.0
    %833 = vmatprep.subr.mxu0 0.0
    %834 = vmatpush1.msra.mxu0 0.0
    %835 = vmatprep.subr.mxu0 0.0
    %836 = vmatpush1.msra.mxu0 0.0
    %837 = vmatprep.subr.mxu0 0.0
    %838 = vmatpush1.msra.mxu0 0.0
    %839 = vmatprep.subr.mxu0 0.0
    %840 = vmatpush1.msra.mxu0 0.0
    %841 = vmatprep.subr.mxu0 0.0
    %842 = vmatpush1.msra.mxu0 0.0
    %843 = vmatprep.subr.mxu0 0.0
    %844 = vmatpush1.msra.mxu0 0.0
    %845 = vmatprep.subr.mxu0 0.0
    %846 = vmatpush1.msra.mxu0 0.0
    %847 = vmatprep.mubr.f32.mxu0 0.0
    %848 = vmatmul.mubr.f32.gmra.mrb[0].mxu0 %v781
    %v849 = vpop.f32.mrb[0].mxu0
    %v850 = vadd.f32 0.0, %v849
    %v851 = vpop.f32.mrb[0].mxu0
    %v852 = vadd.f32 0.0, %v851
    %853 = vdwg.mxu0
    %v856 = vrot.slane %v850, 6
    %v857 = vrot.slane %v852, 6
    %v860 = vadd.f32 %v215, %v856
    %v861 = vadd.f32 %v216, %v857
    %v862 = vxor.u32 %v860, 2147483648
    %v863 = vxor.u32 %v861, 2147483648
    %v864 = vmul.f32 %v862, 1.442695
    %v865 = vpow.pop %v864
    %v866 = vmul.f32 %v863, 1.442695
    %v867 = vpow.pop %v866
    %v868 = vadd.f32 %v865, 1.0
    %v869 = vadd.f32 %v867, 1.0
    %v870 = vrcp.pop %v868
    %v871 = vmul.f32 1.0, %v870
    %v872 = vrcp.pop %v869
    %v873 = vmul.f32 1.0, %v872
    %v874 = vtanh.pop %v861
    %v876 = vrot.slane %v773, 6
    %v878 = vmul.f32 %v871, %v876
    %880 = vrot.lane.b32.xlu0 %v874, 64
    %v881 = vpop.permute.xlu0 %880
    %v883 = vmul.f32 %v871, %v881
    %885 = vrot.lane.b32.xlu0 %v883, 64
    %v886 = vpop.permute.xlu0 %885
    %v888 = vadd.f32 %v878, %v886
    %v889 = vtanh.pop %v888
    %891 = vrot.lane.b32.xlu0 %v889, 64
    %v892 = vpop.permute.xlu0 %891
    %v894 = vmul.f32 %v873, %v892
    %v896 = vrot.slane %v894, 2
    %v897 = vsel %vm105, %v896, 0
    %899 = vmatprep.subr.mxu0 %v76
    %900 = vmatpush1.msra.mxu0 %v75
    %901 = vmatprep.subr.mxu0 %v78
    %902 = vmatpush1.msra.mxu0 %v77
    %903 = vmatprep.subr.mxu0 %v80
    %904 = vmatpush1.msra.mxu0 %v79
    %905 = vmatprep.subr.mxu0 %v82
    %906 = vmatpush1.msra.mxu0 %v81
    %907 = vmatprep.subr.mxu0 %v84
    %908 = vmatpush1.msra.mxu0 %v83
    %909 = vmatprep.subr.mxu0 %v86
    %910 = vmatpush1.msra.mxu0 %v85
    %911 = vmatprep.subr.mxu0 %v88
    %912 = vmatpush1.msra.mxu0 %v87
    %913 = vmatprep.subr.mxu0 %v90
    %914 = vmatpush1.msra.mxu0 %v89
    %915 = vmatprep.subr.mxu0 0.0
    %916 = vmatpush1.msra.mxu0 0.0
    %917 = vmatprep.subr.mxu0 0.0
    %918 = vmatpush1.msra.mxu0 0.0
    %919 = vmatprep.subr.mxu0 0.0
    %920 = vmatpush1.msra.mxu0 0.0
    %921 = vmatprep.subr.mxu0 0.0
    %922 = vmatpush1.msra.mxu0 0.0
    %923 = vmatprep.subr.mxu0 0.0
    %924 = vmatpush1.msra.mxu0 0.0
    %925 = vmatprep.subr.mxu0 0.0
    %926 = vmatpush1.msra.mxu0 0.0
    %927 = vmatprep.subr.mxu0 0.0
    %928 = vmatpush1.msra.mxu0 0.0
    %929 = vmatprep.subr.mxu0 0.0
    %930 = vmatpush1.msra.mxu0 0.0
    %931 = vmatprep.subr.mxu0 0.0
    %932 = vmatpush1.msra.mxu0 0.0
    %933 = vmatprep.subr.mxu0 0.0
    %934 = vmatpush1.msra.mxu0 0.0
    %935 = vmatprep.subr.mxu0 0.0
    %936 = vmatpush1.msra.mxu0 0.0
    %937 = vmatprep.subr.mxu0 0.0
    %938 = vmatpush1.msra.mxu0 0.0
    %939 = vmatprep.subr.mxu0 0.0
    %940 = vmatpush1.msra.mxu0 0.0
    %941 = vmatprep.subr.mxu0 0.0
    %942 = vmatpush1.msra.mxu0 0.0
    %943 = vmatprep.subr.mxu0 0.0
    %944 = vmatpush1.msra.mxu0 0.0
    %945 = vmatprep.subr.mxu0 0.0
    %946 = vmatpush1.msra.mxu0 0.0
    %947 = vmatprep.subr.mxu0 0.0
    %948 = vmatpush1.msra.mxu0 0.0
    %949 = vmatprep.subr.mxu0 0.0
    %950 = vmatpush1.msra.mxu0 0.0
    %951 = vmatprep.subr.mxu0 0.0
    %952 = vmatpush1.msra.mxu0 0.0
    %953 = vmatprep.subr.mxu0 0.0
    %954 = vmatpush1.msra.mxu0 0.0
    %955 = vmatprep.subr.mxu0 0.0
    %956 = vmatpush1.msra.mxu0 0.0
    %957 = vmatprep.subr.mxu0 0.0
    %958 = vmatpush1.msra.mxu0 0.0
    %959 = vmatprep.subr.mxu0 0.0
    %960 = vmatpush1.msra.mxu0 0.0
    %961 = vmatprep.subr.mxu0 0.0
    %962 = vmatpush1.msra.mxu0 0.0
    %963 = vmatprep.mubr.f32.mxu0 0.0
    %964 = vmatmul.mubr.f32.gmra.mrb[0].mxu0 %v897
    %v965 = vpop.f32.mrb[0].mxu0
    %v966 = vadd.f32 0.0, %v965
    %v967 = vpop.f32.mrb[0].mxu0
    %v968 = vadd.f32 0.0, %v967
    %969 = vdwg.mxu0
    %v972 = vrot.slane %v966, 4
    %v973 = vrot.slane %v968, 4
    %v976 = vadd.f32 %v209, %v972
    %v977 = vadd.f32 %v210, %v973
    %v978 = vxor.u32 %v976, 2147483648
    %v979 = vxor.u32 %v977, 2147483648
    %v980 = vmul.f32 %v978, 1.442695
    %v981 = vpow.pop %v980
    %v982 = vmul.f32 %v979, 1.442695
    %v983 = vpow.pop %v982
    %v984 = vadd.f32 %v981, 1.0
    %v985 = vadd.f32 %v983, 1.0
    %v986 = vrcp.pop %v984
    %v987 = vmul.f32 1.0, %v986
    %v988 = vrcp.pop %v985
    %v989 = vmul.f32 1.0, %v988
    %v990 = vtanh.pop %v977
    %v992 = vrot.slane %v888, 6
    %v994 = vmul.f32 %v987, %v992
    %996 = vrot.lane.b32.xlu0 %v990, 64
    %v997 = vpop.permute.xlu0 %996
    %v999 = vmul.f32 %v987, %v997
    %1001 = vrot.lane.b32.xlu0 %v999, 64
    %v1002 = vpop.permute.xlu0 %1001
    %v1004 = vadd.f32 %v994, %v1002
    %v1005 = vtanh.pop %v1004
    %1007 = vrot.lane.b32.xlu0 %v1005, 64
    %v1008 = vpop.permute.xlu0 %1007
    %v1010 = vmul.f32 %v989, %v1008
    %v1012 = vrot.slane %v1010, 4
    %v1013 = vsel %vm105, %v1012, 0
    %1015 = vmatprep.subr.mxu0 %v76
    %1016 = vmatpush1.msra.mxu0 %v75
    %1017 = vmatprep.subr.mxu0 %v78
    %1018 = vmatpush1.msra.mxu0 %v77
    %1019 = vmatprep.subr.mxu0 %v80
    %1020 = vmatpush1.msra.mxu0 %v79
    %1021 = vmatprep.subr.mxu0 %v82
    %1022 = vmatpush1.msra.mxu0 %v81
    %1023 = vmatprep.subr.mxu0 %v84
    %1024 = vmatpush1.msra.mxu0 %v83
    %1025 = vmatprep.subr.mxu0 %v86
    %1026 = vmatpush1.msra.mxu0 %v85
    %1027 = vmatprep.subr.mxu0 %v88
    %1028 = vmatpush1.msra.mxu0 %v87
    %1029 = vmatprep.subr.mxu0 %v90
    %1030 = vmatpush1.msra.mxu0 %v89
    %1031 = vmatprep.subr.mxu0 0.0
    %1032 = vmatpush1.msra.mxu0 0.0
    %1033 = vmatprep.subr.mxu0 0.0
    %1034 = vmatpush1.msra.mxu0 0.0
    %1035 = vmatprep.subr.mxu0 0.0
    %1036 = vmatpush1.msra.mxu0 0.0
    %1037 = vmatprep.subr.mxu0 0.0
    %1038 = vmatpush1.msra.mxu0 0.0
    %1039 = vmatprep.subr.mxu0 0.0
    %1040 = vmatpush1.msra.mxu0 0.0
    %1041 = vmatprep.subr.mxu0 0.0
    %1042 = vmatpush1.msra.mxu0 0.0
    %1043 = vmatprep.subr.mxu0 0.0
    %1044 = vmatpush1.msra.mxu0 0.0
    %1045 = vmatprep.subr.mxu0 0.0
    %1046 = vmatpush1.msra.mxu0 0.0
    %1047 = vmatprep.subr.mxu0 0.0
    %1048 = vmatpush1.msra.mxu0 0.0
    %1049 = vmatprep.subr.mxu0 0.0
    %1050 = vmatpush1.msra.mxu0 0.0
    %1051 = vmatprep.subr.mxu0 0.0
    %1052 = vmatpush1.msra.mxu0 0.0
    %1053 = vmatprep.subr.mxu0 0.0
    %1054 = vmatpush1.msra.mxu0 0.0
    %1055 = vmatprep.subr.mxu0 0.0
    %1056 = vmatpush1.msra.mxu0 0.0
    %1057 = vmatprep.subr.mxu0 0.0
    %1058 = vmatpush1.msra.mxu0 0.0
    %1059 = vmatprep.subr.mxu0 0.0
    %1060 = vmatpush1.msra.mxu0 0.0
    %1061 = vmatprep.subr.mxu0 0.0
    %1062 = vmatpush1.msra.mxu0 0.0
    %1063 = vmatprep.subr.mxu0 0.0
    %1064 = vmatpush1.msra.mxu0 0.0
    %1065 = vmatprep.subr.mxu0 0.0
    %1066 = vmatpush1.msra.mxu0 0.0
    %1067 = vmatprep.subr.mxu0 0.0
    %1068 = vmatpush1.msra.mxu0 0.0
    %1069 = vmatprep.subr.mxu0 0.0
    %1070 = vmatpush1.msra.mxu0 0.0
    %1071 = vmatprep.subr.mxu0 0.0
    %1072 = vmatpush1.msra.mxu0 0.0
    %1073 = vmatprep.subr.mxu0 0.0
    %1074 = vmatpush1.msra.mxu0 0.0
    %1075 = vmatprep.subr.mxu0 0.0
    %1076 = vmatpush1.msra.mxu0 0.0
    %1077 = vmatprep.subr.mxu0 0.0
    %1078 = vmatpush1.msra.mxu0 0.0
    %1079 = vmatprep.mubr.f32.mxu0 0.0
    %1080 = vmatmul.mubr.f32.gmra.mrb[0].mxu0 %v1013
    %v1081 = vpop.f32.mrb[0].mxu0
    %v1082 = vadd.f32 0.0, %v1081
    %v1083 = vpop.f32.mrb[0].mxu0
    %v1084 = vadd.f32 0.0, %v1083
    %1085 = vdwg.mxu0
    %v1088 = vrot.slane %v1082, 2
    %v1089 = vrot.slane %v1084, 2
    %v1092 = vadd.f32 %v215, %v1088
    %v1093 = vadd.f32 %v216, %v1089
    %v1094 = vxor.u32 %v1092, 2147483648
    %v1095 = vxor.u32 %v1093, 2147483648
    %v1096 = vmul.f32 %v1094, 1.442695
    %v1097 = vpow.pop %v1096
    %v1098 = vmul.f32 %v1095, 1.442695
    %v1099 = vpow.pop %v1098
    %v1100 = vadd.f32 %v1097, 1.0
    %v1101 = vadd.f32 %v1099, 1.0
    %v1102 = vrcp.pop %v1100
    %v1103 = vmul.f32 1.0, %v1102
    %v1104 = vrcp.pop %v1101
    %v1105 = vmul.f32 1.0, %v1104
    %v1106 = vtanh.pop %v1093
    %v1108 = vrot.slane %v1004, 6
    %v1110 = vmul.f32 %v1103, %v1108
    %1112 = vrot.lane.b32.xlu0 %v1106, 64
    %v1113 = vpop.permute.xlu0 %1112
    %v1115 = vmul.f32 %v1103, %v1113
    %1117 = vrot.lane.b32.xlu0 %v1115, 64
    %v1118 = vpop.permute.xlu0 %1117
    %v1120 = vadd.f32 %v1110, %v1118
    %v1121 = vtanh.pop %v1120
    %1123 = vrot.lane.b32.xlu0 %v1121, 64
    %v1124 = vpop.permute.xlu0 %1123
    %v1126 = vmul.f32 %v1105, %v1124
    %v1128 = vrot.slane %v1126, 6
    %v1130 = vsel %vm58, %v322, %v1128
    %vm1131 = vcmask 517120
    %1132 = vst.msk [vmem:[#allocation2] sm:$0x3] %vm1131, %v1130
    %v1133 = vrot.slane %v1010, 2
    %v1135 = vsel %vm58, %v437, %v1133
    %vm1136 = vcmask 519170
    %1137 = vst.msk [vmem:[#allocation2] sm:$0xc] %vm1136, %v1135
    %v1138 = vrot.slane %v894, 6
    %v1140 = vsel %vm58, %v553, %v1138
    %vm1141 = vcmask 521220
    %1142 = vst.msk [vmem:[#allocation2] sm:$0x30] %vm1141, %v1140
    %v1143 = vrot.slane %v779, 2
    %v1145 = vsel %vm58, %v669, %v1143
    %vm1146 = vcmask 523270
    %1147 = vst.msk [vmem:[#allocation2] sm:$0xc0] %vm1146, %v1145
    %v1149 = vsel %vm58, %v779, %v671
    %1150 = vst.msk [vmem:[#allocation2 + $0x8] sm:$0x3] %vm1131, %v1149
    %v1151 = vrot.slane %v553, 2
    %v1153 = vsel %vm58, %v894, %v1151
    %1154 = vst.msk [vmem:[#allocation2 + $0x8] sm:$0xc] %vm1136, %v1153
    %v1155 = vrot.slane %v437, 6
    %v1157 = vsel %vm58, %v1010, %v1155
    %1158 = vst.msk [vmem:[#allocation2 + $0x8] sm:$0x30] %vm1141, %v1157
    %v1159 = vrot.slane %v322, 2
    %v1161 = vsel %vm58, %v1126, %v1159
    %1162 = vst.msk [vmem:[#allocation2 + $0x8] sm:$0xc0] %vm1146, %v1161
    %v1163 = vld [vmem:[#allocation4 + $0x10] sm:$0xff]
    %v1164 = vld [vmem:[#allocation4 + $0x18] sm:$0xff]
    %v1165 = vld [vmem:[#allocation4 + $0x78] sm:$0xff]
    %v1166 = vld [vmem:[#allocation4 + $0x80] sm:$0xff]
    %v1167 = vld [vmem:[#allocation4 + $0xe0] sm:$0xff]
    %v1168 = vld [vmem:[#allocation4 + $0xe8] sm:$0xff]
    %v1169 = vld [vmem:[#allocation4 + $0x148] sm:$0xff]
    %v1170 = vld [vmem:[#allocation4 + $0x150] sm:$0xff]
    %v1171 = vld [vmem:[#allocation4 + $0x1b0] sm:$0xff]
    %v1172 = vld [vmem:[#allocation4 + $0x1b8] sm:$0xff]
    %v1173 = vld [vmem:[#allocation4 + $0x218] sm:$0xff]
    %v1174 = vld [vmem:[#allocation4 + $0x220] sm:$0xff]
    %v1175 = vld [vmem:[#allocation4 + $0x280] sm:$0xff]
    %v1176 = vld [vmem:[#allocation4 + $0x288] sm:$0xff]
    %v1177 = vld [vmem:[#allocation4 + $0x2e8] sm:$0xff]
    %v1178 = vld [vmem:[#allocation4 + $0x2f0] sm:$0xff]
    %v1179 = vld [vmem:[#allocation4 + $0x40] sm:$0xff]
    %v1180 = vld [vmem:[#allocation4 + $0x48] sm:$0xff]
    %v1181 = vld [vmem:[#allocation4 + $0xa8] sm:$0xff]
    %v1182 = vld [vmem:[#allocation4 + $0xb0] sm:$0xff]
    %v1183 = vld [vmem:[#allocation4 + $0x110] sm:$0xff]
    %v1184 = vld [vmem:[#allocation4 + $0x118] sm:$0xff]
    %v1185 = vld [vmem:[#allocation4 + $0x178] sm:$0xff]
    %v1186 = vld [vmem:[#allocation4 + $0x180] sm:$0xff]
    %v1187 = vld [vmem:[#allocation4 + $0x1e0] sm:$0xff]
    %v1188 = vld [vmem:[#allocation4 + $0x1e8] sm:$0xff]
    %v1189 = vld [vmem:[#allocation4 + $0x248] sm:$0xff]
    %v1190 = vld [vmem:[#allocation4 + $0x250] sm:$0xff]
    %v1191 = vld [vmem:[#allocation4 + $0x2b0] sm:$0xff]
    %v1192 = vld [vmem:[#allocation4 + $0x2b8] sm:$0xff]
    %v1193 = vld [vmem:[#allocation4 + $0x318] sm:$0xff]
    %v1194 = vld [vmem:[#allocation4 + $0x320] sm:$0xff]
    %v1195 = vld [vmem:[%s2 + $0x2] sm:$0x3]
    %v1196 = vld [vmem:[#allocation2] sm:$0xff]
    %v1197 = vld [vmem:[#allocation2 + $0x8] sm:$0xff]
    %v1199 = vlaneseq
    %v1200 = vshrl.u32 %v1199, 7
    %v1201 = vsub.s32 0, %v1200
    %v1202 = vrot.slane %v1195, %v1201
    %v1203 = vlaneseq
    %v1204 = vshrl.u32 %v1203, 7
    %v1205 = vsub.s32 1, %v1204
    %v1206 = vrot.slane %v1195, %v1205
    %v1210 = vsel %vm105, %v1196, 0
    %v1213 = vsel %vm105, %v1197, 0
    %1215 = vmatprep.subr.mxu0 %v1164
    %1216 = vmatpush1.msra.mxu0 %v1163
    %1217 = vmatprep.subr.mxu0 %v1166
    %1218 = vmatpush1.msra.mxu0 %v1165
    %1219 = vmatprep.subr.mxu0 %v1168
    %1220 = vmatpush1.msra.mxu0 %v1167
    %1221 = vmatprep.subr.mxu0 %v1170
    %1222 = vmatpush1.msra.mxu0 %v1169
    %1223 = vmatprep.subr.mxu0 %v1172
    %1224 = vmatpush1.msra.mxu0 %v1171
    %1225 = vmatprep.subr.mxu0 %v1174
    %1226 = vmatpush1.msra.mxu0 %v1173
    %1227 = vmatprep.subr.mxu0 %v1176
    %1228 = vmatpush1.msra.mxu0 %v1175
    %1229 = vmatprep.subr.mxu0 %v1178
    %1230 = vmatpush1.msra.mxu0 %v1177
    %1231 = vmatprep.subr.mxu0 0.0
    %1232 = vmatpush1.msra.mxu0 0.0
    %1233 = vmatprep.subr.mxu0 0.0
    %1234 = vmatpush1.msra.mxu0 0.0
    %1235 = vmatprep.subr.mxu0 0.0
    %1236 = vmatpush1.msra.mxu0 0.0
    %1237 = vmatprep.subr.mxu0 0.0
    %1238 = vmatpush1.msra.mxu0 0.0
    %1239 = vmatprep.subr.mxu0 0.0
    %1240 = vmatpush1.msra.mxu0 0.0
    %1241 = vmatprep.subr.mxu0 0.0
    %1242 = vmatpush1.msra.mxu0 0.0
    %1243 = vmatprep.subr.mxu0 0.0
    %1244 = vmatpush1.msra.mxu0 0.0
    %1245 = vmatprep.subr.mxu0 0.0
    %1246 = vmatpush1.msra.mxu0 0.0
    %1247 = vmatprep.subr.mxu0 0.0
    %1248 = vmatpush1.msra.mxu0 0.0
    %1249 = vmatprep.subr.mxu0 0.0
    %1250 = vmatpush1.msra.mxu0 0.0
    %1251 = vmatprep.subr.mxu0 0.0
    %1252 = vmatpush1.msra.mxu0 0.0
    %1253 = vmatprep.subr.mxu0 0.0
    %1254 = vmatpush1.msra.mxu0 0.0
    %1255 = vmatprep.subr.mxu0 0.0
    %1256 = vmatpush1.msra.mxu0 0.0
    %1257 = vmatprep.subr.mxu0 0.0
    %1258 = vmatpush1.msra.mxu0 0.0
    %1259 = vmatprep.subr.mxu0 0.0
    %1260 = vmatpush1.msra.mxu0 0.0
    %1261 = vmatprep.subr.mxu0 0.0
    %1262 = vmatpush1.msra.mxu0 0.0
    %1263 = vmatprep.subr.mxu0 0.0
    %1264 = vmatpush1.msra.mxu0 0.0
    %1265 = vmatprep.subr.mxu0 0.0
    %1266 = vmatpush1.msra.mxu0 0.0
    %1267 = vmatprep.subr.mxu0 0.0
    %1268 = vmatpush1.msra.mxu0 0.0
    %1269 = vmatprep.subr.mxu0 0.0
    %1270 = vmatpush1.msra.mxu0 0.0
    %1271 = vmatprep.subr.mxu0 0.0
    %1272 = vmatpush1.msra.mxu0 0.0
    %1273 = vmatprep.subr.mxu0 0.0
    %1274 = vmatpush1.msra.mxu0 0.0
    %1275 = vmatprep.subr.mxu0 0.0
    %1276 = vmatpush1.msra.mxu0 0.0
    %1277 = vmatprep.subr.mxu0 0.0
    %1278 = vmatpush1.msra.mxu0 0.0
    %1279 = vmatprep.mubr.f32.mxu0 0.0
    %1280 = vmatmul.mubr.f32.gmra.mrb[0].mxu0 %v1210
    %v1281 = vpop.f32.mrb[0].mxu0
    %v1282 = vadd.f32 %v1202, %v1281
    %v1283 = vpop.f32.mrb[0].mxu0
    %v1284 = vadd.f32 %v1206, %v1283
    %1285 = vmatprep.mubr.f32.mxu0 0.0
    %1286 = vmatmul.mubr.f32.gmra.mrb[0].mxu0 %v1213
    %v1287 = vpop.f32.mrb[0].mxu0
    %v1288 = vadd.f32 %v1202, %v1287
    %v1289 = vpop.f32.mrb[0].mxu0
    %v1290 = vadd.f32 %v1206, %v1289
    %1291 = vdwg.mxu0
    %v1294 = vrot.slane %v1288, 6
    %v1295 = vrot.slane %v1290, 6
    %v1298 = vsel %vm56, %v1282, %v1294
    %v1299 = vsel %vm57, %v1284, %v1295
    %v1300 = vrot.slane %v1288, 2
    %v1301 = vrot.slane %v1290, 2
    %v1304 = vsel %vm56, %v1282, %v1300
    %v1305 = vsel %vm57, %v1284, %v1301
    %v1308 = vrot.slane %v1282, 6
    %v1309 = vrot.slane %v1284, 6
    %v1312 = vsel %vm56, %v1288, %v1308
    %v1313 = vsel %vm57, %v1290, %v1309
    %v1314 = vrot.slane %v1282, 2
    %v1315 = vrot.slane %v1284, 2
    %v1318 = vsel %vm56, %v1288, %v1314
    %v1319 = vsel %vm57, %v1290, %v1315
    %1320 = vmatprep.subr.mxu0 %v1180
    %1321 = vmatpush1.msra.mxu0 %v1179
    %1322 = vmatprep.subr.mxu0 %v1182
    %1323 = vmatpush1.msra.mxu0 %v1181
    %1324 = vmatprep.subr.mxu0 %v1184
    %1325 = vmatpush1.msra.mxu0 %v1183
    %1326 = vmatprep.subr.mxu0 %v1186
    %1327 = vmatpush1.msra.mxu0 %v1185
    %1328 = vmatprep.subr.mxu0 %v1188
    %1329 = vmatpush1.msra.mxu0 %v1187
    %1330 = vmatprep.subr.mxu0 %v1190
    %1331 = vmatpush1.msra.mxu0 %v1189
    %1332 = vmatprep.subr.mxu0 %v1192
    %1333 = vmatpush1.msra.mxu0 %v1191
    %1334 = vmatprep.subr.mxu0 %v1194
    %1335 = vmatpush1.msra.mxu0 %v1193
    %1336 = vmatprep.subr.mxu0 0.0
    %1337 = vmatpush1.msra.mxu0 0.0
    %1338 = vmatprep.subr.mxu0 0.0
    %1339 = vmatpush1.msra.mxu0 0.0
    %1340 = vmatprep.subr.mxu0 0.0
    %1341 = vmatpush1.msra.mxu0 0.0
    %1342 = vmatprep.subr.mxu0 0.0
    %1343 = vmatpush1.msra.mxu0 0.0
    %1344 = vmatprep.subr.mxu0 0.0
    %1345 = vmatpush1.msra.mxu0 0.0
    %1346 = vmatprep.subr.mxu0 0.0
    %1347 = vmatpush1.msra.mxu0 0.0
    %1348 = vmatprep.subr.mxu0 0.0
    %1349 = vmatpush1.msra.mxu0 0.0
    %1350 = vmatprep.subr.mxu0 0.0
    %1351 = vmatpush1.msra.mxu0 0.0
    %1352 = vmatprep.subr.mxu0 0.0
    %1353 = vmatpush1.msra.mxu0 0.0
    %1354 = vmatprep.subr.mxu0 0.0
    %1355 = vmatpush1.msra.mxu0 0.0
    %1356 = vmatprep.subr.mxu0 0.0
    %1357 = vmatpush1.msra.mxu0 0.0
    %1358 = vmatprep.subr.mxu0 0.0
    %1359 = vmatpush1.msra.mxu0 0.0
    %1360 = vmatprep.subr.mxu0 0.0
    %1361 = vmatpush1.msra.mxu0 0.0
    %1362 = vmatprep.subr.mxu0 0.0
    %1363 = vmatpush1.msra.mxu0 0.0
    %1364 = vmatprep.subr.mxu0 0.0
    %1365 = vmatpush1.msra.mxu0 0.0
    %1366 = vmatprep.subr.mxu0 0.0
    %1367 = vmatpush1.msra.mxu0 0.0
    %1368 = vmatprep.subr.mxu0 0.0
    %1369 = vmatpush1.msra.mxu0 0.0
    %1370 = vmatprep.subr.mxu0 0.0
    %1371 = vmatpush1.msra.mxu0 0.0
    %1372 = vmatprep.subr.mxu0 0.0
    %1373 = vmatpush1.msra.mxu0 0.0
    %1374 = vmatprep.subr.mxu0 0.0
    %1375 = vmatpush1.msra.mxu0 0.0
    %1376 = vmatprep.subr.mxu0 0.0
    %1377 = vmatpush1.msra.mxu0 0.0
    %1378 = vmatprep.subr.mxu0 0.0
    %1379 = vmatpush1.msra.mxu0 0.0
    %1380 = vmatprep.subr.mxu0 0.0
    %1381 = vmatpush1.msra.mxu0 0.0
    %1382 = vmatprep.subr.mxu0 0.0
    %1383 = vmatpush1.msra.mxu0 0.0
    %1384 = vmatprep.mubr.f32.mxu0 0.0
    %1385 = vmatmul.mubr.f32.gmra.mrb[0].mxu0 %v218
    %v1386 = vpop.f32.mrb[0].mxu0
    %v1387 = vadd.f32 0.0, %v1386
    %v1388 = vpop.f32.mrb[0].mxu0
    %v1389 = vadd.f32 0.0, %v1388
    %1390 = vdwg.mxu0
    %v1391 = vadd.f32 %v1298, %v1387
    %v1392 = vadd.f32 %v1299, %v1389
    %v1393 = vxor.u32 %v1391, 2147483648
    %v1394 = vxor.u32 %v1392, 2147483648
    %v1395 = vmul.f32 %v1393, 1.442695
    %v1396 = vpow.pop %v1395
    %v1397 = vmul.f32 %v1394, 1.442695
    %v1398 = vpow.pop %v1397
    %v1399 = vadd.f32 %v1396, 1.0
    %v1400 = vadd.f32 %v1398, 1.0
    %v1401 = vrcp.pop %v1399
    %v1402 = vmul.f32 1.0, %v1401
    %v1403 = vrcp.pop %v1400
    %v1404 = vmul.f32 1.0, %v1403
    %v1405 = vtanh.pop %v1392
    %v1406 = vmul.f32 %v1402, 0.0
    %1408 = vrot.lane.b32.xlu0 %v1405, 64
    %v1409 = vpop.permute.xlu0 %1408
    %v1411 = vmul.f32 %v1402, %v1409
    %1413 = vrot.lane.b32.xlu0 %v1411, 64
    %v1414 = vpop.permute.xlu0 %1413
    %v1416 = vadd.f32 %v1406, %v1414
    %v1417 = vtanh.pop %v1416
    %1419 = vrot.lane.b32.xlu0 %v1417, 64
    %v1420 = vpop.permute.xlu0 %1419
    %v1422 = vmul.f32 %v1404, %v1420
    %v1424 = vsel %vm105, %v1422, 0
    %1426 = vmatprep.subr.mxu0 %v1180
    %1427 = vmatpush1.msra.mxu0 %v1179
    %1428 = vmatprep.subr.mxu0 %v1182
    %1429 = vmatpush1.msra.mxu0 %v1181
    %1430 = vmatprep.subr.mxu0 %v1184
    %1431 = vmatpush1.msra.mxu0 %v1183
    %1432 = vmatprep.subr.mxu0 %v1186
    %1433 = vmatpush1.msra.mxu0 %v1185
    %1434 = vmatprep.subr.mxu0 %v1188
    %1435 = vmatpush1.msra.mxu0 %v1187
    %1436 = vmatprep.subr.mxu0 %v1190
    %1437 = vmatpush1.msra.mxu0 %v1189
    %1438 = vmatprep.subr.mxu0 %v1192
    %1439 = vmatpush1.msra.mxu0 %v1191
    %1440 = vmatprep.subr.mxu0 %v1194
    %1441 = vmatpush1.msra.mxu0 %v1193
    %1442 = vmatprep.subr.mxu0 0.0
    %1443 = vmatpush1.msra.mxu0 0.0
    %1444 = vmatprep.subr.mxu0 0.0
    %1445 = vmatpush1.msra.mxu0 0.0
    %1446 = vmatprep.subr.mxu0 0.0
    %1447 = vmatpush1.msra.mxu0 0.0
    %1448 = vmatprep.subr.mxu0 0.0
    %1449 = vmatpush1.msra.mxu0 0.0
    %1450 = vmatprep.subr.mxu0 0.0
    %1451 = vmatpush1.msra.mxu0 0.0
    %1452 = vmatprep.subr.mxu0 0.0
    %1453 = vmatpush1.msra.mxu0 0.0
    %1454 = vmatprep.subr.mxu0 0.0
    %1455 = vmatpush1.msra.mxu0 0.0
    %1456 = vmatprep.subr.mxu0 0.0
    %1457 = vmatpush1.msra.mxu0 0.0
    %1458 = vmatprep.subr.mxu0 0.0
    %1459 = vmatpush1.msra.mxu0 0.0
    %1460 = vmatprep.subr.mxu0 0.0
    %1461 = vmatpush1.msra.mxu0 0.0
    %1462 = vmatprep.subr.mxu0 0.0
    %1463 = vmatpush1.msra.mxu0 0.0
    %1464 = vmatprep.subr.mxu0 0.0
    %1465 = vmatpush1.msra.mxu0 0.0
    %1466 = vmatprep.subr.mxu0 0.0
    %1467 = vmatpush1.msra.mxu0 0.0
    %1468 = vmatprep.subr.mxu0 0.0
    %1469 = vmatpush1.msra.mxu0 0.0
    %1470 = vmatprep.subr.mxu0 0.0
    %1471 = vmatpush1.msra.mxu0 0.0
    %1472 = vmatprep.subr.mxu0 0.0
    %1473 = vmatpush1.msra.mxu0 0.0
    %1474 = vmatprep.subr.mxu0 0.0
    %1475 = vmatpush1.msra.mxu0 0.0
    %1476 = vmatprep.subr.mxu0 0.0
    %1477 = vmatpush1.msra.mxu0 0.0
    %1478 = vmatprep.subr.mxu0 0.0
    %1479 = vmatpush1.msra.mxu0 0.0
    %1480 = vmatprep.subr.mxu0 0.0
    %1481 = vmatpush1.msra.mxu0 0.0
    %1482 = vmatprep.subr.mxu0 0.0
    %1483 = vmatpush1.msra.mxu0 0.0
    %1484 = vmatprep.subr.mxu0 0.0
    %1485 = vmatpush1.msra.mxu0 0.0
    %1486 = vmatprep.subr.mxu0 0.0
    %1487 = vmatpush1.msra.mxu0 0.0
    %1488 = vmatprep.subr.mxu0 0.0
    %1489 = vmatpush1.msra.mxu0 0.0
    %1490 = vmatprep.mubr.f32.mxu0 0.0
    %1491 = vmatmul.mubr.f32.gmra.mrb[0].mxu0 %v1424
    %v1492 = vpop.f32.mrb[0].mxu0
    %v1493 = vadd.f32 0.0, %v1492
    %v1494 = vpop.f32.mrb[0].mxu0
    %v1495 = vadd.f32 0.0, %v1494
    %1496 = vdwg.mxu0
    %v1499 = vrot.slane %v1493, 6
    %v1500 = vrot.slane %v1495, 6
    %v1503 = vadd.f32 %v1304, %v1499
    %v1504 = vadd.f32 %v1305, %v1500
    %v1505 = vxor.u32 %v1503, 2147483648
    %v1506 = vxor.u32 %v1504, 2147483648
    %v1507 = vmul.f32 %v1505, 1.442695
    %v1508 = vpow.pop %v1507
    %v1509 = vmul.f32 %v1506, 1.442695
    %v1510 = vpow.pop %v1509
    %v1511 = vadd.f32 %v1508, 1.0
    %v1512 = vadd.f32 %v1510, 1.0
    %v1513 = vrcp.pop %v1511
    %v1514 = vmul.f32 1.0, %v1513
    %v1515 = vrcp.pop %v1512
    %v1516 = vmul.f32 1.0, %v1515
    %v1517 = vtanh.pop %v1504
    %v1519 = vrot.slane %v1416, 6
    %v1521 = vmul.f32 %v1514, %v1519
    %1523 = vrot.lane.b32.xlu0 %v1517, 64
    %v1524 = vpop.permute.xlu0 %1523
    %v1526 = vmul.f32 %v1514, %v1524
    %1528 = vrot.lane.b32.xlu0 %v1526, 64
    %v1529 = vpop.permute.xlu0 %1528
    %v1531 = vadd.f32 %v1521, %v1529
    %v1532 = vtanh.pop %v1531
    %1534 = vrot.lane.b32.xlu0 %v1532, 64
    %v1535 = vpop.permute.xlu0 %1534
    %v1537 = vmul.f32 %v1516, %v1535
    %v1539 = vrot.slane %v1537, 2
    %v1540 = vsel %vm105, %v1539, 0
    %1542 = vmatprep.subr.mxu0 %v1180
    %1543 = vmatpush1.msra.mxu0 %v1179
    %1544 = vmatprep.subr.mxu0 %v1182
    %1545 = vmatpush1.msra.mxu0 %v1181
    %1546 = vmatprep.subr.mxu0 %v1184
    %1547 = vmatpush1.msra.mxu0 %v1183
    %1548 = vmatprep.subr.mxu0 %v1186
    %1549 = vmatpush1.msra.mxu0 %v1185
    %1550 = vmatprep.subr.mxu0 %v1188
    %1551 = vmatpush1.msra.mxu0 %v1187
    %1552 = vmatprep.subr.mxu0 %v1190
    %1553 = vmatpush1.msra.mxu0 %v1189
    %1554 = vmatprep.subr.mxu0 %v1192
    %1555 = vmatpush1.msra.mxu0 %v1191
    %1556 = vmatprep.subr.mxu0 %v1194
    %1557 = vmatpush1.msra.mxu0 %v1193
    %1558 = vmatprep.subr.mxu0 0.0
    %1559 = vmatpush1.msra.mxu0 0.0
    %1560 = vmatprep.subr.mxu0 0.0
    %1561 = vmatpush1.msra.mxu0 0.0
    %1562 = vmatprep.subr.mxu0 0.0
    %1563 = vmatpush1.msra.mxu0 0.0
    %1564 = vmatprep.subr.mxu0 0.0
    %1565 = vmatpush1.msra.mxu0 0.0
    %1566 = vmatprep.subr.mxu0 0.0
    %1567 = vmatpush1.msra.mxu0 0.0
    %1568 = vmatprep.subr.mxu0 0.0
    %1569 = vmatpush1.msra.mxu0 0.0
    %1570 = vmatprep.subr.mxu0 0.0
    %1571 = vmatpush1.msra.mxu0 0.0
    %1572 = vmatprep.subr.mxu0 0.0
    %1573 = vmatpush1.msra.mxu0 0.0
    %1574 = vmatprep.subr.mxu0 0.0
    %1575 = vmatpush1.msra.mxu0 0.0
    %1576 = vmatprep.subr.mxu0 0.0
    %1577 = vmatpush1.msra.mxu0 0.0
    %1578 = vmatprep.subr.mxu0 0.0
    %1579 = vmatpush1.msra.mxu0 0.0
    %1580 = vmatprep.subr.mxu0 0.0
    %1581 = vmatpush1.msra.mxu0 0.0
    %1582 = vmatprep.subr.mxu0 0.0
    %1583 = vmatpush1.msra.mxu0 0.0
    %1584 = vmatprep.subr.mxu0 0.0
    %1585 = vmatpush1.msra.mxu0 0.0
    %1586 = vmatprep.subr.mxu0 0.0
    %1587 = vmatpush1.msra.mxu0 0.0
    %1588 = vmatprep.subr.mxu0 0.0
    %1589 = vmatpush1.msra.mxu0 0.0
    %1590 = vmatprep.subr.mxu0 0.0
    %1591 = vmatpush1.msra.mxu0 0.0
    %1592 = vmatprep.subr.mxu0 0.0
    %1593 = vmatpush1.msra.mxu0 0.0
    %1594 = vmatprep.subr.mxu0 0.0
    %1595 = vmatpush1.msra.mxu0 0.0
    %1596 = vmatprep.subr.mxu0 0.0
    %1597 = vmatpush1.msra.mxu0 0.0
    %1598 = vmatprep.subr.mxu0 0.0
    %1599 = vmatpush1.msra.mxu0 0.0
    %1600 = vmatprep.subr.mxu0 0.0
    %1601 = vmatpush1.msra.mxu0 0.0
    %1602 = vmatprep.subr.mxu0 0.0
    %1603 = vmatpush1.msra.mxu0 0.0
    %1604 = vmatprep.subr.mxu0 0.0
    %1605 = vmatpush1.msra.mxu0 0.0
    %1606 = vmatprep.mubr.f32.mxu0 0.0
    %1607 = vmatmul.mubr.f32.gmra.mrb[0].mxu0 %v1540
    %v1608 = vpop.f32.mrb[0].mxu0
    %v1609 = vadd.f32 0.0, %v1608
    %v1610 = vpop.f32.mrb[0].mxu0
    %v1611 = vadd.f32 0.0, %v1610
    %1612 = vdwg.mxu0
    %v1615 = vrot.slane %v1609, 4
    %v1616 = vrot.slane %v1611, 4
    %v1619 = vadd.f32 %v1298, %v1615
    %v1620 = vadd.f32 %v1299, %v1616
    %v1621 = vxor.u32 %v1619, 2147483648
    %v1622 = vxor.u32 %v1620, 2147483648
    %v1623 = vmul.f32 %v1621, 1.442695
    %v1624 = vpow.pop %v1623
    %v1625 = vmul.f32 %v1622, 1.442695
    %v1626 = vpow.pop %v1625
    %v1627 = vadd.f32 %v1624, 1.0
    %v1628 = vadd.f32 %v1626, 1.0
    %v1629 = vrcp.pop %v1627
    %v1630 = vmul.f32 1.0, %v1629
    %v1631 = vrcp.pop %v1628
    %v1632 = vmul.f32 1.0, %v1631
    %v1633 = vtanh.pop %v1620
    %v1635 = vrot.slane %v1531, 6
    %v1637 = vmul.f32 %v1630, %v1635
    %1639 = vrot.lane.b32.xlu0 %v1633, 64
    %v1640 = vpop.permute.xlu0 %1639
    %v1642 = vmul.f32 %v1630, %v1640
    %1644 = vrot.lane.b32.xlu0 %v1642, 64
    %v1645 = vpop.permute.xlu0 %1644
    %v1647 = vadd.f32 %v1637, %v1645
    %v1648 = vtanh.pop %v1647
    %1650 = vrot.lane.b32.xlu0 %v1648, 64
    %v1651 = vpop.permute.xlu0 %1650
    %v1653 = vmul.f32 %v1632, %v1651
    %v1655 = vrot.slane %v1653, 4
    %v1656 = vsel %vm105, %v1655, 0
    %1658 = vmatprep.subr.mxu0 %v1180
    %1659 = vmatpush1.msra.mxu0 %v1179
    %1660 = vmatprep.subr.mxu0 %v1182
    %1661 = vmatpush1.msra.mxu0 %v1181
    %1662 = vmatprep.subr.mxu0 %v1184
    %1663 = vmatpush1.msra.mxu0 %v1183
    %1664 = vmatprep.subr.mxu0 %v1186
    %1665 = vmatpush1.msra.mxu0 %v1185
    %1666 = vmatprep.subr.mxu0 %v1188
    %1667 = vmatpush1.msra.mxu0 %v1187
    %1668 = vmatprep.subr.mxu0 %v1190
    %1669 = vmatpush1.msra.mxu0 %v1189
    %1670 = vmatprep.subr.mxu0 %v1192
    %1671 = vmatpush1.msra.mxu0 %v1191
    %1672 = vmatprep.subr.mxu0 %v1194
    %1673 = vmatpush1.msra.mxu0 %v1193
    %1674 = vmatprep.subr.mxu0 0.0
    %1675 = vmatpush1.msra.mxu0 0.0
    %1676 = vmatprep.subr.mxu0 0.0
    %1677 = vmatpush1.msra.mxu0 0.0
    %1678 = vmatprep.subr.mxu0 0.0
    %1679 = vmatpush1.msra.mxu0 0.0
    %1680 = vmatprep.subr.mxu0 0.0
    %1681 = vmatpush1.msra.mxu0 0.0
    %1682 = vmatprep.subr.mxu0 0.0
    %1683 = vmatpush1.msra.mxu0 0.0
    %1684 = vmatprep.subr.mxu0 0.0
    %1685 = vmatpush1.msra.mxu0 0.0
    %1686 = vmatprep.subr.mxu0 0.0
    %1687 = vmatpush1.msra.mxu0 0.0
    %1688 = vmatprep.subr.mxu0 0.0
    %1689 = vmatpush1.msra.mxu0 0.0
    %1690 = vmatprep.subr.mxu0 0.0
    %1691 = vmatpush1.msra.mxu0 0.0
    %1692 = vmatprep.subr.mxu0 0.0
    %1693 = vmatpush1.msra.mxu0 0.0
    %1694 = vmatprep.subr.mxu0 0.0
    %1695 = vmatpush1.msra.mxu0 0.0
    %1696 = vmatprep.subr.mxu0 0.0
    %1697 = vmatpush1.msra.mxu0 0.0
    %1698 = vmatprep.subr.mxu0 0.0
    %1699 = vmatpush1.msra.mxu0 0.0
    %1700 = vmatprep.subr.mxu0 0.0
    %1701 = vmatpush1.msra.mxu0 0.0
    %1702 = vmatprep.subr.mxu0 0.0
    %1703 = vmatpush1.msra.mxu0 0.0
    %1704 = vmatprep.subr.mxu0 0.0
    %1705 = vmatpush1.msra.mxu0 0.0
    %1706 = vmatprep.subr.mxu0 0.0
    %1707 = vmatpush1.msra.mxu0 0.0
    %1708 = vmatprep.subr.mxu0 0.0
    %1709 = vmatpush1.msra.mxu0 0.0
    %1710 = vmatprep.subr.mxu0 0.0
    %1711 = vmatpush1.msra.mxu0 0.0
    %1712 = vmatprep.subr.mxu0 0.0
    %1713 = vmatpush1.msra.mxu0 0.0
    %1714 = vmatprep.subr.mxu0 0.0
    %1715 = vmatpush1.msra.mxu0 0.0
    %1716 = vmatprep.subr.mxu0 0.0
    %1717 = vmatpush1.msra.mxu0 0.0
    %1718 = vmatprep.subr.mxu0 0.0
    %1719 = vmatpush1.msra.mxu0 0.0
    %1720 = vmatprep.subr.mxu0 0.0
    %1721 = vmatpush1.msra.mxu0 0.0
    %1722 = vmatprep.mubr.f32.mxu0 0.0
    %1723 = vmatmul.mubr.f32.gmra.mrb[0].mxu0 %v1656
    %v1724 = vpop.f32.mrb[0].mxu0
    %v1725 = vadd.f32 0.0, %v1724
    %v1726 = vpop.f32.mrb[0].mxu0
    %v1727 = vadd.f32 0.0, %v1726
    %1728 = vdwg.mxu0
    %v1731 = vrot.slane %v1725, 2
    %v1732 = vrot.slane %v1727, 2
    %v1735 = vadd.f32 %v1304, %v1731
    %v1736 = vadd.f32 %v1305, %v1732
    %v1737 = vxor.u32 %v1735, 2147483648
    %v1738 = vxor.u32 %v1736, 2147483648
    %v1739 = vmul.f32 %v1737, 1.442695
    %v1740 = vpow.pop %v1739
    %v1741 = vmul.f32 %v1738, 1.442695
    %v1742 = vpow.pop %v1741
    %v1743 = vadd.f32 %v1740, 1.0
    %v1744 = vadd.f32 %v1742, 1.0
    %v1745 = vrcp.pop %v1743
    %v1746 = vmul.f32 1.0, %v1745
    %v1747 = vrcp.pop %v1744
    %v1748 = vmul.f32 1.0, %v1747
    %v1749 = vtanh.pop %v1736
    %v1751 = vrot.slane %v1647, 6
    %v1753 = vmul.f32 %v1746, %v1751
    %1755 = vrot.lane.b32.xlu0 %v1749, 64
    %v1756 = vpop.permute.xlu0 %1755
    %v1758 = vmul.f32 %v1746, %v1756
    %1760 = vrot.lane.b32.xlu0 %v1758, 64
    %v1761 = vpop.permute.xlu0 %1760
    %v1763 = vadd.f32 %v1753, %v1761
    %v1764 = vtanh.pop %v1763
    %1766 = vrot.lane.b32.xlu0 %v1764, 64
    %v1767 = vpop.permute.xlu0 %1766
    %v1769 = vmul.f32 %v1748, %v1767
    %v1771 = vrot.slane %v1769, 6
    %v1772 = vsel %vm105, %v1771, 0
    %1774 = vmatprep.subr.mxu0 %v1180
    %1775 = vmatpush1.msra.mxu0 %v1179
    %1776 = vmatprep.subr.mxu0 %v1182
    %1777 = vmatpush1.msra.mxu0 %v1181
    %1778 = vmatprep.subr.mxu0 %v1184
    %1779 = vmatpush1.msra.mxu0 %v1183
    %1780 = vmatprep.subr.mxu0 %v1186
    %1781 = vmatpush1.msra.mxu0 %v1185
    %1782 = vmatprep.subr.mxu0 %v1188
    %1783 = vmatpush1.msra.mxu0 %v1187
    %1784 = vmatprep.subr.mxu0 %v1190
    %1785 = vmatpush1.msra.mxu0 %v1189
    %1786 = vmatprep.subr.mxu0 %v1192
    %1787 = vmatpush1.msra.mxu0 %v1191
    %1788 = vmatprep.subr.mxu0 %v1194
    %1789 = vmatpush1.msra.mxu0 %v1193
    %1790 = vmatprep.subr.mxu0 0.0
    %1791 = vmatpush1.msra.mxu0 0.0
    %1792 = vmatprep.subr.mxu0 0.0
    %1793 = vmatpush1.msra.mxu0 0.0
    %1794 = vmatprep.subr.mxu0 0.0
    %1795 = vmatpush1.msra.mxu0 0.0
    %1796 = vmatprep.subr.mxu0 0.0
    %1797 = vmatpush1.msra.mxu0 0.0
    %1798 = vmatprep.subr.mxu0 0.0
    %1799 = vmatpush1.msra.mxu0 0.0
    %1800 = vmatprep.subr.mxu0 0.0
    %1801 = vmatpush1.msra.mxu0 0.0
    %1802 = vmatprep.subr.mxu0 0.0
    %1803 = vmatpush1.msra.mxu0 0.0
    %1804 = vmatprep.subr.mxu0 0.0
    %1805 = vmatpush1.msra.mxu0 0.0
    %1806 = vmatprep.subr.mxu0 0.0
    %1807 = vmatpush1.msra.mxu0 0.0
    %1808 = vmatprep.subr.mxu0 0.0
    %1809 = vmatpush1.msra.mxu0 0.0
    %1810 = vmatprep.subr.mxu0 0.0
    %1811 = vmatpush1.msra.mxu0 0.0
    %1812 = vmatprep.subr.mxu0 0.0
    %1813 = vmatpush1.msra.mxu0 0.0
    %1814 = vmatprep.subr.mxu0 0.0
    %1815 = vmatpush1.msra.mxu0 0.0
    %1816 = vmatprep.subr.mxu0 0.0
    %1817 = vmatpush1.msra.mxu0 0.0
    %1818 = vmatprep.subr.mxu0 0.0
    %1819 = vmatpush1.msra.mxu0 0.0
    %1820 = vmatprep.subr.mxu0 0.0
    %1821 = vmatpush1.msra.mxu0 0.0
    %1822 = vmatprep.subr.mxu0 0.0
    %1823 = vmatpush1.msra.mxu0 0.0
    %1824 = vmatprep.subr.mxu0 0.0
    %1825 = vmatpush1.msra.mxu0 0.0
    %1826 = vmatprep.subr.mxu0 0.0
    %1827 = vmatpush1.msra.mxu0 0.0
    %1828 = vmatprep.subr.mxu0 0.0
    %1829 = vmatpush1.msra.mxu0 0.0
    %1830 = vmatprep.subr.mxu0 0.0
    %1831 = vmatpush1.msra.mxu0 0.0
    %1832 = vmatprep.subr.mxu0 0.0
    %1833 = vmatpush1.msra.mxu0 0.0
    %1834 = vmatprep.subr.mxu0 0.0
    %1835 = vmatpush1.msra.mxu0 0.0
    %1836 = vmatprep.subr.mxu0 0.0
    %1837 = vmatpush1.msra.mxu0 0.0
    %1838 = vmatprep.mubr.f32.mxu0 0.0
    %1839 = vmatmul.mubr.f32.gmra.mrb[0].mxu0 %v1772
    %v1840 = vpop.f32.mrb[0].mxu0
    %v1841 = vadd.f32 0.0, %v1840
    %v1842 = vpop.f32.mrb[0].mxu0
    %v1843 = vadd.f32 0.0, %v1842
    %1844 = vdwg.mxu0
    %v1845 = vadd.f32 %v1312, %v1841
    %v1846 = vadd.f32 %v1313, %v1843
    %v1847 = vxor.u32 %v1845, 2147483648
    %v1848 = vxor.u32 %v1846, 2147483648
    %v1849 = vmul.f32 %v1847, 1.442695
    %v1850 = vpow.pop %v1849
    %v1851 = vmul.f32 %v1848, 1.442695
    %v1852 = vpow.pop %v1851
    %v1853 = vadd.f32 %v1850, 1.0
    %v1854 = vadd.f32 %v1852, 1.0
    %v1855 = vrcp.pop %v1853
    %v1856 = vmul.f32 1.0, %v1855
    %v1857 = vrcp.pop %v1854
    %v1858 = vmul.f32 1.0, %v1857
    %v1859 = vtanh.pop %v1846
    %v1861 = vrot.slane %v1763, 6
    %v1863 = vmul.f32 %v1856, %v1861
    %1865 = vrot.lane.b32.xlu0 %v1859, 64
    %v1866 = vpop.permute.xlu0 %1865
    %v1868 = vmul.f32 %v1856, %v1866
    %1870 = vrot.lane.b32.xlu0 %v1868, 64
    %v1871 = vpop.permute.xlu0 %1870
    %v1873 = vadd.f32 %v1863, %v1871
    %v1874 = vtanh.pop %v1873
    %1876 = vrot.lane.b32.xlu0 %v1874, 64
    %v1877 = vpop.permute.xlu0 %1876
    %v1879 = vmul.f32 %v1858, %v1877
    %v1881 = vsel %vm105, %v1879, 0
    %1883 = vmatprep.subr.mxu0 %v1180
    %1884 = vmatpush1.msra.mxu0 %v1179
    %1885 = vmatprep.subr.mxu0 %v1182
    %1886 = vmatpush1.msra.mxu0 %v1181
    %1887 = vmatprep.subr.mxu0 %v1184
    %1888 = vmatpush1.msra.mxu0 %v1183
    %1889 = vmatprep.subr.mxu0 %v1186
    %1890 = vmatpush1.msra.mxu0 %v1185
    %1891 = vmatprep.subr.mxu0 %v1188
    %1892 = vmatpush1.msra.mxu0 %v1187
    %1893 = vmatprep.subr.mxu0 %v1190
    %1894 = vmatpush1.msra.mxu0 %v1189
    %1895 = vmatprep.subr.mxu0 %v1192
    %1896 = vmatpush1.msra.mxu0 %v1191
    %1897 = vmatprep.subr.mxu0 %v1194
    %1898 = vmatpush1.msra.mxu0 %v1193
    %1899 = vmatprep.subr.mxu0 0.0
    %1900 = vmatpush1.msra.mxu0 0.0
    %1901 = vmatprep.subr.mxu0 0.0
    %1902 = vmatpush1.msra.mxu0 0.0
    %1903 = vmatprep.subr.mxu0 0.0
    %1904 = vmatpush1.msra.mxu0 0.0
    %1905 = vmatprep.subr.mxu0 0.0
    %1906 = vmatpush1.msra.mxu0 0.0
    %1907 = vmatprep.subr.mxu0 0.0
    %1908 = vmatpush1.msra.mxu0 0.0
    %1909 = vmatprep.subr.mxu0 0.0
    %1910 = vmatpush1.msra.mxu0 0.0
    %1911 = vmatprep.subr.mxu0 0.0
    %1912 = vmatpush1.msra.mxu0 0.0
    %1913 = vmatprep.subr.mxu0 0.0
    %1914 = vmatpush1.msra.mxu0 0.0
    %1915 = vmatprep.subr.mxu0 0.0
    %1916 = vmatpush1.msra.mxu0 0.0
    %1917 = vmatprep.subr.mxu0 0.0
    %1918 = vmatpush1.msra.mxu0 0.0
    %1919 = vmatprep.subr.mxu0 0.0
    %1920 = vmatpush1.msra.mxu0 0.0
    %1921 = vmatprep.subr.mxu0 0.0
    %1922 = vmatpush1.msra.mxu0 0.0
    %1923 = vmatprep.subr.mxu0 0.0
    %1924 = vmatpush1.msra.mxu0 0.0
    %1925 = vmatprep.subr.mxu0 0.0
    %1926 = vmatpush1.msra.mxu0 0.0
    %1927 = vmatprep.subr.mxu0 0.0
    %1928 = vmatpush1.msra.mxu0 0.0
    %1929 = vmatprep.subr.mxu0 0.0
    %1930 = vmatpush1.msra.mxu0 0.0
    %1931 = vmatprep.subr.mxu0 0.0
    %1932 = vmatpush1.msra.mxu0 0.0
    %1933 = vmatprep.subr.mxu0 0.0
    %1934 = vmatpush1.msra.mxu0 0.0
    %1935 = vmatprep.subr.mxu0 0.0
    %1936 = vmatpush1.msra.mxu0 0.0
    %1937 = vmatprep.subr.mxu0 0.0
    %1938 = vmatpush1.msra.mxu0 0.0
    %1939 = vmatprep.subr.mxu0 0.0
    %1940 = vmatpush1.msra.mxu0 0.0
    %1941 = vmatprep.subr.mxu0 0.0
    %1942 = vmatpush1.msra.mxu0 0.0
    %1943 = vmatprep.subr.mxu0 0.0
    %1944 = vmatpush1.msra.mxu0 0.0
    %1945 = vmatprep.subr.mxu0 0.0
    %1946 = vmatpush1.msra.mxu0 0.0
    %1947 = vmatprep.mubr.f32.mxu0 0.0
    %1948 = vmatmul.mubr.f32.gmra.mrb[0].mxu0 %v1881
    %v1949 = vpop.f32.mrb[0].mxu0
    %v1950 = vadd.f32 0.0, %v1949
    %v1951 = vpop.f32.mrb[0].mxu0
    %v1952 = vadd.f32 0.0, %v1951
    %1953 = vdwg.mxu0
    %v1956 = vrot.slane %v1950, 6
    %v1957 = vrot.slane %v1952, 6
    %v1960 = vadd.f32 %v1318, %v1956
    %v1961 = vadd.f32 %v1319, %v1957
    %v1962 = vxor.u32 %v1960, 2147483648
    %v1963 = vxor.u32 %v1961, 2147483648
    %v1964 = vmul.f32 %v1962, 1.442695
    %v1965 = vpow.pop %v1964
    %v1966 = vmul.f32 %v1963, 1.442695
    %v1967 = vpow.pop %v1966
    %v1968 = vadd.f32 %v1965, 1.0
    %v1969 = vadd.f32 %v1967, 1.0
    %v1970 = vrcp.pop %v1968
    %v1971 = vmul.f32 1.0, %v1970
    %v1972 = vrcp.pop %v1969
    %v1973 = vmul.f32 1.0, %v1972
    %v1974 = vtanh.pop %v1961
    %v1976 = vrot.slane %v1873, 6
    %v1978 = vmul.f32 %v1971, %v1976
    %1980 = vrot.lane.b32.xlu0 %v1974, 64
    %v1981 = vpop.permute.xlu0 %1980
    %v1983 = vmul.f32 %v1971, %v1981
    %1985 = vrot.lane.b32.xlu0 %v1983, 64
    %v1986 = vpop.permute.xlu0 %1985
    %v1988 = vadd.f32 %v1978, %v1986
    %v1989 = vtanh.pop %v1988
    %1991 = vrot.lane.b32.xlu0 %v1989, 64
    %v1992 = vpop.permute.xlu0 %1991
    %v1994 = vmul.f32 %v1973, %v1992
    %v1996 = vrot.slane %v1994, 2
    %v1997 = vsel %vm105, %v1996, 0
    %1999 = vmatprep.subr.mxu0 %v1180
    %2000 = vmatpush1.msra.mxu0 %v1179
    %2001 = vmatprep.subr.mxu0 %v1182
    %2002 = vmatpush1.msra.mxu0 %v1181
    %2003 = vmatprep.subr.mxu0 %v1184
    %2004 = vmatpush1.msra.mxu0 %v1183
    %2005 = vmatprep.subr.mxu0 %v1186
    %2006 = vmatpush1.msra.mxu0 %v1185
    %2007 = vmatprep.subr.mxu0 %v1188
    %2008 = vmatpush1.msra.mxu0 %v1187
    %2009 = vmatprep.subr.mxu0 %v1190
    %2010 = vmatpush1.msra.mxu0 %v1189
    %2011 = vmatprep.subr.mxu0 %v1192
    %2012 = vmatpush1.msra.mxu0 %v1191
    %2013 = vmatprep.subr.mxu0 %v1194
    %2014 = vmatpush1.msra.mxu0 %v1193
    %2015 = vmatprep.subr.mxu0 0.0
    %2016 = vmatpush1.msra.mxu0 0.0
    %2017 = vmatprep.subr.mxu0 0.0
    %2018 = vmatpush1.msra.mxu0 0.0
    %2019 = vmatprep.subr.mxu0 0.0
    %2020 = vmatpush1.msra.mxu0 0.0
    %2021 = vmatprep.subr.mxu0 0.0
    %2022 = vmatpush1.msra.mxu0 0.0
    %2023 = vmatprep.subr.mxu0 0.0
    %2024 = vmatpush1.msra.mxu0 0.0
    %2025 = vmatprep.subr.mxu0 0.0
    %2026 = vmatpush1.msra.mxu0 0.0
    %2027 = vmatprep.subr.mxu0 0.0
    %2028 = vmatpush1.msra.mxu0 0.0
    %2029 = vmatprep.subr.mxu0 0.0
    %2030 = vmatpush1.msra.mxu0 0.0
    %2031 = vmatprep.subr.mxu0 0.0
    %2032 = vmatpush1.msra.mxu0 0.0
    %2033 = vmatprep.subr.mxu0 0.0
    %2034 = vmatpush1.msra.mxu0 0.0
    %2035 = vmatprep.subr.mxu0 0.0
    %2036 = vmatpush1.msra.mxu0 0.0
    %2037 = vmatprep.subr.mxu0 0.0
    %2038 = vmatpush1.msra.mxu0 0.0
    %2039 = vmatprep.subr.mxu0 0.0
    %2040 = vmatpush1.msra.mxu0 0.0
    %2041 = vmatprep.subr.mxu0 0.0
    %2042 = vmatpush1.msra.mxu0 0.0
    %2043 = vmatprep.subr.mxu0 0.0
    %2044 = vmatpush1.msra.mxu0 0.0
    %2045 = vmatprep.subr.mxu0 0.0
    %2046 = vmatpush1.msra.mxu0 0.0
    %2047 = vmatprep.subr.mxu0 0.0
    %2048 = vmatpush1.msra.mxu0 0.0
    %2049 = vmatprep.subr.mxu0 0.0
    %2050 = vmatpush1.msra.mxu0 0.0
    %2051 = vmatprep.subr.mxu0 0.0
    %2052 = vmatpush1.msra.mxu0 0.0
    %2053 = vmatprep.subr.mxu0 0.0
    %2054 = vmatpush1.msra.mxu0 0.0
    %2055 = vmatprep.subr.mxu0 0.0
    %2056 = vmatpush1.msra.mxu0 0.0
    %2057 = vmatprep.subr.mxu0 0.0
    %2058 = vmatpush1.msra.mxu0 0.0
    %2059 = vmatprep.subr.mxu0 0.0
    %2060 = vmatpush1.msra.mxu0 0.0
    %2061 = vmatprep.subr.mxu0 0.0
    %2062 = vmatpush1.msra.mxu0 0.0
    %2063 = vmatprep.mubr.f32.mxu0 0.0
    %2064 = vmatmul.mubr.f32.gmra.mrb[0].mxu0 %v1997
    %v2065 = vpop.f32.mrb[0].mxu0
    %v2066 = vadd.f32 0.0, %v2065
    %v2067 = vpop.f32.mrb[0].mxu0
    %v2068 = vadd.f32 0.0, %v2067
    %2069 = vdwg.mxu0
    %v2072 = vrot.slane %v2066, 4
    %v2073 = vrot.slane %v2068, 4
    %v2076 = vadd.f32 %v1312, %v2072
    %v2077 = vadd.f32 %v1313, %v2073
    %v2078 = vxor.u32 %v2076, 2147483648
    %v2079 = vxor.u32 %v2077, 2147483648
    %v2080 = vmul.f32 %v2078, 1.442695
    %v2081 = vpow.pop %v2080
    %v2082 = vmul.f32 %v2079, 1.442695
    %v2083 = vpow.pop %v2082
    %v2084 = vadd.f32 %v2081, 1.0
    %v2085 = vadd.f32 %v2083, 1.0
    %v2086 = vrcp.pop %v2084
    %v2087 = vmul.f32 1.0, %v2086
    %v2088 = vrcp.pop %v2085
    %v2089 = vmul.f32 1.0, %v2088
    %v2090 = vtanh.pop %v2077
    %v2092 = vrot.slane %v1988, 6
    %v2094 = vmul.f32 %v2087, %v2092
    %2096 = vrot.lane.b32.xlu0 %v2090, 64
    %v2097 = vpop.permute.xlu0 %2096
    %v2099 = vmul.f32 %v2087, %v2097
    %2101 = vrot.lane.b32.xlu0 %v2099, 64
    %v2102 = vpop.permute.xlu0 %2101
    %v2104 = vadd.f32 %v2094, %v2102
    %v2105 = vtanh.pop %v2104
    %2107 = vrot.lane.b32.xlu0 %v2105, 64
    %v2108 = vpop.permute.xlu0 %2107
    %v2110 = vmul.f32 %v2089, %v2108
    %v2112 = vrot.slane %v2110, 4
    %v2113 = vsel %vm105, %v2112, 0
    %2115 = vmatprep.subr.mxu0 %v1180
    %2116 = vmatpush1.msra.mxu0 %v1179
    %2117 = vmatprep.subr.mxu0 %v1182
    %2118 = vmatpush1.msra.mxu0 %v1181
    %2119 = vmatprep.subr.mxu0 %v1184
    %2120 = vmatpush1.msra.mxu0 %v1183
    %2121 = vmatprep.subr.mxu0 %v1186
    %2122 = vmatpush1.msra.mxu0 %v1185
    %2123 = vmatprep.subr.mxu0 %v1188
    %2124 = vmatpush1.msra.mxu0 %v1187
    %2125 = vmatprep.subr.mxu0 %v1190
    %2126 = vmatpush1.msra.mxu0 %v1189
    %2127 = vmatprep.subr.mxu0 %v1192
    %2128 = vmatpush1.msra.mxu0 %v1191
    %2129 = vmatprep.subr.mxu0 %v1194
    %2130 = vmatpush1.msra.mxu0 %v1193
    %2131 = vmatprep.subr.mxu0 0.0
    %2132 = vmatpush1.msra.mxu0 0.0
    %2133 = vmatprep.subr.mxu0 0.0
    %2134 = vmatpush1.msra.mxu0 0.0
    %2135 = vmatprep.subr.mxu0 0.0
    %2136 = vmatpush1.msra.mxu0 0.0
    %2137 = vmatprep.subr.mxu0 0.0
    %2138 = vmatpush1.msra.mxu0 0.0
    %2139 = vmatprep.subr.mxu0 0.0
    %2140 = vmatpush1.msra.mxu0 0.0
    %2141 = vmatprep.subr.mxu0 0.0
    %2142 = vmatpush1.msra.mxu0 0.0
    %2143 = vmatprep.subr.mxu0 0.0
    %2144 = vmatpush1.msra.mxu0 0.0
    %2145 = vmatprep.subr.mxu0 0.0
    %2146 = vmatpush1.msra.mxu0 0.0
    %2147 = vmatprep.subr.mxu0 0.0
    %2148 = vmatpush1.msra.mxu0 0.0
    %2149 = vmatprep.subr.mxu0 0.0
    %2150 = vmatpush1.msra.mxu0 0.0
    %2151 = vmatprep.subr.mxu0 0.0
    %2152 = vmatpush1.msra.mxu0 0.0
    %2153 = vmatprep.subr.mxu0 0.0
    %2154 = vmatpush1.msra.mxu0 0.0
    %2155 = vmatprep.subr.mxu0 0.0
    %2156 = vmatpush1.msra.mxu0 0.0
    %2157 = vmatprep.subr.mxu0 0.0
    %2158 = vmatpush1.msra.mxu0 0.0
    %2159 = vmatprep.subr.mxu0 0.0
    %2160 = vmatpush1.msra.mxu0 0.0
    %2161 = vmatprep.subr.mxu0 0.0
    %2162 = vmatpush1.msra.mxu0 0.0
    %2163 = vmatprep.subr.mxu0 0.0
    %2164 = vmatpush1.msra.mxu0 0.0
    %2165 = vmatprep.subr.mxu0 0.0
    %2166 = vmatpush1.msra.mxu0 0.0
    %2167 = vmatprep.subr.mxu0 0.0
    %2168 = vmatpush1.msra.mxu0 0.0
    %2169 = vmatprep.subr.mxu0 0.0
    %2170 = vmatpush1.msra.mxu0 0.0
    %2171 = vmatprep.subr.mxu0 0.0
    %2172 = vmatpush1.msra.mxu0 0.0
    %2173 = vmatprep.subr.mxu0 0.0
    %2174 = vmatpush1.msra.mxu0 0.0
    %2175 = vmatprep.subr.mxu0 0.0
    %2176 = vmatpush1.msra.mxu0 0.0
    %2177 = vmatprep.subr.mxu0 0.0
    %2178 = vmatpush1.msra.mxu0 0.0
    %2179 = vmatprep.mubr.f32.mxu0 0.0
    %2180 = vmatmul.mubr.f32.gmra.mrb[0].mxu0 %v2113
    %v2181 = vpop.f32.mrb[0].mxu0
    %v2182 = vadd.f32 0.0, %v2181
    %v2183 = vpop.f32.mrb[0].mxu0
    %v2184 = vadd.f32 0.0, %v2183
    %2185 = vdwg.mxu0
    %v2188 = vrot.slane %v2182, 2
    %v2189 = vrot.slane %v2184, 2
    %v2192 = vadd.f32 %v1318, %v2188
    %v2193 = vadd.f32 %v1319, %v2189
    %v2194 = vxor.u32 %v2192, 2147483648
    %v2195 = vxor.u32 %v2193, 2147483648
    %v2196 = vmul.f32 %v2194, 1.442695
    %v2197 = vpow.pop %v2196
    %v2198 = vmul.f32 %v2195, 1.442695
    %v2199 = vpow.pop %v2198
    %v2200 = vadd.f32 %v2197, 1.0
    %v2201 = vadd.f32 %v2199, 1.0
    %v2202 = vrcp.pop %v2200
    %v2203 = vmul.f32 1.0, %v2202
    %v2204 = vrcp.pop %v2201
    %v2205 = vmul.f32 1.0, %v2204
    %v2206 = vtanh.pop %v2193
    %v2208 = vrot.slane %v2104, 6
    %v2210 = vmul.f32 %v2203, %v2208
    %2212 = vrot.lane.b32.xlu0 %v2206, 64
    %v2213 = vpop.permute.xlu0 %2212
    %v2215 = vmul.f32 %v2203, %v2213
    %2217 = vrot.lane.b32.xlu0 %v2215, 64
    %v2218 = vpop.permute.xlu0 %2217
    %v2220 = vadd.f32 %v2210, %v2218
    %v2221 = vtanh.pop %v2220
    %2223 = vrot.lane.b32.xlu0 %v2221, 64
    %v2224 = vpop.permute.xlu0 %2223
    %v2226 = vmul.f32 %v2205, %v2224
    %v2228 = vrot.slane %v2226, 6
    %v2230 = vsel %vm58, %v1422, %v2228
    %2231 = vst.msk [vmem:[#allocation3] sm:$0x3] %vm1131, %v2230
    %v2232 = vrot.slane %v2110, 2
    %v2234 = vsel %vm58, %v1537, %v2232
    %2235 = vst.msk [vmem:[#allocation3] sm:$0xc] %vm1136, %v2234
    %v2236 = vrot.slane %v1994, 6
    %v2238 = vsel %vm58, %v1653, %v2236
    %2239 = vst.msk [vmem:[#allocation3] sm:$0x30] %vm1141, %v2238
    %v2240 = vrot.slane %v1879, 2
    %v2242 = vsel %vm58, %v1769, %v2240
    %2243 = vst.msk [vmem:[#allocation3] sm:$0xc0] %vm1146, %v2242
    %v2245 = vsel %vm58, %v1879, %v1771
    %2246 = vst.msk [vmem:[#allocation3 + $0x8] sm:$0x3] %vm1131, %v2245
    %v2247 = vrot.slane %v1653, 2
    %v2249 = vsel %vm58, %v1994, %v2247
    %2250 = vst.msk [vmem:[#allocation3 + $0x8] sm:$0xc] %vm1136, %v2249
    %v2251 = vrot.slane %v1537, 6
    %v2253 = vsel %vm58, %v2110, %v2251
    %2254 = vst.msk [vmem:[#allocation3 + $0x8] sm:$0x30] %vm1141, %v2253
    %v2255 = vrot.slane %v1422, 2
    %v2257 = vsel %vm58, %v2226, %v2255
    %2258 = vst.msk [vmem:[#allocation3 + $0x8] sm:$0xc0] %vm1146, %v2257
    %v2259 = vld [vmem:[#allocation4 + $0x20] sm:$0xff]
    %v2260 = vld [vmem:[#allocation4 + $0x28] sm:$0xff]
    %v2261 = vld [vmem:[#allocation4 + $0x88] sm:$0xff]
    %v2262 = vld [vmem:[#allocation4 + $0x90] sm:$0xff]
    %v2263 = vld [vmem:[#allocation4 + $0xf0] sm:$0xff]
    %v2264 = vld [vmem:[#allocation4 + $0xf8] sm:$0xff]
    %v2265 = vld [vmem:[#allocation4 + $0x158] sm:$0xff]
    %v2266 = vld [vmem:[#allocation4 + $0x160] sm:$0xff]
    %v2267 = vld [vmem:[#allocation4 + $0x1c0] sm:$0xff]
    %v2268 = vld [vmem:[#allocation4 + $0x1c8] sm:$0xff]
    %v2269 = vld [vmem:[#allocation4 + $0x228] sm:$0xff]
    %v2270 = vld [vmem:[#allocation4 + $0x230] sm:$0xff]
    %v2271 = vld [vmem:[#allocation4 + $0x290] sm:$0xff]
    %v2272 = vld [vmem:[#allocation4 + $0x298] sm:$0xff]
    %v2273 = vld [vmem:[#allocation4 + $0x2f8] sm:$0xff]
    %v2274 = vld [vmem:[#allocation4 + $0x300] sm:$0xff]
    %v2275 = vld [vmem:[#allocation4 + $0x50] sm:$0xff]
    %v2276 = vld [vmem:[#allocation4 + $0x58] sm:$0xff]
    %v2277 = vld [vmem:[#allocation4 + $0xb8] sm:$0xff]
    %v2278 = vld [vmem:[#allocation4 + $0xc0] sm:$0xff]
    %v2279 = vld [vmem:[#allocation4 + $0x120] sm:$0xff]
    %v2280 = vld [vmem:[#allocation4 + $0x128] sm:$0xff]
    %v2281 = vld [vmem:[#allocation4 + $0x188] sm:$0xff]
    %v2282 = vld [vmem:[#allocation4 + $0x190] sm:$0xff]
    %v2283 = vld [vmem:[#allocation4 + $0x1f0] sm:$0xff]
    %v2284 = vld [vmem:[#allocation4 + $0x1f8] sm:$0xff]
    %v2285 = vld [vmem:[#allocation4 + $0x258] sm:$0xff]
    %v2286 = vld [vmem:[#allocation4 + $0x260] sm:$0xff]
    %v2287 = vld [vmem:[#allocation4 + $0x2c0] sm:$0xff]
    %v2288 = vld [vmem:[#allocation4 + $0x2c8] sm:$0xff]
    %v2289 = vld [vmem:[#allocation4 + $0x328] sm:$0xff]
    %v2290 = vld [vmem:[#allocation4 + $0x330] sm:$0xff]
    %v2291 = vld [vmem:[%s2 + $0x4] sm:$0x3]
    %v2292 = vld [vmem:[#allocation3] sm:$0xff]
    %v2293 = vld [vmem:[#allocation3 + $0x8] sm:$0xff]
    %v2295 = vlaneseq
    %v2296 = vshrl.u32 %v2295, 7
    %v2297 = vsub.s32 0, %v2296
    %v2298 = vrot.slane %v2291, %v2297
    %v2299 = vlaneseq
    %v2300 = vshrl.u32 %v2299, 7
    %v2301 = vsub.s32 1, %v2300
    %v2302 = vrot.slane %v2291, %v2301
    %v2306 = vsel %vm105, %v2292, 0
    %v2309 = vsel %vm105, %v2293, 0
    %2311 = vmatprep.subr.mxu0 %v2260
    %2312 = vmatpush1.msra.mxu0 %v2259
    %2313 = vmatprep.subr.mxu0 %v2262
    %2314 = vmatpush1.msra.mxu0 %v2261
    %2315 = vmatprep.subr.mxu0 %v2264
    %2316 = vmatpush1.msra.mxu0 %v2263
    %2317 = vmatprep.subr.mxu0 %v2266
    %2318 = vmatpush1.msra.mxu0 %v2265
    %2319 = vmatprep.subr.mxu0 %v2268
    %2320 = vmatpush1.msra.mxu0 %v2267
    %2321 = vmatprep.subr.mxu0 %v2270
    %2322 = vmatpush1.msra.mxu0 %v2269
    %2323 = vmatprep.subr.mxu0 %v2272
    %2324 = vmatpush1.msra.mxu0 %v2271
    %2325 = vmatprep.subr.mxu0 %v2274
    %2326 = vmatpush1.msra.mxu0 %v2273
    %2327 = vmatprep.subr.mxu0 0.0
    %2328 = vmatpush1.msra.mxu0 0.0
    %2329 = vmatprep.subr.mxu0 0.0
    %2330 = vmatpush1.msra.mxu0 0.0
    %2331 = vmatprep.subr.mxu0 0.0
    %2332 = vmatpush1.msra.mxu0 0.0
    %2333 = vmatprep.subr.mxu0 0.0
    %2334 = vmatpush1.msra.mxu0 0.0
    %2335 = vmatprep.subr.mxu0 0.0
    %2336 = vmatpush1.msra.mxu0 0.0
    %2337 = vmatprep.subr.mxu0 0.0
    %2338 = vmatpush1.msra.mxu0 0.0
    %2339 = vmatprep.subr.mxu0 0.0
    %2340 = vmatpush1.msra.mxu0 0.0
    %2341 = vmatprep.subr.mxu0 0.0
    %2342 = vmatpush1.msra.mxu0 0.0
    %2343 = vmatprep.subr.mxu0 0.0
    %2344 = vmatpush1.msra.mxu0 0.0
    %2345 = vmatprep.subr.mxu0 0.0
    %2346 = vmatpush1.msra.mxu0 0.0
    %2347 = vmatprep.subr.mxu0 0.0
    %2348 = vmatpush1.msra.mxu0 0.0
    %2349 = vmatprep.subr.mxu0 0.0
    %2350 = vmatpush1.msra.mxu0 0.0
    %2351 = vmatprep.subr.mxu0 0.0
    %2352 = vmatpush1.msra.mxu0 0.0
    %2353 = vmatprep.subr.mxu0 0.0
    %2354 = vmatpush1.msra.mxu0 0.0
    %2355 = vmatprep.subr.mxu0 0.0
    %2356 = vmatpush1.msra.mxu0 0.0
    %2357 = vmatprep.subr.mxu0 0.0
    %2358 = vmatpush1.msra.mxu0 0.0
    %2359 = vmatprep.subr.mxu0 0.0
    %2360 = vmatpush1.msra.mxu0 0.0
    %2361 = vmatprep.subr.mxu0 0.0
    %2362 = vmatpush1.msra.mxu0 0.0
    %2363 = vmatprep.subr.mxu0 0.0
    %2364 = vmatpush1.msra.mxu0 0.0
    %2365 = vmatprep.subr.mxu0 0.0
    %2366 = vmatpush1.msra.mxu0 0.0
    %2367 = vmatprep.subr.mxu0 0.0
    %2368 = vmatpush1.msra.mxu0 0.0
    %2369 = vmatprep.subr.mxu0 0.0
    %2370 = vmatpush1.msra.mxu0 0.0
    %2371 = vmatprep.subr.mxu0 0.0
    %2372 = vmatpush1.msra.mxu0 0.0
    %2373 = vmatprep.subr.mxu0 0.0
    %2374 = vmatpush1.msra.mxu0 0.0
    %2375 = vmatprep.mubr.f32.mxu0 0.0
    %2376 = vmatmul.mubr.f32.gmra.mrb[0].mxu0 %v2306
    %v2377 = vpop.f32.mrb[0].mxu0
    %v2378 = vadd.f32 %v2298, %v2377
    %v2379 = vpop.f32.mrb[0].mxu0
    %v2380 = vadd.f32 %v2302, %v2379
    %2381 = vmatprep.mubr.f32.mxu0 0.0
    %2382 = vmatmul.mubr.f32.gmra.mrb[0].mxu0 %v2309
    %v2383 = vpop.f32.mrb[0].mxu0
    %v2384 = vadd.f32 %v2298, %v2383
    %v2385 = vpop.f32.mrb[0].mxu0
    %v2386 = vadd.f32 %v2302, %v2385
    %2387 = vdwg.mxu0
    %v2390 = vrot.slane %v2384, 6
    %v2391 = vrot.slane %v2386, 6
    %v2394 = vsel %vm56, %v2378, %v2390
    %v2395 = vsel %vm57, %v2380, %v2391
    %v2396 = vrot.slane %v2384, 2
    %v2397 = vrot.slane %v2386, 2
    %v2400 = vsel %vm56, %v2378, %v2396
    %v2401 = vsel %vm57, %v2380, %v2397
    %v2404 = vrot.slane %v2378, 6
    %v2405 = vrot.slane %v2380, 6
    %v2408 = vsel %vm56, %v2384, %v2404
    %v2409 = vsel %vm57, %v2386, %v2405
    %v2410 = vrot.slane %v2378, 2
    %v2411 = vrot.slane %v2380, 2
    %v2414 = vsel %vm56, %v2384, %v2410
    %v2415 = vsel %vm57, %v2386, %v2411
    %2416 = vmatprep.subr.mxu0 %v2276
    %2417 = vmatpush1.msra.mxu0 %v2275
    %2418 = vmatprep.subr.mxu0 %v2278
    %2419 = vmatpush1.msra.mxu0 %v2277
    %2420 = vmatprep.subr.mxu0 %v2280
    %2421 = vmatpush1.msra.mxu0 %v2279
    %2422 = vmatprep.subr.mxu0 %v2282
    %2423 = vmatpush1.msra.mxu0 %v2281
    %2424 = vmatprep.subr.mxu0 %v2284
    %2425 = vmatpush1.msra.mxu0 %v2283
    %2426 = vmatprep.subr.mxu0 %v2286
    %2427 = vmatpush1.msra.mxu0 %v2285
    %2428 = vmatprep.subr.mxu0 %v2288
    %2429 = vmatpush1.msra.mxu0 %v2287
    %2430 = vmatprep.subr.mxu0 %v2290
    %2431 = vmatpush1.msra.mxu0 %v2289
    %2432 = vmatprep.subr.mxu0 0.0
    %2433 = vmatpush1.msra.mxu0 0.0
    %2434 = vmatprep.subr.mxu0 0.0
    %2435 = vmatpush1.msra.mxu0 0.0
    %2436 = vmatprep.subr.mxu0 0.0
    %2437 = vmatpush1.msra.mxu0 0.0
    %2438 = vmatprep.subr.mxu0 0.0
    %2439 = vmatpush1.msra.mxu0 0.0
    %2440 = vmatprep.subr.mxu0 0.0
    %2441 = vmatpush1.msra.mxu0 0.0
    %2442 = vmatprep.subr.mxu0 0.0
    %2443 = vmatpush1.msra.mxu0 0.0
    %2444 = vmatprep.subr.mxu0 0.0
    %2445 = vmatpush1.msra.mxu0 0.0
    %2446 = vmatprep.subr.mxu0 0.0
    %2447 = vmatpush1.msra.mxu0 0.0
    %2448 = vmatprep.subr.mxu0 0.0
    %2449 = vmatpush1.msra.mxu0 0.0
    %2450 = vmatprep.subr.mxu0 0.0
    %2451 = vmatpush1.msra.mxu0 0.0
    %2452 = vmatprep.subr.mxu0 0.0
    %2453 = vmatpush1.msra.mxu0 0.0
    %2454 = vmatprep.subr.mxu0 0.0
    %2455 = vmatpush1.msra.mxu0 0.0
    %2456 = vmatprep.subr.mxu0 0.0
    %2457 = vmatpush1.msra.mxu0 0.0
    %2458 = vmatprep.subr.mxu0 0.0
    %2459 = vmatpush1.msra.mxu0 0.0
    %2460 = vmatprep.subr.mxu0 0.0
    %2461 = vmatpush1.msra.mxu0 0.0
    %2462 = vmatprep.subr.mxu0 0.0
    %2463 = vmatpush1.msra.mxu0 0.0
    %2464 = vmatprep.subr.mxu0 0.0
    %2465 = vmatpush1.msra.mxu0 0.0
    %2466 = vmatprep.subr.mxu0 0.0
    %2467 = vmatpush1.msra.mxu0 0.0
    %2468 = vmatprep.subr.mxu0 0.0
    %2469 = vmatpush1.msra.mxu0 0.0
    %2470 = vmatprep.subr.mxu0 0.0
    %2471 = vmatpush1.msra.mxu0 0.0
    %2472 = vmatprep.subr.mxu0 0.0
    %2473 = vmatpush1.msra.mxu0 0.0
    %2474 = vmatprep.subr.mxu0 0.0
    %2475 = vmatpush1.msra.mxu0 0.0
    %2476 = vmatprep.subr.mxu0 0.0
    %2477 = vmatpush1.msra.mxu0 0.0
    %2478 = vmatprep.subr.mxu0 0.0
    %2479 = vmatpush1.msra.mxu0 0.0
    %2480 = vmatprep.mubr.f32.mxu0 0.0
    %2481 = vmatmul.mubr.f32.gmra.mrb[0].mxu0 %v218
    %v2482 = vpop.f32.mrb[0].mxu0
    %v2483 = vadd.f32 0.0, %v2482
    %v2484 = vpop.f32.mrb[0].mxu0
    %v2485 = vadd.f32 0.0, %v2484
    %2486 = vdwg.mxu0
    %v2487 = vadd.f32 %v2394, %v2483
    %v2488 = vadd.f32 %v2395, %v2485
    %v2489 = vxor.u32 %v2487, 2147483648
    %v2490 = vxor.u32 %v2488, 2147483648
    %v2491 = vmul.f32 %v2489, 1.442695
    %v2492 = vpow.pop %v2491
    %v2493 = vmul.f32 %v2490, 1.442695
    %v2494 = vpow.pop %v2493
    %v2495 = vadd.f32 %v2492, 1.0
    %v2496 = vadd.f32 %v2494, 1.0
    %v2497 = vrcp.pop %v2495
    %v2498 = vmul.f32 1.0, %v2497
    %v2499 = vrcp.pop %v2496
    %v2500 = vmul.f32 1.0, %v2499
    %v2501 = vtanh.pop %v2488
    %v2502 = vmul.f32 %v2498, 0.0
    %2504 = vrot.lane.b32.xlu0 %v2501, 64
    %v2505 = vpop.permute.xlu0 %2504
    %v2507 = vmul.f32 %v2498, %v2505
    %2509 = vrot.lane.b32.xlu0 %v2507, 64
    %v2510 = vpop.permute.xlu0 %2509
    %v2512 = vadd.f32 %v2502, %v2510
    %v2513 = vtanh.pop %v2512
    %2515 = vrot.lane.b32.xlu0 %v2513, 64
    %v2516 = vpop.permute.xlu0 %2515
    %v2518 = vmul.f32 %v2500, %v2516
    %v2520 = vsel %vm105, %v2518, 0
    %2522 = vmatprep.subr.mxu0 %v2276
    %2523 = vmatpush1.msra.mxu0 %v2275
    %2524 = vmatprep.subr.mxu0 %v2278
    %2525 = vmatpush1.msra.mxu0 %v2277
    %2526 = vmatprep.subr.mxu0 %v2280
    %2527 = vmatpush1.msra.mxu0 %v2279
    %2528 = vmatprep.subr.mxu0 %v2282
    %2529 = vmatpush1.msra.mxu0 %v2281
    %2530 = vmatprep.subr.mxu0 %v2284
    %2531 = vmatpush1.msra.mxu0 %v2283
    %2532 = vmatprep.subr.mxu0 %v2286
    %2533 = vmatpush1.msra.mxu0 %v2285
    %2534 = vmatprep.subr.mxu0 %v2288
    %2535 = vmatpush1.msra.mxu0 %v2287
    %2536 = vmatprep.subr.mxu0 %v2290
    %2537 = vmatpush1.msra.mxu0 %v2289
    %2538 = vmatprep.subr.mxu0 0.0
    %2539 = vmatpush1.msra.mxu0 0.0
    %2540 = vmatprep.subr.mxu0 0.0
    %2541 = vmatpush1.msra.mxu0 0.0
    %2542 = vmatprep.subr.mxu0 0.0
    %2543 = vmatpush1.msra.mxu0 0.0
    %2544 = vmatprep.subr.mxu0 0.0
    %2545 = vmatpush1.msra.mxu0 0.0
    %2546 = vmatprep.subr.mxu0 0.0
    %2547 = vmatpush1.msra.mxu0 0.0
    %2548 = vmatprep.subr.mxu0 0.0
    %2549 = vmatpush1.msra.mxu0 0.0
    %2550 = vmatprep.subr.mxu0 0.0
    %2551 = vmatpush1.msra.mxu0 0.0
    %2552 = vmatprep.subr.mxu0 0.0
    %2553 = vmatpush1.msra.mxu0 0.0
    %2554 = vmatprep.subr.mxu0 0.0
    %2555 = vmatpush1.msra.mxu0 0.0
    %2556 = vmatprep.subr.mxu0 0.0
    %2557 = vmatpush1.msra.mxu0 0.0
    %2558 = vmatprep.subr.mxu0 0.0
    %2559 = vmatpush1.msra.mxu0 0.0
    %2560 = vmatprep.subr.mxu0 0.0
    %2561 = vmatpush1.msra.mxu0 0.0
    %2562 = vmatprep.subr.mxu0 0.0
    %2563 = vmatpush1.msra.mxu0 0.0
    %2564 = vmatprep.subr.mxu0 0.0
    %2565 = vmatpush1.msra.mxu0 0.0
    %2566 = vmatprep.subr.mxu0 0.0
    %2567 = vmatpush1.msra.mxu0 0.0
    %2568 = vmatprep.subr.mxu0 0.0
    %2569 = vmatpush1.msra.mxu0 0.0
    %2570 = vmatprep.subr.mxu0 0.0
    %2571 = vmatpush1.msra.mxu0 0.0
    %2572 = vmatprep.subr.mxu0 0.0
    %2573 = vmatpush1.msra.mxu0 0.0
    %2574 = vmatprep.subr.mxu0 0.0
    %2575 = vmatpush1.msra.mxu0 0.0
    %2576 = vmatprep.subr.mxu0 0.0
    %2577 = vmatpush1.msra.mxu0 0.0
    %2578 = vmatprep.subr.mxu0 0.0
    %2579 = vmatpush1.msra.mxu0 0.0
    %2580 = vmatprep.subr.mxu0 0.0
    %2581 = vmatpush1.msra.mxu0 0.0
    %2582 = vmatprep.subr.mxu0 0.0
    %2583 = vmatpush1.msra.mxu0 0.0
    %2584 = vmatprep.subr.mxu0 0.0
    %2585 = vmatpush1.msra.mxu0 0.0
    %2586 = vmatprep.mubr.f32.mxu0 0.0
    %2587 = vmatmul.mubr.f32.gmra.mrb[0].mxu0 %v2520
    %v2588 = vpop.f32.mrb[0].mxu0
    %v2589 = vadd.f32 0.0, %v2588
    %v2590 = vpop.f32.mrb[0].mxu0
    %v2591 = vadd.f32 0.0, %v2590
    %2592 = vdwg.mxu0
    %v2595 = vrot.slane %v2589, 6
    %v2596 = vrot.slane %v2591, 6
    %v2599 = vadd.f32 %v2400, %v2595
    %v2600 = vadd.f32 %v2401, %v2596
    %v2601 = vxor.u32 %v2599, 2147483648
    %v2602 = vxor.u32 %v2600, 2147483648
    %v2603 = vmul.f32 %v2601, 1.442695
    %v2604 = vpow.pop %v2603
    %v2605 = vmul.f32 %v2602, 1.442695
    %v2606 = vpow.pop %v2605
    %v2607 = vadd.f32 %v2604, 1.0
    %v2608 = vadd.f32 %v2606, 1.0
    %v2609 = vrcp.pop %v2607
    %v2610 = vmul.f32 1.0, %v2609
    %v2611 = vrcp.pop %v2608
    %v2612 = vmul.f32 1.0, %v2611
    %v2613 = vtanh.pop %v2600
    %v2615 = vrot.slane %v2512, 6
    %v2617 = vmul.f32 %v2610, %v2615
    %2619 = vrot.lane.b32.xlu0 %v2613, 64
    %v2620 = vpop.permute.xlu0 %2619
    %v2622 = vmul.f32 %v2610, %v2620
    %2624 = vrot.lane.b32.xlu0 %v2622, 64
    %v2625 = vpop.permute.xlu0 %2624
    %v2627 = vadd.f32 %v2617, %v2625
    %v2628 = vtanh.pop %v2627
    %2630 = vrot.lane.b32.xlu0 %v2628, 64
    %v2631 = vpop.permute.xlu0 %2630
    %v2633 = vmul.f32 %v2612, %v2631
    %v2635 = vrot.slane %v2633, 2
    %v2636 = vsel %vm105, %v2635, 0
    %2638 = vmatprep.subr.mxu0 %v2276
    %2639 = vmatpush1.msra.mxu0 %v2275
    %2640 = vmatprep.subr.mxu0 %v2278
    %2641 = vmatpush1.msra.mxu0 %v2277
    %2642 = vmatprep.subr.mxu0 %v2280
    %2643 = vmatpush1.msra.mxu0 %v2279
    %2644 = vmatprep.subr.mxu0 %v2282
    %2645 = vmatpush1.msra.mxu0 %v2281
    %2646 = vmatprep.subr.mxu0 %v2284
    %2647 = vmatpush1.msra.mxu0 %v2283
    %2648 = vmatprep.subr.mxu0 %v2286
    %2649 = vmatpush1.msra.mxu0 %v2285
    %2650 = vmatprep.subr.mxu0 %v2288
    %2651 = vmatpush1.msra.mxu0 %v2287
    %2652 = vmatprep.subr.mxu0 %v2290
    %2653 = vmatpush1.msra.mxu0 %v2289
    %2654 = vmatprep.subr.mxu0 0.0
    %2655 = vmatpush1.msra.mxu0 0.0
    %2656 = vmatprep.subr.mxu0 0.0
    %2657 = vmatpush1.msra.mxu0 0.0
    %2658 = vmatprep.subr.mxu0 0.0
    %2659 = vmatpush1.msra.mxu0 0.0
    %2660 = vmatprep.subr.mxu0 0.0
    %2661 = vmatpush1.msra.mxu0 0.0
    %2662 = vmatprep.subr.mxu0 0.0
    %2663 = vmatpush1.msra.mxu0 0.0
    %2664 = vmatprep.subr.mxu0 0.0
    %2665 = vmatpush1.msra.mxu0 0.0
    %2666 = vmatprep.subr.mxu0 0.0
    %2667 = vmatpush1.msra.mxu0 0.0
    %2668 = vmatprep.subr.mxu0 0.0
    %2669 = vmatpush1.msra.mxu0 0.0
    %2670 = vmatprep.subr.mxu0 0.0
    %2671 = vmatpush1.msra.mxu0 0.0
    %2672 = vmatprep.subr.mxu0 0.0
    %2673 = vmatpush1.msra.mxu0 0.0
    %2674 = vmatprep.subr.mxu0 0.0
    %2675 = vmatpush1.msra.mxu0 0.0
    %2676 = vmatprep.subr.mxu0 0.0
    %2677 = vmatpush1.msra.mxu0 0.0
    %2678 = vmatprep.subr.mxu0 0.0
    %2679 = vmatpush1.msra.mxu0 0.0
    %2680 = vmatprep.subr.mxu0 0.0
    %2681 = vmatpush1.msra.mxu0 0.0
    %2682 = vmatprep.subr.mxu0 0.0
    %2683 = vmatpush1.msra.mxu0 0.0
    %2684 = vmatprep.subr.mxu0 0.0
    %2685 = vmatpush1.msra.mxu0 0.0
    %2686 = vmatprep.subr.mxu0 0.0
    %2687 = vmatpush1.msra.mxu0 0.0
    %2688 = vmatprep.subr.mxu0 0.0
    %2689 = vmatpush1.msra.mxu0 0.0
    %2690 = vmatprep.subr.mxu0 0.0
    %2691 = vmatpush1.msra.mxu0 0.0
    %2692 = vmatprep.subr.mxu0 0.0
    %2693 = vmatpush1.msra.mxu0 0.0
    %2694 = vmatprep.subr.mxu0 0.0
    %2695 = vmatpush1.msra.mxu0 0.0
    %2696 = vmatprep.subr.mxu0 0.0
    %2697 = vmatpush1.msra.mxu0 0.0
    %2698 = vmatprep.subr.mxu0 0.0
    %2699 = vmatpush1.msra.mxu0 0.0
    %2700 = vmatprep.subr.mxu0 0.0
    %2701 = vmatpush1.msra.mxu0 0.0
    %2702 = vmatprep.mubr.f32.mxu0 0.0
    %2703 = vmatmul.mubr.f32.gmra.mrb[0].mxu0 %v2636
    %v2704 = vpop.f32.mrb[0].mxu0
    %v2705 = vadd.f32 0.0, %v2704
    %v2706 = vpop.f32.mrb[0].mxu0
    %v2707 = vadd.f32 0.0, %v2706
    %2708 = vdwg.mxu0
    %v2711 = vrot.slane %v2705, 4
    %v2712 = vrot.slane %v2707, 4
    %v2715 = vadd.f32 %v2394, %v2711
    %v2716 = vadd.f32 %v2395, %v2712
    %v2717 = vxor.u32 %v2715, 2147483648
    %v2718 = vxor.u32 %v2716, 2147483648
    %v2719 = vmul.f32 %v2717, 1.442695
    %v2720 = vpow.pop %v2719
    %v2721 = vmul.f32 %v2718, 1.442695
    %v2722 = vpow.pop %v2721
    %v2723 = vadd.f32 %v2720, 1.0
    %v2724 = vadd.f32 %v2722, 1.0
    %v2725 = vrcp.pop %v2723
    %v2726 = vmul.f32 1.0, %v2725
    %v2727 = vrcp.pop %v2724
    %v2728 = vmul.f32 1.0, %v2727
    %v2729 = vtanh.pop %v2716
    %v2731 = vrot.slane %v2627, 6
    %v2733 = vmul.f32 %v2726, %v2731
    %2735 = vrot.lane.b32.xlu0 %v2729, 64
    %v2736 = vpop.permute.xlu0 %2735
    %v2738 = vmul.f32 %v2726, %v2736
    %2740 = vrot.lane.b32.xlu0 %v2738, 64
    %v2741 = vpop.permute.xlu0 %2740
    %v2743 = vadd.f32 %v2733, %v2741
    %v2744 = vtanh.pop %v2743
    %2746 = vrot.lane.b32.xlu0 %v2744, 64
    %v2747 = vpop.permute.xlu0 %2746
    %v2749 = vmul.f32 %v2728, %v2747
    %v2751 = vrot.slane %v2749, 4
    %v2752 = vsel %vm105, %v2751, 0
    %2754 = vmatprep.subr.mxu0 %v2276
    %2755 = vmatpush1.msra.mxu0 %v2275
    %2756 = vmatprep.subr.mxu0 %v2278
    %2757 = vmatpush1.msra.mxu0 %v2277
    %2758 = vmatprep.subr.mxu0 %v2280
    %2759 = vmatpush1.msra.mxu0 %v2279
    %2760 = vmatprep.subr.mxu0 %v2282
    %2761 = vmatpush1.msra.mxu0 %v2281
    %2762 = vmatprep.subr.mxu0 %v2284
    %2763 = vmatpush1.msra.mxu0 %v2283
    %2764 = vmatprep.subr.mxu0 %v2286
    %2765 = vmatpush1.msra.mxu0 %v2285
    %2766 = vmatprep.subr.mxu0 %v2288
    %2767 = vmatpush1.msra.mxu0 %v2287
    %2768 = vmatprep.subr.mxu0 %v2290
    %2769 = vmatpush1.msra.mxu0 %v2289
    %2770 = vmatprep.subr.mxu0 0.0
    %2771 = vmatpush1.msra.mxu0 0.0
    %2772 = vmatprep.subr.mxu0 0.0
    %2773 = vmatpush1.msra.mxu0 0.0
    %2774 = vmatprep.subr.mxu0 0.0
    %2775 = vmatpush1.msra.mxu0 0.0
    %2776 = vmatprep.subr.mxu0 0.0
    %2777 = vmatpush1.msra.mxu0 0.0
    %2778 = vmatprep.subr.mxu0 0.0
    %2779 = vmatpush1.msra.mxu0 0.0
    %2780 = vmatprep.subr.mxu0 0.0
    %2781 = vmatpush1.msra.mxu0 0.0
    %2782 = vmatprep.subr.mxu0 0.0
    %2783 = vmatpush1.msra.mxu0 0.0
    %2784 = vmatprep.subr.mxu0 0.0
    %2785 = vmatpush1.msra.mxu0 0.0
    %2786 = vmatprep.subr.mxu0 0.0
    %2787 = vmatpush1.msra.mxu0 0.0
    %2788 = vmatprep.subr.mxu0 0.0
    %2789 = vmatpush1.msra.mxu0 0.0
    %2790 = vmatprep.subr.mxu0 0.0
    %2791 = vmatpush1.msra.mxu0 0.0
    %2792 = vmatprep.subr.mxu0 0.0
    %2793 = vmatpush1.msra.mxu0 0.0
    %2794 = vmatprep.subr.mxu0 0.0
    %2795 = vmatpush1.msra.mxu0 0.0
    %2796 = vmatprep.subr.mxu0 0.0
    %2797 = vmatpush1.msra.mxu0 0.0
    %2798 = vmatprep.subr.mxu0 0.0
    %2799 = vmatpush1.msra.mxu0 0.0
    %2800 = vmatprep.subr.mxu0 0.0
    %2801 = vmatpush1.msra.mxu0 0.0
    %2802 = vmatprep.subr.mxu0 0.0
    %2803 = vmatpush1.msra.mxu0 0.0
    %2804 = vmatprep.subr.mxu0 0.0
    %2805 = vmatpush1.msra.mxu0 0.0
    %2806 = vmatprep.subr.mxu0 0.0
    %2807 = vmatpush1.msra.mxu0 0.0
    %2808 = vmatprep.subr.mxu0 0.0
    %2809 = vmatpush1.msra.mxu0 0.0
    %2810 = vmatprep.subr.mxu0 0.0
    %2811 = vmatpush1.msra.mxu0 0.0
    %2812 = vmatprep.subr.mxu0 0.0
    %2813 = vmatpush1.msra.mxu0 0.0
    %2814 = vmatprep.subr.mxu0 0.0
    %2815 = vmatpush1.msra.mxu0 0.0
    %2816 = vmatprep.subr.mxu0 0.0
    %2817 = vmatpush1.msra.mxu0 0.0
    %2818 = vmatprep.mubr.f32.mxu0 0.0
    %2819 = vmatmul.mubr.f32.gmra.mrb[0].mxu0 %v2752
    %v2820 = vpop.f32.mrb[0].mxu0
    %v2821 = vadd.f32 0.0, %v2820
    %v2822 = vpop.f32.mrb[0].mxu0
    %v2823 = vadd.f32 0.0, %v2822
    %2824 = vdwg.mxu0
    %v2827 = vrot.slane %v2821, 2
    %v2828 = vrot.slane %v2823, 2
    %v2831 = vadd.f32 %v2400, %v2827
    %v2832 = vadd.f32 %v2401, %v2828
    %v2833 = vxor.u32 %v2831, 2147483648
    %v2834 = vxor.u32 %v2832, 2147483648
    %v2835 = vmul.f32 %v2833, 1.442695
    %v2836 = vpow.pop %v2835
    %v2837 = vmul.f32 %v2834, 1.442695
    %v2838 = vpow.pop %v2837
    %v2839 = vadd.f32 %v2836, 1.0
    %v2840 = vadd.f32 %v2838, 1.0
    %v2841 = vrcp.pop %v2839
    %v2842 = vmul.f32 1.0, %v2841
    %v2843 = vrcp.pop %v2840
    %v2844 = vmul.f32 1.0, %v2843
    %v2845 = vtanh.pop %v2832
    %v2847 = vrot.slane %v2743, 6
    %v2849 = vmul.f32 %v2842, %v2847
    %2851 = vrot.lane.b32.xlu0 %v2845, 64
    %v2852 = vpop.permute.xlu0 %2851
    %v2854 = vmul.f32 %v2842, %v2852
    %2856 = vrot.lane.b32.xlu0 %v2854, 64
    %v2857 = vpop.permute.xlu0 %2856
    %v2859 = vadd.f32 %v2849, %v2857
    %v2860 = vtanh.pop %v2859
    %2862 = vrot.lane.b32.xlu0 %v2860, 64
    %v2863 = vpop.permute.xlu0 %2862
    %v2865 = vmul.f32 %v2844, %v2863
    %v2867 = vrot.slane %v2865, 6
    %v2868 = vsel %vm105, %v2867, 0
    %2870 = vmatprep.subr.mxu0 %v2276
    %2871 = vmatpush1.msra.mxu0 %v2275
    %2872 = vmatprep.subr.mxu0 %v2278
    %2873 = vmatpush1.msra.mxu0 %v2277
    %2874 = vmatprep.subr.mxu0 %v2280
    %2875 = vmatpush1.msra.mxu0 %v2279
    %2876 = vmatprep.subr.mxu0 %v2282
    %2877 = vmatpush1.msra.mxu0 %v2281
    %2878 = vmatprep.subr.mxu0 %v2284
    %2879 = vmatpush1.msra.mxu0 %v2283
    %2880 = vmatprep.subr.mxu0 %v2286
    %2881 = vmatpush1.msra.mxu0 %v2285
    %2882 = vmatprep.subr.mxu0 %v2288
    %2883 = vmatpush1.msra.mxu0 %v2287
    %2884 = vmatprep.subr.mxu0 %v2290
    %2885 = vmatpush1.msra.mxu0 %v2289
    %2886 = vmatprep.subr.mxu0 0.0
    %2887 = vmatpush1.msra.mxu0 0.0
    %2888 = vmatprep.subr.mxu0 0.0
    %2889 = vmatpush1.msra.mxu0 0.0
    %2890 = vmatprep.subr.mxu0 0.0
    %2891 = vmatpush1.msra.mxu0 0.0
    %2892 = vmatprep.subr.mxu0 0.0
    %2893 = vmatpush1.msra.mxu0 0.0
    %2894 = vmatprep.subr.mxu0 0.0
    %2895 = vmatpush1.msra.mxu0 0.0
    %2896 = vmatprep.subr.mxu0 0.0
    %2897 = vmatpush1.msra.mxu0 0.0
    %2898 = vmatprep.subr.mxu0 0.0
    %2899 = vmatpush1.msra.mxu0 0.0
    %2900 = vmatprep.subr.mxu0 0.0
    %2901 = vmatpush1.msra.mxu0 0.0
    %2902 = vmatprep.subr.mxu0 0.0
    %2903 = vmatpush1.msra.mxu0 0.0
    %2904 = vmatprep.subr.mxu0 0.0
    %2905 = vmatpush1.msra.mxu0 0.0
    %2906 = vmatprep.subr.mxu0 0.0
    %2907 = vmatpush1.msra.mxu0 0.0
    %2908 = vmatprep.subr.mxu0 0.0
    %2909 = vmatpush1.msra.mxu0 0.0
    %2910 = vmatprep.subr.mxu0 0.0
    %2911 = vmatpush1.msra.mxu0 0.0
    %2912 = vmatprep.subr.mxu0 0.0
    %2913 = vmatpush1.msra.mxu0 0.0
    %2914 = vmatprep.subr.mxu0 0.0
    %2915 = vmatpush1.msra.mxu0 0.0
    %2916 = vmatprep.subr.mxu0 0.0
    %2917 = vmatpush1.msra.mxu0 0.0
    %2918 = vmatprep.subr.mxu0 0.0
    %2919 = vmatpush1.msra.mxu0 0.0
    %2920 = vmatprep.subr.mxu0 0.0
    %2921 = vmatpush1.msra.mxu0 0.0
    %2922 = vmatprep.subr.mxu0 0.0
    %2923 = vmatpush1.msra.mxu0 0.0
    %2924 = vmatprep.subr.mxu0 0.0
    %2925 = vmatpush1.msra.mxu0 0.0
    %2926 = vmatprep.subr.mxu0 0.0
    %2927 = vmatpush1.msra.mxu0 0.0
    %2928 = vmatprep.subr.mxu0 0.0
    %2929 = vmatpush1.msra.mxu0 0.0
    %2930 = vmatprep.subr.mxu0 0.0
    %2931 = vmatpush1.msra.mxu0 0.0
    %2932 = vmatprep.subr.mxu0 0.0
    %2933 = vmatpush1.msra.mxu0 0.0
    %2934 = vmatprep.mubr.f32.mxu0 0.0
    %2935 = vmatmul.mubr.f32.gmra.mrb[0].mxu0 %v2868
    %v2936 = vpop.f32.mrb[0].mxu0
    %v2937 = vadd.f32 0.0, %v2936
    %v2938 = vpop.f32.mrb[0].mxu0
    %v2939 = vadd.f32 0.0, %v2938
    %2940 = vdwg.mxu0
    %v2941 = vadd.f32 %v2408, %v2937
    %v2942 = vadd.f32 %v2409, %v2939
    %v2943 = vxor.u32 %v2941, 2147483648
    %v2944 = vxor.u32 %v2942, 2147483648
    %v2945 = vmul.f32 %v2943, 1.442695
    %v2946 = vpow.pop %v2945
    %v2947 = vmul.f32 %v2944, 1.442695
    %v2948 = vpow.pop %v2947
    %v2949 = vadd.f32 %v2946, 1.0
    %v2950 = vadd.f32 %v2948, 1.0
    %v2951 = vrcp.pop %v2949
    %v2952 = vmul.f32 1.0, %v2951
    %v2953 = vrcp.pop %v2950
    %v2954 = vmul.f32 1.0, %v2953
    %v2955 = vtanh.pop %v2942
    %v2957 = vrot.slane %v2859, 6
    %v2959 = vmul.f32 %v2952, %v2957
    %2961 = vrot.lane.b32.xlu0 %v2955, 64
    %v2962 = vpop.permute.xlu0 %2961
    %v2964 = vmul.f32 %v2952, %v2962
    %2966 = vrot.lane.b32.xlu0 %v2964, 64
    %v2967 = vpop.permute.xlu0 %2966
    %v2969 = vadd.f32 %v2959, %v2967
    %v2970 = vtanh.pop %v2969
    %2972 = vrot.lane.b32.xlu0 %v2970, 64
    %v2973 = vpop.permute.xlu0 %2972
    %v2975 = vmul.f32 %v2954, %v2973
    %v2977 = vsel %vm105, %v2975, 0
    %2979 = vmatprep.subr.mxu0 %v2276
    %2980 = vmatpush1.msra.mxu0 %v2275
    %2981 = vmatprep.subr.mxu0 %v2278
    %2982 = vmatpush1.msra.mxu0 %v2277
    %2983 = vmatprep.subr.mxu0 %v2280
    %2984 = vmatpush1.msra.mxu0 %v2279
    %2985 = vmatprep.subr.mxu0 %v2282
    %2986 = vmatpush1.msra.mxu0 %v2281
    %2987 = vmatprep.subr.mxu0 %v2284
    %2988 = vmatpush1.msra.mxu0 %v2283
    %2989 = vmatprep.subr.mxu0 %v2286
    %2990 = vmatpush1.msra.mxu0 %v2285
    %2991 = vmatprep.subr.mxu0 %v2288
    %2992 = vmatpush1.msra.mxu0 %v2287
    %2993 = vmatprep.subr.mxu0 %v2290
    %2994 = vmatpush1.msra.mxu0 %v2289
    %2995 = vmatprep.subr.mxu0 0.0
    %2996 = vmatpush1.msra.mxu0 0.0
    %2997 = vmatprep.subr.mxu0 0.0
    %2998 = vmatpush1.msra.mxu0 0.0
    %2999 = vmatprep.subr.mxu0 0.0
    %3000 = vmatpush1.msra.mxu0 0.0
    %3001 = vmatprep.subr.mxu0 0.0
    %3002 = vmatpush1.msra.mxu0 0.0
    %3003 = vmatprep.subr.mxu0 0.0
    %3004 = vmatpush1.msra.mxu0 0.0
    %3005 = vmatprep.subr.mxu0 0.0
    %3006 = vmatpush1.msra.mxu0 0.0
    %3007 = vmatprep.subr.mxu0 0.0
    %3008 = vmatpush1.msra.mxu0 0.0
    %3009 = vmatprep.subr.mxu0 0.0
    %3010 = vmatpush1.msra.mxu0 0.0
    %3011 = vmatprep.subr.mxu0 0.0
    %3012 = vmatpush1.msra.mxu0 0.0
    %3013 = vmatprep.subr.mxu0 0.0
    %3014 = vmatpush1.msra.mxu0 0.0
    %3015 = vmatprep.subr.mxu0 0.0
    %3016 = vmatpush1.msra.mxu0 0.0
    %3017 = vmatprep.subr.mxu0 0.0
    %3018 = vmatpush1.msra.mxu0 0.0
    %3019 = vmatprep.subr.mxu0 0.0
    %3020 = vmatpush1.msra.mxu0 0.0
    %3021 = vmatprep.subr.mxu0 0.0
    %3022 = vmatpush1.msra.mxu0 0.0
    %3023 = vmatprep.subr.mxu0 0.0
    %3024 = vmatpush1.msra.mxu0 0.0
    %3025 = vmatprep.subr.mxu0 0.0
    %3026 = vmatpush1.msra.mxu0 0.0
    %3027 = vmatprep.subr.mxu0 0.0
    %3028 = vmatpush1.msra.mxu0 0.0
    %3029 = vmatprep.subr.mxu0 0.0
    %3030 = vmatpush1.msra.mxu0 0.0
    %3031 = vmatprep.subr.mxu0 0.0
    %3032 = vmatpush1.msra.mxu0 0.0
    %3033 = vmatprep.subr.mxu0 0.0
    %3034 = vmatpush1.msra.mxu0 0.0
    %3035 = vmatprep.subr.mxu0 0.0
    %3036 = vmatpush1.msra.mxu0 0.0
    %3037 = vmatprep.subr.mxu0 0.0
    %3038 = vmatpush1.msra.mxu0 0.0
    %3039 = vmatprep.subr.mxu0 0.0
    %3040 = vmatpush1.msra.mxu0 0.0
    %3041 = vmatprep.subr.mxu0 0.0
    %3042 = vmatpush1.msra.mxu0 0.0
    %3043 = vmatprep.mubr.f32.mxu0 0.0
    %3044 = vmatmul.mubr.f32.gmra.mrb[0].mxu0 %v2977
    %v3045 = vpop.f32.mrb[0].mxu0
    %v3046 = vadd.f32 0.0, %v3045
    %v3047 = vpop.f32.mrb[0].mxu0
    %v3048 = vadd.f32 0.0, %v3047
    %3049 = vdwg.mxu0
    %v3052 = vrot.slane %v3046, 6
    %v3053 = vrot.slane %v3048, 6
    %v3056 = vadd.f32 %v2414, %v3052
    %v3057 = vadd.f32 %v2415, %v3053
    %v3058 = vxor.u32 %v3056, 2147483648
    %v3059 = vxor.u32 %v3057, 2147483648
    %v3060 = vmul.f32 %v3058, 1.442695
    %v3061 = vpow.pop %v3060
    %v3062 = vmul.f32 %v3059, 1.442695
    %v3063 = vpow.pop %v3062
    %v3064 = vadd.f32 %v3061, 1.0
    %v3065 = vadd.f32 %v3063, 1.0
    %v3066 = vrcp.pop %v3064
    %v3067 = vmul.f32 1.0, %v3066
    %v3068 = vrcp.pop %v3065
    %v3069 = vmul.f32 1.0, %v3068
    %v3070 = vtanh.pop %v3057
    %v3072 = vrot.slane %v2969, 6
    %v3074 = vmul.f32 %v3067, %v3072
    %3076 = vrot.lane.b32.xlu0 %v3070, 64
    %v3077 = vpop.permute.xlu0 %3076
    %v3079 = vmul.f32 %v3067, %v3077
    %3081 = vrot.lane.b32.xlu0 %v3079, 64
    %v3082 = vpop.permute.xlu0 %3081
    %v3084 = vadd.f32 %v3074, %v3082
    %v3085 = vtanh.pop %v3084
    %3087 = vrot.lane.b32.xlu0 %v3085, 64
    %v3088 = vpop.permute.xlu0 %3087
    %v3090 = vmul.f32 %v3069, %v3088
    %v3092 = vrot.slane %v3090, 2
    %v3093 = vsel %vm105, %v3092, 0
    %3095 = vmatprep.subr.mxu0 %v2276
    %3096 = vmatpush1.msra.mxu0 %v2275
    %3097 = vmatprep.subr.mxu0 %v2278
    %3098 = vmatpush1.msra.mxu0 %v2277
    %3099 = vmatprep.subr.mxu0 %v2280
    %3100 = vmatpush1.msra.mxu0 %v2279
    %3101 = vmatprep.subr.mxu0 %v2282
    %3102 = vmatpush1.msra.mxu0 %v2281
    %3103 = vmatprep.subr.mxu0 %v2284
    %3104 = vmatpush1.msra.mxu0 %v2283
    %3105 = vmatprep.subr.mxu0 %v2286
    %3106 = vmatpush1.msra.mxu0 %v2285
    %3107 = vmatprep.subr.mxu0 %v2288
    %3108 = vmatpush1.msra.mxu0 %v2287
    %3109 = vmatprep.subr.mxu0 %v2290
    %3110 = vmatpush1.msra.mxu0 %v2289
    %3111 = vmatprep.subr.mxu0 0.0
    %3112 = vmatpush1.msra.mxu0 0.0
    %3113 = vmatprep.subr.mxu0 0.0
    %3114 = vmatpush1.msra.mxu0 0.0
    %3115 = vmatprep.subr.mxu0 0.0
    %3116 = vmatpush1.msra.mxu0 0.0
    %3117 = vmatprep.subr.mxu0 0.0
    %3118 = vmatpush1.msra.mxu0 0.0
    %3119 = vmatprep.subr.mxu0 0.0
    %3120 = vmatpush1.msra.mxu0 0.0
    %3121 = vmatprep.subr.mxu0 0.0
    %3122 = vmatpush1.msra.mxu0 0.0
    %3123 = vmatprep.subr.mxu0 0.0
    %3124 = vmatpush1.msra.mxu0 0.0
    %3125 = vmatprep.subr.mxu0 0.0
    %3126 = vmatpush1.msra.mxu0 0.0
    %3127 = vmatprep.subr.mxu0 0.0
    %3128 = vmatpush1.msra.mxu0 0.0
    %3129 = vmatprep.subr.mxu0 0.0
    %3130 = vmatpush1.msra.mxu0 0.0
    %3131 = vmatprep.subr.mxu0 0.0
    %3132 = vmatpush1.msra.mxu0 0.0
    %3133 = vmatprep.subr.mxu0 0.0
    %3134 = vmatpush1.msra.mxu0 0.0
    %3135 = vmatprep.subr.mxu0 0.0
    %3136 = vmatpush1.msra.mxu0 0.0
    %3137 = vmatprep.subr.mxu0 0.0
    %3138 = vmatpush1.msra.mxu0 0.0
    %3139 = vmatprep.subr.mxu0 0.0
    %3140 = vmatpush1.msra.mxu0 0.0
    %3141 = vmatprep.subr.mxu0 0.0
    %3142 = vmatpush1.msra.mxu0 0.0
    %3143 = vmatprep.subr.mxu0 0.0
    %3144 = vmatpush1.msra.mxu0 0.0
    %3145 = vmatprep.subr.mxu0 0.0
    %3146 = vmatpush1.msra.mxu0 0.0
    %3147 = vmatprep.subr.mxu0 0.0
    %3148 = vmatpush1.msra.mxu0 0.0
    %3149 = vmatprep.subr.mxu0 0.0
    %3150 = vmatpush1.msra.mxu0 0.0
    %3151 = vmatprep.subr.mxu0 0.0
    %3152 = vmatpush1.msra.mxu0 0.0
    %3153 = vmatprep.subr.mxu0 0.0
    %3154 = vmatpush1.msra.mxu0 0.0
    %3155 = vmatprep.subr.mxu0 0.0
    %3156 = vmatpush1.msra.mxu0 0.0
    %3157 = vmatprep.subr.mxu0 0.0
    %3158 = vmatpush1.msra.mxu0 0.0
    %3159 = vmatprep.mubr.f32.mxu0 0.0
    %3160 = vmatmul.mubr.f32.gmra.mrb[0].mxu0 %v3093
    %v3161 = vpop.f32.mrb[0].mxu0
    %v3162 = vadd.f32 0.0, %v3161
    %v3163 = vpop.f32.mrb[0].mxu0
    %v3164 = vadd.f32 0.0, %v3163
    %3165 = vdwg.mxu0
    %v3168 = vrot.slane %v3162, 4
    %v3169 = vrot.slane %v3164, 4
    %v3172 = vadd.f32 %v2408, %v3168
    %v3173 = vadd.f32 %v2409, %v3169
    %v3174 = vxor.u32 %v3172, 2147483648
    %v3175 = vxor.u32 %v3173, 2147483648
    %v3176 = vmul.f32 %v3174, 1.442695
    %v3177 = vpow.pop %v3176
    %v3178 = vmul.f32 %v3175, 1.442695
    %v3179 = vpow.pop %v3178
    %v3180 = vadd.f32 %v3177, 1.0
    %v3181 = vadd.f32 %v3179, 1.0
    %v3182 = vrcp.pop %v3180
    %v3183 = vmul.f32 1.0, %v3182
    %v3184 = vrcp.pop %v3181
    %v3185 = vmul.f32 1.0, %v3184
    %v3186 = vtanh.pop %v3173
    %v3188 = vrot.slane %v3084, 6
    %v3190 = vmul.f32 %v3183, %v3188
    %3192 = vrot.lane.b32.xlu0 %v3186, 64
    %v3193 = vpop.permute.xlu0 %3192
    %v3195 = vmul.f32 %v3183, %v3193
    %3197 = vrot.lane.b32.xlu0 %v3195, 64
    %v3198 = vpop.permute.xlu0 %3197
    %v3200 = vadd.f32 %v3190, %v3198
    %v3201 = vtanh.pop %v3200
    %3203 = vrot.lane.b32.xlu0 %v3201, 64
    %v3204 = vpop.permute.xlu0 %3203
    %v3206 = vmul.f32 %v3185, %v3204
    %v3208 = vrot.slane %v3206, 4
    %v3209 = vsel %vm105, %v3208, 0
    %3211 = vmatprep.subr.mxu0 %v2276
    %3212 = vmatpush1.msra.mxu0 %v2275
    %3213 = vmatprep.subr.mxu0 %v2278
    %3214 = vmatpush1.msra.mxu0 %v2277
    %3215 = vmatprep.subr.mxu0 %v2280
    %3216 = vmatpush1.msra.mxu0 %v2279
    %3217 = vmatprep.subr.mxu0 %v2282
    %3218 = vmatpush1.msra.mxu0 %v2281
    %3219 = vmatprep.subr.mxu0 %v2284
    %3220 = vmatpush1.msra.mxu0 %v2283
    %3221 = vmatprep.subr.mxu0 %v2286
    %3222 = vmatpush1.msra.mxu0 %v2285
    %3223 = vmatprep.subr.mxu0 %v2288
    %3224 = vmatpush1.msra.mxu0 %v2287
    %3225 = vmatprep.subr.mxu0 %v2290
    %3226 = vmatpush1.msra.mxu0 %v2289
    %3227 = vmatprep.subr.mxu0 0.0
    %3228 = vmatpush1.msra.mxu0 0.0
    %3229 = vmatprep.subr.mxu0 0.0
    %3230 = vmatpush1.msra.mxu0 0.0
    %3231 = vmatprep.subr.mxu0 0.0
    %3232 = vmatpush1.msra.mxu0 0.0
    %3233 = vmatprep.subr.mxu0 0.0
    %3234 = vmatpush1.msra.mxu0 0.0
    %3235 = vmatprep.subr.mxu0 0.0
    %3236 = vmatpush1.msra.mxu0 0.0
    %3237 = vmatprep.subr.mxu0 0.0
    %3238 = vmatpush1.msra.mxu0 0.0
    %3239 = vmatprep.subr.mxu0 0.0
    %3240 = vmatpush1.msra.mxu0 0.0
    %3241 = vmatprep.subr.mxu0 0.0
    %3242 = vmatpush1.msra.mxu0 0.0
    %3243 = vmatprep.subr.mxu0 0.0
    %3244 = vmatpush1.msra.mxu0 0.0
    %3245 = vmatprep.subr.mxu0 0.0
    %3246 = vmatpush1.msra.mxu0 0.0
    %3247 = vmatprep.subr.mxu0 0.0
    %3248 = vmatpush1.msra.mxu0 0.0
    %3249 = vmatprep.subr.mxu0 0.0
    %3250 = vmatpush1.msra.mxu0 0.0
    %3251 = vmatprep.subr.mxu0 0.0
    %3252 = vmatpush1.msra.mxu0 0.0
    %3253 = vmatprep.subr.mxu0 0.0
    %3254 = vmatpush1.msra.mxu0 0.0
    %3255 = vmatprep.subr.mxu0 0.0
    %3256 = vmatpush1.msra.mxu0 0.0
    %3257 = vmatprep.subr.mxu0 0.0
    %3258 = vmatpush1.msra.mxu0 0.0
    %3259 = vmatprep.subr.mxu0 0.0
    %3260 = vmatpush1.msra.mxu0 0.0
    %3261 = vmatprep.subr.mxu0 0.0
    %3262 = vmatpush1.msra.mxu0 0.0
    %3263 = vmatprep.subr.mxu0 0.0
    %3264 = vmatpush1.msra.mxu0 0.0
    %3265 = vmatprep.subr.mxu0 0.0
    %3266 = vmatpush1.msra.mxu0 0.0
    %3267 = vmatprep.subr.mxu0 0.0
    %3268 = vmatpush1.msra.mxu0 0.0
    %3269 = vmatprep.subr.mxu0 0.0
    %3270 = vmatpush1.msra.mxu0 0.0
    %3271 = vmatprep.subr.mxu0 0.0
    %3272 = vmatpush1.msra.mxu0 0.0
    %3273 = vmatprep.subr.mxu0 0.0
    %3274 = vmatpush1.msra.mxu0 0.0
    %3275 = vmatprep.mubr.f32.mxu0 0.0
    %3276 = vmatmul.mubr.f32.gmra.mrb[0].mxu0 %v3209
    %v3277 = vpop.f32.mrb[0].mxu0
    %v3278 = vadd.f32 0.0, %v3277
    %v3279 = vpop.f32.mrb[0].mxu0
    %v3280 = vadd.f32 0.0, %v3279
    %3281 = vdwg.mxu0
    %v3284 = vrot.slane %v3278, 2
    %v3285 = vrot.slane %v3280, 2
    %v3288 = vadd.f32 %v2414, %v3284
    %v3289 = vadd.f32 %v2415, %v3285
    %v3290 = vxor.u32 %v3288, 2147483648
    %v3291 = vxor.u32 %v3289, 2147483648
    %v3292 = vmul.f32 %v3290, 1.442695
    %v3293 = vpow.pop %v3292
    %v3294 = vmul.f32 %v3291, 1.442695
    %v3295 = vpow.pop %v3294
    %v3296 = vadd.f32 %v3293, 1.0
    %v3297 = vadd.f32 %v3295, 1.0
    %v3298 = vrcp.pop %v3296
    %v3299 = vmul.f32 1.0, %v3298
    %v3300 = vrcp.pop %v3297
    %v3301 = vmul.f32 1.0, %v3300
    %v3302 = vtanh.pop %v3289
    %v3304 = vrot.slane %v3200, 6
    %v3306 = vmul.f32 %v3299, %v3304
    %3308 = vrot.lane.b32.xlu0 %v3302, 64
    %v3309 = vpop.permute.xlu0 %3308
    %v3311 = vmul.f32 %v3299, %v3309
    %3313 = vrot.lane.b32.xlu0 %v3311, 64
    %v3314 = vpop.permute.xlu0 %3313
    %v3316 = vadd.f32 %v3306, %v3314
    %v3317 = vtanh.pop %v3316
    %3319 = vrot.lane.b32.xlu0 %v3317, 64
    %v3320 = vpop.permute.xlu0 %3319
    %v3322 = vmul.f32 %v3301, %v3320
    %v3323 = vrot.slane %v2518, 2
    %v3325 = vsel %vm58, %v3322, %v3323
    %v3326 = vld [vmem:[#allocation4 + $0x60] sm:$0xff]
    %v3327 = vld [vmem:[#allocation4 + $0xc8] sm:$0xff]
    %v3328 = vld [vmem:[#allocation4 + $0x130] sm:$0xff]
    %v3329 = vld [vmem:[#allocation4 + $0x198] sm:$0xff]
    %v3330 = vld [vmem:[#allocation4 + $0x200] sm:$0xff]
    %v3331 = vld [vmem:[#allocation4 + $0x268] sm:$0xff]
    %v3332 = vld [vmem:[#allocation4 + $0x2d0] sm:$0xff]
    %v3333 = vld [vmem:[#allocation4 + $0x338] sm:$0xff]
    %v3334 = vld [vmem:[%s2 + $0x6] sm:$0x1]
    %v3336 = vlaneseq
    %v3337 = vshrl.u32 %v3336, 7
    %v3338 = vsub.s32 0, %v3337
    %v3339 = vrot.slane %v3334, %v3338
    %v3342 = vrot.slane %v3325, 6
    %v3343 = vsel %vm105, %v3342, 0
    %3345 = vmatprep.subr.mxu0 0.0
    %3346 = vmatpush1.msra.mxu0 %v3326
    %3347 = vmatprep.subr.mxu0 0.0
    %3348 = vmatpush1.msra.mxu0 %v3327
    %3349 = vmatprep.subr.mxu0 0.0
    %3350 = vmatpush1.msra.mxu0 %v3328
    %3351 = vmatprep.subr.mxu0 0.0
    %3352 = vmatpush1.msra.mxu0 %v3329
    %3353 = vmatprep.subr.mxu0 0.0
    %3354 = vmatpush1.msra.mxu0 %v3330
    %3355 = vmatprep.subr.mxu0 0.0
    %3356 = vmatpush1.msra.mxu0 %v3331
    %3357 = vmatprep.subr.mxu0 0.0
    %3358 = vmatpush1.msra.mxu0 %v3332
    %3359 = vmatprep.subr.mxu0 0.0
    %3360 = vmatpush1.msra.mxu0 %v3333
    %3361 = vmatprep.subr.mxu0 0.0
    %3362 = vmatpush1.msra.mxu0 0.0
    %3363 = vmatprep.subr.mxu0 0.0
    %3364 = vmatpush1.msra.mxu0 0.0
    %3365 = vmatprep.subr.mxu0 0.0
    %3366 = vmatpush1.msra.mxu0 0.0
    %3367 = vmatprep.subr.mxu0 0.0
    %3368 = vmatpush1.msra.mxu0 0.0
    %3369 = vmatprep.subr.mxu0 0.0
    %3370 = vmatpush1.msra.mxu0 0.0
    %3371 = vmatprep.subr.mxu0 0.0
    %3372 = vmatpush1.msra.mxu0 0.0
    %3373 = vmatprep.subr.mxu0 0.0
    %3374 = vmatpush1.msra.mxu0 0.0
    %3375 = vmatprep.subr.mxu0 0.0
    %3376 = vmatpush1.msra.mxu0 0.0
    %3377 = vmatprep.subr.mxu0 0.0
    %3378 = vmatpush1.msra.mxu0 0.0
    %3379 = vmatprep.subr.mxu0 0.0
    %3380 = vmatpush1.msra.mxu0 0.0
    %3381 = vmatprep.subr.mxu0 0.0
    %3382 = vmatpush1.msra.mxu0 0.0
    %3383 = vmatprep.subr.mxu0 0.0
    %3384 = vmatpush1.msra.mxu0 0.0
    %3385 = vmatprep.subr.mxu0 0.0
    %3386 = vmatpush1.msra.mxu0 0.0
    %3387 = vmatprep.subr.mxu0 0.0
    %3388 = vmatpush1.msra.mxu0 0.0
    %3389 = vmatprep.subr.mxu0 0.0
    %3390 = vmatpush1.msra.mxu0 0.0
    %3391 = vmatprep.subr.mxu0 0.0
    %3392 = vmatpush1.msra.mxu0 0.0
    %3393 = vmatprep.subr.mxu0 0.0
    %3394 = vmatpush1.msra.mxu0 0.0
    %3395 = vmatprep.subr.mxu0 0.0
    %3396 = vmatpush1.msra.mxu0 0.0
    %3397 = vmatprep.subr.mxu0 0.0
    %3398 = vmatpush1.msra.mxu0 0.0
    %3399 = vmatprep.subr.mxu0 0.0
    %3400 = vmatpush1.msra.mxu0 0.0
    %3401 = vmatprep.subr.mxu0 0.0
    %3402 = vmatpush1.msra.mxu0 0.0
    %3403 = vmatprep.subr.mxu0 0.0
    %3404 = vmatpush1.msra.mxu0 0.0
    %3405 = vmatprep.subr.mxu0 0.0
    %3406 = vmatpush1.msra.mxu0 0.0
    %3407 = vmatprep.subr.mxu0 0.0
    %3408 = vmatpush1.msra.mxu0 0.0
    %3409 = vmatprep.mubr.f32.mxu0 0.0
    %3410 = vmatmul.mubr.f32.gmra.mrb[0].mxu0 %v3343
    %v3411 = vpop.f32.mrb[0].mxu0
    %v3412 = vadd.f32 %v3339, %v3411
    %v3413 = vpop.f32.mrb[0].mxu0
    %3414 = vdwg.mxu0
    %3415 = vst [vmem:[#allocation7] sm:$0x3] %v3412
    // Predicated region
    $region18: #{bilstm_forward.1} parent=1 // pred_check
      _
    $region19: #{bilstm_forward.1} parent=1 // pred_check_branch
      %3417 = sbr.rel (0) target = $region21
    $region20: #{bilstm_forward.1} parent=1 // pred_region
      %s3419 = ssub.s32 32, 32
      %3420 = vsyncadd [#allocation6], %s3419
      %s3422 = sshll.u32 [#allocation7], 4
      %s3423 = int_to_ptr.vmem [resolvable:$true] %s3422
      %3425 = dma.vmem_to_hbm [thread:$0]  %s3423, 32, %s3, [#allocation6]
    $region21: #{bilstm_forward.1} parent=1 // pred_fallthru
      _
    // Predicated region
    $region22: #{bilstm_forward.1} parent=1 // pred_check
      _
    $region23: #{bilstm_forward.1} parent=1 // pred_check_branch
      %3427 = sbr.rel (0) target = $region25
    $region24: #{bilstm_forward.1} parent=1 // pred_region
      %3428 = dma.done [#allocation6], 32
    $region25: #{bilstm_forward.1} parent=1 // pred_fallthru
      _
    %3429 = vsyncpa [#allocation5], 1
    %3430 = vsyncpa [#allocation6], 1

</llo_original>
